<compile_context>
chip_gen: v7x
topology: tpu7x:2x2x1
jax: 0.10.0
libtpu: 0.0.40
codegen_flags: <defaults>
</compile_context>

<pallas_src>
import functools

import jax
import jax.numpy as jnp
from jax.experimental import pallas as pl
from jax.experimental.pallas import tpu as pltpu

_VMEM_LIMIT_BYTES = 64 * 1024 * 1024  # explicit scoped-VMEM cap (<= physical on v5e/v6e/v7x)


# -----------------------------------------------------------------------------
# Tile pickers.  They only ever return divisors of the axis (or the full extent),
# so no activation is ever padded/copied; row tiles prefer >= 2 blocks so the
# "parallel" axis can shard across v7x's two TensorCores.
# -----------------------------------------------------------------------------
def _pick_row_tile(n, cap, mult):
    limit = min(cap, n // 2 if n >= 2 * mult else n)
    limit -= limit % mult
    for cand in range(limit, mult - 1, -mult):
        if n % cand == 0:
            return cand
    return n  # single full-extent block


def _pick_vocab_tile(v, cap):
    limit = min(cap, v)
    limit -= limit % 128
    for cand in range(limit, 127, -128):
        if v % cand == 0:
            return cand
    return v  # single full-extent block


def _pick_time_tile(t, cap, mult):
    limit = min(cap, t)
    limit -= limit % mult
    for cand in range(limit, mult - 1, -mult):
        if t % cand == 0:
            return cand
    return t  # single full-extent chunk


def _pad_gate_cols(w_t, h, hp):
    """(K, 4h) -> (K, 4hp): zero-pad each of the 4 LSTM gate blocks to hp lanes."""
    if hp == h:
        return w_t
    k = w_t.shape[0]
    return jnp.pad(w_t.reshape(k, 4, h),
                   ((0, 0), (0, 0), (0, hp - h))).reshape(k, 4 * hp)


# -----------------------------------------------------------------------------
# Kernel B: time-tiled LSTM recurrence with the input projection fused in.
# PyTorch gate order i, f, g, o.
# -----------------------------------------------------------------------------
def _lstm_chunk_kernel(x_ref, wih_ref, whh_ref, b_ref, o_ref,
                       gx_scr, ho_scr, h_scr, c_scr, *, hidden_pad, time_tile, unroll):
    hp = hidden_pad
    bt = h_scr.shape[0]
    e = x_ref.shape[-1]

    @pl.when(pl.program_id(1) == 0)
    def _():  # new batch chunk -> reset the carried LSTM state
        h_scr[...] = jnp.zeros_like(h_scr)
        c_scr[...] = jnp.zeros_like(c_scr)

    # Fused input projection for the whole time chunk: one (Bt*Tt, E) @ (E, 4Hp)
    # MXU matmul (good M dimension), bias folded in.  gx never leaves VMEM.
    x2 = x_ref[...].reshape(bt * time_tile, e).astype(wih_ref.dtype)
    gx2 = jnp.dot(x2, wih_ref[...], preferred_element_type=jnp.float32) + b_ref[...]
    gx_scr[...] = gx2.reshape(bt, time_tile, 4 * hp)

    w_hh = whh_ref[...]  # loop-invariant recurrent weight (f32), loaded once

    def step(t, carry):
        g_x = gx_scr[:, pl.ds(t, 1), :].reshape(bt, 4 * hp)
        gates = g_x + jnp.dot(h_scr[...], w_hh, preferred_element_type=jnp.float32)
        # Hp is a multiple of 128, so every gate slice is a lane-aligned vreg slice.
        i_g = jax.nn.sigmoid(gates[:, 0 * hp:1 * hp])
        f_g = jax.nn.sigmoid(gates[:, 1 * hp:2 * hp])
        g_g = jnp.tanh(gates[:, 2 * hp:3 * hp])
        o_g = jax.nn.sigmoid(gates[:, 3 * hp:4 * hp])
        c_new = f_g * c_scr[...] + i_g * g_g
        h_new = o_g * jnp.tanh(c_new)
        c_scr[...] = c_new
        h_scr[...] = h_new
        ho_scr[:, pl.ds(t, 1), :] = h_new[:, None, :]
        return carry

    # Fixed partial unroll so the LLO scheduler can overlap EUP/VPU gate math of
    # step t with the MXU work and gx reads of adjacent steps.
    jax.lax.fori_loop(0, time_tile, step, 0, unroll=unroll)

    # One bulk (possibly bf16) store of the chunk's hidden states (lane-dense).
    o_ref[...] = ho_scr[...].astype(o_ref.dtype)


def lstm_recurrence(x, wih_t, whh_t, b_gates, *, hidden_pad, time_tile,
                    batch_chunks=1, out_dtype=jnp.float32):
    """x: (B, T, E). wih_t: (E, 4Hp). whh_t: (Hp, 4Hp) f32. b_gates: (1, 4Hp) f32.
    Returns hidden states (B, T, Hp) in out_dtype (batch-major)."""
    b, t, e = x.shape
    hp = hidden_pad
    if b % batch_chunks:
        batch_chunks = 1
    bt = b // batch_chunks

    kernel = functools.partial(
        _lstm_chunk_kernel, hidden_pad=hp, time_tile=time_tile,
        unroll=min(time_tile, 8))

    return pl.pallas_call(
        kernel,
        out_shape=jax.ShapeDtypeStruct((b, t, hp), out_dtype),
        grid=(batch_chunks, t // time_tile),
        in_specs=[
            pl.BlockSpec((bt, time_tile, e), lambda bi, ti: (bi, ti, 0)),
            # Loop-invariant weights / bias (constant index_map -> DMA'd once).
            # (pipeline_mode=pl.Buffered(1) could halve their VMEM footprint; left
            #  at the default since they are small relative to the activation blocks.)
            pl.BlockSpec((e, 4 * hp), lambda bi, ti: (0, 0)),
            pl.BlockSpec((hp, 4 * hp), lambda bi, ti: (0, 0)),
            pl.BlockSpec((1, 4 * hp), lambda bi, ti: (0, 0)),
        ],
        out_specs=pl.BlockSpec((bt, time_tile, hp), lambda bi, ti: (bi, ti, 0)),
        scratch_shapes=[
            pltpu.VMEM((bt, time_tile, 4 * hp), jnp.float32),  # gx for the chunk
            pltpu.VMEM((bt, time_tile, hp), jnp.float32),      # chunk hidden states
            pltpu.VMEM((bt, hp), jnp.float32),                 # h carry
            pltpu.VMEM((bt, hp), jnp.float32),                 # c carry
        ],
        compiler_params=pltpu.CompilerParams(
            dimension_semantics=("parallel", "arbitrary"),
            vmem_limit_bytes=_VMEM_LIMIT_BYTES,
        ),
    )(x, wih_t, whh_t, b_gates)


# -----------------------------------------------------------------------------
# Kernel C: vocab-tiled Linear + LogSoftmax (two-pass online logsumexp).
# -----------------------------------------------------------------------------
def _vocab_logsoftmax_kernel(x_ref, w_ref, b_ref, o_ref, m_scr, l_scr):
    p = pl.program_id(1)  # 0: accumulate logsumexp stats, 1: write normalized output
    v = pl.program_id(2)

    @pl.when(jnp.logical_and(p == 0, v == 0))
    def _():  # new row block
        m_scr[...] = jnp.full(m_scr.shape, -jnp.inf, m_scr.dtype)
        l_scr[...] = jnp.zeros(l_scr.shape, l_scr.dtype)

    logits = jnp.dot(x_ref[...].astype(w_ref.dtype), w_ref[...],
                     preferred_element_type=jnp.float32) + b_ref[...]

    @pl.when(p == 0)
    def _():
        m_prev = m_scr[...]
        m_new = jnp.maximum(m_prev, jnp.max(logits, axis=-1, keepdims=True))
        l_scr[...] = l_scr[...] * jnp.exp(m_prev - m_new) + jnp.sum(
            jnp.exp(logits - m_new), axis=-1, keepdims=True)
        m_scr[...] = m_new
        o_ref[...] = logits.astype(o_ref.dtype)  # placeholder; overwritten in pass 1

    @pl.when(p == 1)
    def _():
        lse = m_scr[...] + jnp.log(l_scr[...])
        o_ref[...] = (logits - lse).astype(o_ref.dtype)


def vocab_logsoftmax(x_rows, w_t, bias, *, row_block=512, vocab_block=1024):
    """x_rows: (N, K). w_t: (K, V). bias: (V,). Returns log_softmax(x @ w + b): (N, V) f32."""
    n, k = x_rows.shape
    kw, v = w_t.shape
    assert k == kw
    mult = 8 * (4 // jnp.dtype(x_rows.dtype).itemsize)
    tm = _pick_row_tile(n, row_block, mult)
    tv = _pick_vocab_tile(v, vocab_block)
    bias2 = bias.reshape(1, v).astype(jnp.float32)

    return pl.pallas_call(
        _vocab_logsoftmax_kernel,
        out_shape=jax.ShapeDtypeStruct((n, v), jnp.float32),
        grid=(n // tm, 2, v // tv),
        in_specs=[
            pl.BlockSpec((tm, k), lambda i, p, vi: (i, 0)),
            pl.BlockSpec((k, tv), lambda i, p, vi: (0, vi)),
            pl.BlockSpec((1, tv), lambda i, p, vi: (0, vi)),
        ],
        out_specs=pl.BlockSpec((tm, tv), lambda i, p, vi: (i, vi)),
        scratch_shapes=[
            pltpu.VMEM((tm, 1), jnp.float32),  # running max
            pltpu.VMEM((tm, 1), jnp.float32),  # running sum
        ],
        compiler_params=pltpu.CompilerParams(
            dimension_semantics=("parallel", "arbitrary", "arbitrary"),
            vmem_limit_bytes=_VMEM_LIMIT_BYTES,
        ),
    )(x_rows, w_t, bias2)


# -----------------------------------------------------------------------------
# DecoderRNN forward (Pallas-backed)
# -----------------------------------------------------------------------------
def decoder_rnn_forward(params, features, captions, *, weight_dtype=jnp.float32,
                        time_block=8, batch_chunks=1, row_block=512,
                        vocab_block=1024):
    """features: (B, 1, E) f32; captions: (B, Tc) int32.
    Returns (B, Tc, V) f32 log-probabilities (the LSTM sees 1 + (Tc-1) = Tc steps).
    Set batch_chunks=2 on v7x to shard the recurrence across both TensorCores."""
    captions = captions[:, :-1]
    embeds = jnp.take(params["embed"], captions, axis=0)      # (B, Tc-1, E)
    inputs = jnp.concatenate([features, embeds], axis=1)      # (B, T, E), batch-major
    b, t, e = inputs.shape
    h = params["w_hh"].shape[1]
    v = params["w_lin"].shape[0]
    hp = -(-h // 128) * 128  # lane-align every LSTM gate slice

    # One-time weight prep: transpose to activation@weight layout, zero-pad each
    # gate block H->Hp (padded lanes provably stay zero through the recurrence),
    # cast the streaming weights (W_ih, W_lin) to weight_dtype.  W_hh and the
    # carried h/c state stay f32 so bf16 rounding does not compound over time.
    wih_t = _pad_gate_cols(params["w_ih"].T, h, hp).astype(weight_dtype)      # (E, 4Hp)
    whh_t = jnp.pad(_pad_gate_cols(params["w_hh"].T, h, hp),
                    ((0, hp - h), (0, 0))).astype(jnp.float32)                # (Hp, 4Hp)
    b_g = (params["b_ih"] + params["b_hh"]).astype(jnp.float32).reshape(4, h)
    b_g = jnp.pad(b_g, ((0, 0), (0, hp - h))).reshape(1, 4 * hp)
    wlin_t = jnp.pad(params["w_lin"].T, ((0, hp - h), (0, 0))).astype(weight_dtype)

    itemsize = jnp.dtype(weight_dtype).itemsize
    io_mult = 8 * (4 // itemsize)                      # sublane multiple for tiled blocks
    inter_dtype = jnp.float32 if itemsize == 4 else weight_dtype  # hidden-slab dtype
    tt = _pick_time_tile(t, max(time_block, io_mult), io_mult)

    # Kernel B: fused input projection + time-tiled recurrence, batch-major in/out.
    hs = lstm_recurrence(inputs.astype(weight_dtype), wih_t, whh_t, b_g,
                         hidden_pad=hp, time_tile=tt, batch_chunks=batch_chunks,
                         out_dtype=inter_dtype)                  # (B, T, Hp)

    # Kernel C: vocab-tiled Linear + LogSoftmax (reshape below is a free
    # leading-dim merge; the zero-padded rows of wlin_t make the Hp padding exact).
    logp = vocab_logsoftmax(hs.reshape(b * t, hp), wlin_t, params["b_lin"],
                            row_block=row_block, vocab_block=vocab_block)
    return logp.reshape(b, t, v)


# -----------------------------------------------------------------------------
# Pure-JAX reference (for correctness check)
# -----------------------------------------------------------------------------
def decoder_rnn_reference(params, features, captions):
    captions = captions[:, :-1]
    embeds = jnp.take(params["embed"], captions, axis=0)
    inputs = jnp.concatenate([features, embeds], axis=1)  # (B, T, E)
    B, T, E = inputs.shape
    H = params["w_hh"].shape[1]

    def step(carry, x_t):
        h, c = carry
        gates = (x_t @ params["w_ih"].T + h @ params["w_hh"].T
                 + params["b_ih"] + params["b_hh"])
        i_g = jax.nn.sigmoid(gates[:, 0 * H:1 * H])
        f_g = jax.nn.sigmoid(gates[:, 1 * H:2 * H])
        g_g = jnp.tanh(gates[:, 2 * H:3 * H])
        o_g = jax.nn.sigmoid(gates[:, 3 * H:4 * H])
        c = f_g * c + i_g * g_g
        h = o_g * jnp.tanh(c)
        return (h, c), h

    h0 = jnp.zeros((B, H), jnp.float32)
    c0 = jnp.zeros((B, H), jnp.float32)
    _, hs = jax.lax.scan(step, (h0, c0), jnp.transpose(inputs, (1, 0, 2)))
    hs = jnp.transpose(hs, (1, 0, 2))  # (B, T, H)
    logits = hs @ params["w_lin"].T + params["b_lin"]
    return jax.nn.log_softmax(logits, axis=-1)


# -----------------------------------------------------------------------------
# Deterministic parameter init (mirrors PyTorch module shapes)
# -----------------------------------------------------------------------------
def init_params(key, embed_size, hidden_size, vocab_size):
    k = jax.random.split(key, 7)
    s = 1.0 / jnp.sqrt(hidden_size)
    return {
        "embed": jax.random.normal(k[0], (vocab_size, embed_size), jnp.float32),
        "w_ih": jax.random.uniform(k[1], (4 * hidden_size, embed_size),
                                   jnp.float32, -s, s),
        "w_hh": jax.random.uniform(k[2], (4 * hidden_size, hidden_size),
                                   jnp.float32, -s, s),
        "b_ih": jax.random.uniform(k[3], (4 * hidden_size,), jnp.float32, -s, s),
        "b_hh": jax.random.uniform(k[4], (4 * hidden_size,), jnp.float32, -s, s),
        "w_lin": jax.random.uniform(k[5], (vocab_size, hidden_size),
                                    jnp.float32, -s, s),
        "b_lin": jax.random.uniform(k[6], (vocab_size,), jnp.float32, -s, s),
    }


if __name__ == "__main__":
    embed_size, hidden_size, vocab_size = 32, 32, 2048
    batch, caption_len = 2, 16  # LSTM sees 16 steps -> 2 time chunks; 2 vocab tiles

    key = jax.random.PRNGKey(0)
    kp, kf, kc = jax.random.split(key, 3)
    params = init_params(kp, embed_size, hidden_size, vocab_size)

    features = jax.random.normal(kf, (batch, 1, embed_size), jnp.float32)
    captions = jax.random.randint(kc, (batch, caption_len), 0, vocab_size,
                                  dtype=jnp.int32)

    ref = decoder_rnn_reference(params, features, captions)

    # f32 weights: strict numerical parity with the pure-JAX reference.
    out_f32 = jax.block_until_ready(
        decoder_rnn_forward(params, features, captions, weight_dtype=jnp.float32))
    assert out_f32.shape == (batch, caption_len, vocab_size)
    assert jnp.allclose(out_f32, ref, atol=1e-4, rtol=1e-4), "f32 mismatch vs reference"

    # bf16 streaming weights (f32 accumulation, f32 W_hh / h / c): looser tolerance.
    out_bf16 = jax.block_until_ready(
        decoder_rnn_forward(params, features, captions, weight_dtype=jnp.bfloat16))
    assert out_bf16.shape == (batch, caption_len, vocab_size)
    assert jnp.allclose(out_bf16, ref, atol=1e-1, rtol=1e-1), "bf16 mismatch vs reference"

    print("KERNEL_OK")
</pallas_src>

<mosaic_0001>
module attributes {stable_mosaic.version = 11 : i64} {
  func.func @_lstm_chunk_kernel(%arg0: i32, %arg1: i32, %arg2: memref<2x8x32xf32, #tpu.memory_space<vmem>>, %arg3: memref<32x512xf32, #tpu.memory_space<vmem>>, %arg4: memref<128x512xf32, #tpu.memory_space<vmem>>, %arg5: memref<1x512xf32, #tpu.memory_space<vmem>>, %arg6: memref<2x8x128xf32, #tpu.memory_space<vmem>>, %arg7: memref<2x8x512xf32, #tpu.memory_space<vmem>>, %arg8: memref<2x8x128xf32, #tpu.memory_space<vmem>>, %arg9: memref<2x128xf32, #tpu.memory_space<vmem>>, %arg10: memref<2x128xf32, #tpu.memory_space<vmem>>) attributes {dimension_semantics = [#tpu.dimension_semantics<parallel>, #tpu.dimension_semantics<arbitrary>], iteration_bounds = array<i64: 1, 2>, scalar_prefetch = 0 : i64, scratch_operands = 4 : i64, tpu.core_type = #tpu.core_type<tc>, window_params = [{transform_indices = @transform_0, window_bounds = array<i64: 2, 8, 32>}, {pipeline_mode = #tpu.pipeline_mode<synchronous>, transform_indices = @transform_1, window_bounds = array<i64: 32, 512>}, {pipeline_mode = #tpu.pipeline_mode<synchronous>, transform_indices = @transform_2, window_bounds = array<i64: 128, 512>}, {pipeline_mode = #tpu.pipeline_mode<synchronous>, transform_indices = @transform_3, window_bounds = array<i64: 1, 512>}, {transform_indices = @transform_4, window_bounds = array<i64: 2, 8, 128>}]} {
    %c0_i32 = arith.constant 0 : i32
    %0 = arith.cmpi eq, %arg1, %c0_i32 : i32
    %1 = arith.extui %0 : i1 to i32
    %c0_i32_0 = arith.constant 0 : i32
    %2 = arith.cmpi ne, %1, %c0_i32_0 : i32
    scf.if %2 {
      %cst_147 = arith.constant 0.000000e+00 : f32
      %311 = vector.broadcast %cst_147 : f32 to vector<2x128xf32>
      %c0_148 = arith.constant 0 : index
      %c0_149 = arith.constant 0 : index
      %312 = vector.load %arg9[%c0_148, %c0_149] : memref<2x128xf32, #tpu.memory_space<vmem>>, vector<2x128xf32>
      tpu.vector_store %arg9[%c0_148, %c0_149], %311 {strides = array<i32>} : memref<2x128xf32, #tpu.memory_space<vmem>>, vector<2x128xf32>,
      %cst_150 = arith.constant 0.000000e+00 : f32
      %313 = vector.broadcast %cst_150 : f32 to vector<2x128xf32>
      %c0_151 = arith.constant 0 : index
      %c0_152 = arith.constant 0 : index
      %314 = vector.load %arg10[%c0_151, %c0_152] : memref<2x128xf32, #tpu.memory_space<vmem>>, vector<2x128xf32>
      tpu.vector_store %arg10[%c0_151, %c0_152], %313 {strides = array<i32>} : memref<2x128xf32, #tpu.memory_space<vmem>>, vector<2x128xf32>,
    } else {
    }
    %c0 = arith.constant 0 : index
    %c0_1 = arith.constant 0 : index
    %c0_2 = arith.constant 0 : index
    %3 = vector.load %arg2[%c0, %c0_1, %c0_2] : memref<2x8x32xf32, #tpu.memory_space<vmem>>, vector<2x8x32xf32>
    %4 = vector.shape_cast %3 : vector<2x8x32xf32> to vector<16x32xf32>
    %c0_3 = arith.constant 0 : index
    %c0_4 = arith.constant 0 : index
    %5 = vector.load %arg3[%c0_3, %c0_4] : memref<32x512xf32, #tpu.memory_space<vmem>>, vector<32x512xf32>
    %cst = arith.constant dense<0.000000e+00> : vector<16x512xf32>
    %6 = tpu.matmul %4, %5, %cst {dimension_numbers = #tpu.dot_dimension_numbers<[1], [0], [0], [1], [0, 0, 1, 1], [], []>} : vector<16x32xf32>, vector<32x512xf32>, vector<16x512xf32> -> vector<16x512xf32>
    %c0_5 = arith.constant 0 : index
    %c0_6 = arith.constant 0 : index
    %7 = vector.load %arg5[%c0_5, %c0_6] : memref<1x512xf32, #tpu.memory_space<vmem>>, vector<1x512xf32>
    %8 = vector.broadcast %7 : vector<1x512xf32> to vector<16x512xf32>
    %9 = arith.addf %6, %8 : vector<16x512xf32>
    %10 = vector.shape_cast %9 : vector<16x512xf32> to vector<2x8x512xf32>
    %c0_7 = arith.constant 0 : index
    %c0_8 = arith.constant 0 : index
    %c0_9 = arith.constant 0 : index
    %11 = vector.load %arg7[%c0_7, %c0_8, %c0_9] : memref<2x8x512xf32, #tpu.memory_space<vmem>>, vector<2x8x512xf32>
    tpu.vector_store %arg7[%c0_7, %c0_8, %c0_9], %10 {strides = array<i32>} : memref<2x8x512xf32, #tpu.memory_space<vmem>>, vector<2x8x512xf32>,
    %c0_10 = arith.constant 0 : index
    %c0_11 = arith.constant 0 : index
    %12 = vector.load %arg4[%c0_10, %c0_11] : memref<128x512xf32, #tpu.memory_space<vmem>>, vector<128x512xf32>
    %c0_i32_12 = arith.constant 0 : i32
    %c0_13 = arith.constant 0 : index
    %13 = arith.index_cast %c0_i32_12 : i32 to index
    %c0_14 = arith.constant 0 : index
    %14 = vector.load %arg7[%c0_13, %13, %c0_14] : memref<2x8x512xf32, #tpu.memory_space<vmem>>, vector<2x1x512xf32>
    %15 = vector.shape_cast %14 : vector<2x1x512xf32> to vector<2x512xf32>
    %c0_15 = arith.constant 0 : index
    %c0_16 = arith.constant 0 : index
    %16 = vector.load %arg9[%c0_15, %c0_16] : memref<2x128xf32, #tpu.memory_space<vmem>>, vector<2x128xf32>
    %cst_17 = arith.constant dense<0.000000e+00> : vector<2x512xf32>
    %17 = tpu.matmul %16, %12, %cst_17 {dimension_numbers = #tpu.dot_dimension_numbers<[1], [0], [0], [1], [0, 0, 1, 1], [], []>} : vector<2x128xf32>, vector<128x512xf32>, vector<2x512xf32> -> vector<2x512xf32>
    %18 = arith.addf %15, %17 : vector<2x512xf32>
    %19 = vector.extract_strided_slice %18 {offsets = [0, 0], sizes = [2, 128], strides = [1, 1]} : vector<2x512xf32> to vector<2x128xf32>
    %20 = arith.negf %19 : vector<2x128xf32>
    %21 = math.exp %20 : vector<2x128xf32>
    %cst_18 = arith.constant 1.000000e+00 : f32
    %22 = vector.broadcast %cst_18 : f32 to vector<2x128xf32>
    %23 = arith.addf %22, %21 : vector<2x128xf32>
    %24 = arith.divf %22, %23 : vector<2x128xf32>
    %25 = vector.extract_strided_slice %18 {offsets = [0, 128], sizes = [2, 128], strides = [1, 1]} : vector<2x512xf32> to vector<2x128xf32>
    %26 = arith.negf %25 : vector<2x128xf32>
    %27 = math.exp %26 : vector<2x128xf32>
    %cst_19 = arith.constant 1.000000e+00 : f32
    %28 = vector.broadcast %cst_19 : f32 to vector<2x128xf32>
    %29 = arith.addf %28, %27 : vector<2x128xf32>
    %30 = arith.divf %28, %29 : vector<2x128xf32>
    %31 = vector.extract_strided_slice %18 {offsets = [0, 256], sizes = [2, 128], strides = [1, 1]} : vector<2x512xf32> to vector<2x128xf32>
    %32 = math.tanh %31 : vector<2x128xf32>
    %33 = vector.extract_strided_slice %18 {offsets = [0, 384], sizes = [2, 128], strides = [1, 1]} : vector<2x512xf32> to vector<2x128xf32>
    %34 = arith.negf %33 : vector<2x128xf32>
    %35 = math.exp %34 : vector<2x128xf32>
    %cst_20 = arith.constant 1.000000e+00 : f32
    %36 = vector.broadcast %cst_20 : f32 to vector<2x128xf32>
    %37 = arith.addf %36, %35 : vector<2x128xf32>
    %38 = arith.divf %36, %37 : vector<2x128xf32>
    %c0_21 = arith.constant 0 : index
    %c0_22 = arith.constant 0 : index
    %39 = vector.load %arg10[%c0_21, %c0_22] : memref<2x128xf32, #tpu.memory_space<vmem>>, vector<2x128xf32>
    %40 = arith.mulf %30, %39 : vector<2x128xf32>
    %41 = arith.mulf %24, %32 : vector<2x128xf32>
    %42 = arith.addf %40, %41 : vector<2x128xf32>
    %43 = math.tanh %42 : vector<2x128xf32>
    %44 = arith.mulf %38, %43 : vector<2x128xf32>
    %c0_23 = arith.constant 0 : index
    %c0_24 = arith.constant 0 : index
    %45 = vector.load %arg10[%c0_23, %c0_24] : memref<2x128xf32, #tpu.memory_space<vmem>>, vector<2x128xf32>
    tpu.vector_store %arg10[%c0_23, %c0_24], %42 {strides = array<i32>} : memref<2x128xf32, #tpu.memory_space<vmem>>, vector<2x128xf32>,
    %c0_25 = arith.constant 0 : index
    %c0_26 = arith.constant 0 : index
    %46 = vector.load %arg9[%c0_25, %c0_26] : memref<2x128xf32, #tpu.memory_space<vmem>>, vector<2x128xf32>
    tpu.vector_store %arg9[%c0_25, %c0_26], %44 {strides = array<i32>} : memref<2x128xf32, #tpu.memory_space<vmem>>, vector<2x128xf32>,
    %47 = vector.shape_cast %44 : vector<2x128xf32> to vector<2x1x128xf32>
    %c0_27 = arith.constant 0 : index
    %48 = arith.index_cast %c0_i32_12 : i32 to index
    %c0_28 = arith.constant 0 : index
    %49 = vector.load %arg8[%c0_27, %48, %c0_28] : memref<2x8x128xf32, #tpu.memory_space<vmem>>, vector<2x1x128xf32>
    tpu.vector_store %arg8[%c0_27, %48, %c0_28], %47 {strides = array<i32>} : memref<2x8x128xf32, #tpu.memory_space<vmem>>, vector<2x1x128xf32>,
    %c1_i32 = arith.constant 1 : i32
    %c0_29 = arith.constant 0 : index
    %50 = arith.index_cast %c1_i32 : i32 to index
    %c0_30 = arith.constant 0 : index
    %51 = vector.load %arg7[%c0_29, %50, %c0_30] : memref<2x8x512xf32, #tpu.memory_space<vmem>>, vector<2x1x512xf32>
    %52 = vector.shape_cast %51 : vector<2x1x512xf32> to vector<2x512xf32>
    %c0_31 = arith.constant 0 : index
    %c0_32 = arith.constant 0 : index
    %53 = vector.load %arg9[%c0_31, %c0_32] : memref<2x128xf32, #tpu.memory_space<vmem>>, vector<2x128xf32>
    %cst_33 = arith.constant dense<0.000000e+00> : vector<2x512xf32>
    %54 = tpu.matmul %53, %12, %cst_33 {dimension_numbers = #tpu.dot_dimension_numbers<[1], [0], [0], [1], [0, 0, 1, 1], [], []>} : vector<2x128xf32>, vector<128x512xf32>, vector<2x512xf32> -> vector<2x512xf32>
    %55 = arith.addf %52, %54 : vector<2x512xf32>
    %56 = vector.extract_strided_slice %55 {offsets = [0, 0], sizes = [2, 128], strides = [1, 1]} : vector<2x512xf32> to vector<2x128xf32>
    %57 = arith.negf %56 : vector<2x128xf32>
    %58 = math.exp %57 : vector<2x128xf32>
    %cst_34 = arith.constant 1.000000e+00 : f32
    %59 = vector.broadcast %cst_34 : f32 to vector<2x128xf32>
    %60 = arith.addf %59, %58 : vector<2x128xf32>
    %61 = arith.divf %59, %60 : vector<2x128xf32>
    %62 = vector.extract_strided_slice %55 {offsets = [0, 128], sizes = [2, 128], strides = [1, 1]} : vector<2x512xf32> to vector<2x128xf32>
    %63 = arith.negf %62 : vector<2x128xf32>
    %64 = math.exp %63 : vector<2x128xf32>
    %cst_35 = arith.constant 1.000000e+00 : f32
    %65 = vector.broadcast %cst_35 : f32 to vector<2x128xf32>
    %66 = arith.addf %65, %64 : vector<2x128xf32>
    %67 = arith.divf %65, %66 : vector<2x128xf32>
    %68 = vector.extract_strided_slice %55 {offsets = [0, 256], sizes = [2, 128], strides = [1, 1]} : vector<2x512xf32> to vector<2x128xf32>
    %69 = math.tanh %68 : vector<2x128xf32>
    %70 = vector.extract_strided_slice %55 {offsets = [0, 384], sizes = [2, 128], strides = [1, 1]} : vector<2x512xf32> to vector<2x128xf32>
    %71 = arith.negf %70 : vector<2x128xf32>
    %72 = math.exp %71 : vector<2x128xf32>
    %cst_36 = arith.constant 1.000000e+00 : f32
    %73 = vector.broadcast %cst_36 : f32 to vector<2x128xf32>
    %74 = arith.addf %73, %72 : vector<2x128xf32>
    %75 = arith.divf %73, %74 : vector<2x128xf32>
    %c0_37 = arith.constant 0 : index
    %c0_38 = arith.constant 0 : index
    %76 = vector.load %arg10[%c0_37, %c0_38] : memref<2x128xf32, #tpu.memory_space<vmem>>, vector<2x128xf32>
    %77 = arith.mulf %67, %76 : vector<2x128xf32>
    %78 = arith.mulf %61, %69 : vector<2x128xf32>
    %79 = arith.addf %77, %78 : vector<2x128xf32>
    %80 = math.tanh %79 : vector<2x128xf32>
    %81 = arith.mulf %75, %80 : vector<2x128xf32>
    %c0_39 = arith.constant 0 : index
    %c0_40 = arith.constant 0 : index
    %82 = vector.load %arg10[%c0_39, %c0_40] : memref<2x128xf32, #tpu.memory_space<vmem>>, vector<2x128xf32>
    tpu.vector_store %arg10[%c0_39, %c0_40], %79 {strides = array<i32>} : memref<2x128xf32, #tpu.memory_space<vmem>>, vector<2x128xf32>,
    %c0_41 = arith.constant 0 : index
    %c0_42 = arith.constant 0 : index
    %83 = vector.load %arg9[%c0_41, %c0_42] : memref<2x128xf32, #tpu.memory_space<vmem>>, vector<2x128xf32>
    tpu.vector_store %arg9[%c0_41, %c0_42], %81 {strides = array<i32>} : memref<2x128xf32, #tpu.memory_space<vmem>>, vector<2x128xf32>,
    %84 = vector.shape_cast %81 : vector<2x128xf32> to vector<2x1x128xf32>
    %c0_43 = arith.constant 0 : index
    %85 = arith.index_cast %c1_i32 : i32 to index
    %c0_44 = arith.constant 0 : index
    %86 = vector.load %arg8[%c0_43, %85, %c0_44] : memref<2x8x128xf32, #tpu.memory_space<vmem>>, vector<2x1x128xf32>
    tpu.vector_store %arg8[%c0_43, %85, %c0_44], %84 {strides = array<i32>} : memref<2x8x128xf32, #tpu.memory_space<vmem>>, vector<2x1x128xf32>,
    %c2_i32 = arith.constant 2 : i32
    %c0_45 = arith.constant 0 : index
    %87 = arith.index_cast %c2_i32 : i32 to index
    %c0_46 = arith.constant 0 : index
    %88 = vector.load %arg7[%c0_45, %87, %c0_46] : memref<2x8x512xf32, #tpu.memory_space<vmem>>, vector<2x1x512xf32>
    %89 = vector.shape_cast %88 : vector<2x1x512xf32> to vector<2x512xf32>
    %c0_47 = arith.constant 0 : index
    %c0_48 = arith.constant 0 : index
    %90 = vector.load %arg9[%c0_47, %c0_48] : memref<2x128xf32, #tpu.memory_space<vmem>>, vector<2x128xf32>
    %cst_49 = arith.constant dense<0.000000e+00> : vector<2x512xf32>
    %91 = tpu.matmul %90, %12, %cst_49 {dimension_numbers = #tpu.dot_dimension_numbers<[1], [0], [0], [1], [0, 0, 1, 1], [], []>} : vector<2x128xf32>, vector<128x512xf32>, vector<2x512xf32> -> vector<2x512xf32>
    %92 = arith.addf %89, %91 : vector<2x512xf32>
    %93 = vector.extract_strided_slice %92 {offsets = [0, 0], sizes = [2, 128], strides = [1, 1]} : vector<2x512xf32> to vector<2x128xf32>
    %94 = arith.negf %93 : vector<2x128xf32>
    %95 = math.exp %94 : vector<2x128xf32>
    %cst_50 = arith.constant 1.000000e+00 : f32
    %96 = vector.broadcast %cst_50 : f32 to vector<2x128xf32>
    %97 = arith.addf %96, %95 : vector<2x128xf32>
    %98 = arith.divf %96, %97 : vector<2x128xf32>
    %99 = vector.extract_strided_slice %92 {offsets = [0, 128], sizes = [2, 128], strides = [1, 1]} : vector<2x512xf32> to vector<2x128xf32>
    %100 = arith.negf %99 : vector<2x128xf32>
    %101 = math.exp %100 : vector<2x128xf32>
    %cst_51 = arith.constant 1.000000e+00 : f32
    %102 = vector.broadcast %cst_51 : f32 to vector<2x128xf32>
    %103 = arith.addf %102, %101 : vector<2x128xf32>
    %104 = arith.divf %102, %103 : vector<2x128xf32>
    %105 = vector.extract_strided_slice %92 {offsets = [0, 256], sizes = [2, 128], strides = [1, 1]} : vector<2x512xf32> to vector<2x128xf32>
    %106 = math.tanh %105 : vector<2x128xf32>
    %107 = vector.extract_strided_slice %92 {offsets = [0, 384], sizes = [2, 128], strides = [1, 1]} : vector<2x512xf32> to vector<2x128xf32>
    %108 = arith.negf %107 : vector<2x128xf32>
    %109 = math.exp %108 : vector<2x128xf32>
    %cst_52 = arith.constant 1.000000e+00 : f32
    %110 = vector.broadcast %cst_52 : f32 to vector<2x128xf32>
    %111 = arith.addf %110, %109 : vector<2x128xf32>
    %112 = arith.divf %110, %111 : vector<2x128xf32>
    %c0_53 = arith.constant 0 : index
    %c0_54 = arith.constant 0 : index
    %113 = vector.load %arg10[%c0_53, %c0_54] : memref<2x128xf32, #tpu.memory_space<vmem>>, vector<2x128xf32>
    %114 = arith.mulf %104, %113 : vector<2x128xf32>
    %115 = arith.mulf %98, %106 : vector<2x128xf32>
    %116 = arith.addf %114, %115 : vector<2x128xf32>
    %117 = math.tanh %116 : vector<2x128xf32>
    %118 = arith.mulf %112, %117 : vector<2x128xf32>
    %c0_55 = arith.constant 0 : index
    %c0_56 = arith.constant 0 : index
    %119 = vector.load %arg10[%c0_55, %c0_56] : memref<2x128xf32, #tpu.memory_space<vmem>>, vector<2x128xf32>
    tpu.vector_store %arg10[%c0_55, %c0_56], %116 {strides = array<i32>} : memref<2x128xf32, #tpu.memory_space<vmem>>, vector<2x128xf32>,
    %c0_57 = arith.constant 0 : index
    %c0_58 = arith.constant 0 : index
    %120 = vector.load %arg9[%c0_57, %c0_58] : memref<2x128xf32, #tpu.memory_space<vmem>>, vector<2x128xf32>
    tpu.vector_store %arg9[%c0_57, %c0_58], %118 {strides = array<i32>} : memref<2x128xf32, #tpu.memory_space<vmem>>, vector<2x128xf32>,
    %121 = vector.shape_cast %118 : vector<2x128xf32> to vector<2x1x128xf32>
    %c0_59 = arith.constant 0 : index
    %122 = arith.index_cast %c2_i32 : i32 to index
    %c0_60 = arith.constant 0 : index
    %123 = vector.load %arg8[%c0_59, %122, %c0_60] : memref<2x8x128xf32, #tpu.memory_space<vmem>>, vector<2x1x128xf32>
    tpu.vector_store %arg8[%c0_59, %122, %c0_60], %121 {strides = array<i32>} : memref<2x8x128xf32, #tpu.memory_space<vmem>>, vector<2x1x128xf32>,
    %c3_i32 = arith.constant 3 : i32
    %c0_61 = arith.constant 0 : index
    %124 = arith.index_cast %c3_i32 : i32 to index
    %c0_62 = arith.constant 0 : index
    %125 = vector.load %arg7[%c0_61, %124, %c0_62] : memref<2x8x512xf32, #tpu.memory_space<vmem>>, vector<2x1x512xf32>
    %126 = vector.shape_cast %125 : vector<2x1x512xf32> to vector<2x512xf32>
    %c0_63 = arith.constant 0 : index
    %c0_64 = arith.constant 0 : index
    %127 = vector.load %arg9[%c0_63, %c0_64] : memref<2x128xf32, #tpu.memory_space<vmem>>, vector<2x128xf32>
    %cst_65 = arith.constant dense<0.000000e+00> : vector<2x512xf32>
    %128 = tpu.matmul %127, %12, %cst_65 {dimension_numbers = #tpu.dot_dimension_numbers<[1], [0], [0], [1], [0, 0, 1, 1], [], []>} : vector<2x128xf32>, vector<128x512xf32>, vector<2x512xf32> -> vector<2x512xf32>
    %129 = arith.addf %126, %128 : vector<2x512xf32>
    %130 = vector.extract_strided_slice %129 {offsets = [0, 0], sizes = [2, 128], strides = [1, 1]} : vector<2x512xf32> to vector<2x128xf32>
    %131 = arith.negf %130 : vector<2x128xf32>
    %132 = math.exp %131 : vector<2x128xf32>
    %cst_66 = arith.constant 1.000000e+00 : f32
    %133 = vector.broadcast %cst_66 : f32 to vector<2x128xf32>
    %134 = arith.addf %133, %132 : vector<2x128xf32>
    %135 = arith.divf %133, %134 : vector<2x128xf32>
    %136 = vector.extract_strided_slice %129 {offsets = [0, 128], sizes = [2, 128], strides = [1, 1]} : vector<2x512xf32> to vector<2x128xf32>
    %137 = arith.negf %136 : vector<2x128xf32>
    %138 = math.exp %137 : vector<2x128xf32>
    %cst_67 = arith.constant 1.000000e+00 : f32
    %139 = vector.broadcast %cst_67 : f32 to vector<2x128xf32>
    %140 = arith.addf %139, %138 : vector<2x128xf32>
    %141 = arith.divf %139, %140 : vector<2x128xf32>
    %142 = vector.extract_strided_slice %129 {offsets = [0, 256], sizes = [2, 128], strides = [1, 1]} : vector<2x512xf32> to vector<2x128xf32>
    %143 = math.tanh %142 : vector<2x128xf32>
    %144 = vector.extract_strided_slice %129 {offsets = [0, 384], sizes = [2, 128], strides = [1, 1]} : vector<2x512xf32> to vector<2x128xf32>
    %145 = arith.negf %144 : vector<2x128xf32>
    %146 = math.exp %145 : vector<2x128xf32>
    %cst_68 = arith.constant 1.000000e+00 : f32
    %147 = vector.broadcast %cst_68 : f32 to vector<2x128xf32>
    %148 = arith.addf %147, %146 : vector<2x128xf32>
    %149 = arith.divf %147, %148 : vector<2x128xf32>
    %c0_69 = arith.constant 0 : index
    %c0_70 = arith.constant 0 : index
    %150 = vector.load %arg10[%c0_69, %c0_70] : memref<2x128xf32, #tpu.memory_space<vmem>>, vector<2x128xf32>
    %151 = arith.mulf %141, %150 : vector<2x128xf32>
    %152 = arith.mulf %135, %143 : vector<2x128xf32>
    %153 = arith.addf %151, %152 : vector<2x128xf32>
    %154 = math.tanh %153 : vector<2x128xf32>
    %155 = arith.mulf %149, %154 : vector<2x128xf32>
    %c0_71 = arith.constant 0 : index
    %c0_72 = arith.constant 0 : index
    %156 = vector.load %arg10[%c0_71, %c0_72] : memref<2x128xf32, #tpu.memory_space<vmem>>, vector<2x128xf32>
    tpu.vector_store %arg10[%c0_71, %c0_72], %153 {strides = array<i32>} : memref<2x128xf32, #tpu.memory_space<vmem>>, vector<2x128xf32>,
    %c0_73 = arith.constant 0 : index
    %c0_74 = arith.constant 0 : index
    %157 = vector.load %arg9[%c0_73, %c0_74] : memref<2x128xf32, #tpu.memory_space<vmem>>, vector<2x128xf32>
    tpu.vector_store %arg9[%c0_73, %c0_74], %155 {strides = array<i32>} : memref<2x128xf32, #tpu.memory_space<vmem>>, vector<2x128xf32>,
    %158 = vector.shape_cast %155 : vector<2x128xf32> to vector<2x1x128xf32>
    %c0_75 = arith.constant 0 : index
    %159 = arith.index_cast %c3_i32 : i32 to index
    %c0_76 = arith.constant 0 : index
    %160 = vector.load %arg8[%c0_75, %159, %c0_76] : memref<2x8x128xf32, #tpu.memory_space<vmem>>, vector<2x1x128xf32>
    tpu.vector_store %arg8[%c0_75, %159, %c0_76], %158 {strides = array<i32>} : memref<2x8x128xf32, #tpu.memory_space<vmem>>, vector<2x1x128xf32>,
    %c4_i32 = arith.constant 4 : i32
    %c0_77 = arith.constant 0 : index
    %161 = arith.index_cast %c4_i32 : i32 to index
    %c0_78 = arith.constant 0 : index
    %162 = vector.load %arg7[%c0_77, %161, %c0_78] : memref<2x8x512xf32, #tpu.memory_space<vmem>>, vector<2x1x512xf32>
    %163 = vector.shape_cast %162 : vector<2x1x512xf32> to vector<2x512xf32>
    %c0_79 = arith.constant 0 : index
    %c0_80 = arith.constant 0 : index
    %164 = vector.load %arg9[%c0_79, %c0_80] : memref<2x128xf32, #tpu.memory_space<vmem>>, vector<2x128xf32>
    %cst_81 = arith.constant dense<0.000000e+00> : vector<2x512xf32>
    %165 = tpu.matmul %164, %12, %cst_81 {dimension_numbers = #tpu.dot_dimension_numbers<[1], [0], [0], [1], [0, 0, 1, 1], [], []>} : vector<2x128xf32>, vector<128x512xf32>, vector<2x512xf32> -> vector<2x512xf32>
    %166 = arith.addf %163, %165 : vector<2x512xf32>
    %167 = vector.extract_strided_slice %166 {offsets = [0, 0], sizes = [2, 128], strides = [1, 1]} : vector<2x512xf32> to vector<2x128xf32>
    %168 = arith.negf %167 : vector<2x128xf32>
    %169 = math.exp %168 : vector<2x128xf32>
    %cst_82 = arith.constant 1.000000e+00 : f32
    %170 = vector.broadcast %cst_82 : f32 to vector<2x128xf32>
    %171 = arith.addf %170, %169 : vector<2x128xf32>
    %172 = arith.divf %170, %171 : vector<2x128xf32>
    %173 = vector.extract_strided_slice %166 {offsets = [0, 128], sizes = [2, 128], strides = [1, 1]} : vector<2x512xf32> to vector<2x128xf32>
    %174 = arith.negf %173 : vector<2x128xf32>
    %175 = math.exp %174 : vector<2x128xf32>
    %cst_83 = arith.constant 1.000000e+00 : f32
    %176 = vector.broadcast %cst_83 : f32 to vector<2x128xf32>
    %177 = arith.addf %176, %175 : vector<2x128xf32>
    %178 = arith.divf %176, %177 : vector<2x128xf32>
    %179 = vector.extract_strided_slice %166 {offsets = [0, 256], sizes = [2, 128], strides = [1, 1]} : vector<2x512xf32> to vector<2x128xf32>
    %180 = math.tanh %179 : vector<2x128xf32>
    %181 = vector.extract_strided_slice %166 {offsets = [0, 384], sizes = [2, 128], strides = [1, 1]} : vector<2x512xf32> to vector<2x128xf32>
    %182 = arith.negf %181 : vector<2x128xf32>
    %183 = math.exp %182 : vector<2x128xf32>
    %cst_84 = arith.constant 1.000000e+00 : f32
    %184 = vector.broadcast %cst_84 : f32 to vector<2x128xf32>
    %185 = arith.addf %184, %183 : vector<2x128xf32>
    %186 = arith.divf %184, %185 : vector<2x128xf32>
    %c0_85 = arith.constant 0 : index
    %c0_86 = arith.constant 0 : index
    %187 = vector.load %arg10[%c0_85, %c0_86] : memref<2x128xf32, #tpu.memory_space<vmem>>, vector<2x128xf32>
    %188 = arith.mulf %178, %187 : vector<2x128xf32>
    %189 = arith.mulf %172, %180 : vector<2x128xf32>
    %190 = arith.addf %188, %189 : vector<2x128xf32>
    %191 = math.tanh %190 : vector<2x128xf32>
    %192 = arith.mulf %186, %191 : vector<2x128xf32>
    %c0_87 = arith.constant 0 : index
    %c0_88 = arith.constant 0 : index
    %193 = vector.load %arg10[%c0_87, %c0_88] : memref<2x128xf32, #tpu.memory_space<vmem>>, vector<2x128xf32>
    tpu.vector_store %arg10[%c0_87, %c0_88], %190 {strides = array<i32>} : memref<2x128xf32, #tpu.memory_space<vmem>>, vector<2x128xf32>,
    %c0_89 = arith.constant 0 : index
    %c0_90 = arith.constant 0 : index
    %194 = vector.load %arg9[%c0_89, %c0_90] : memref<2x128xf32, #tpu.memory_space<vmem>>, vector<2x128xf32>
    tpu.vector_store %arg9[%c0_89, %c0_90], %192 {strides = array<i32>} : memref<2x128xf32, #tpu.memory_space<vmem>>, vector<2x128xf32>,
    %195 = vector.shape_cast %192 : vector<2x128xf32> to vector<2x1x128xf32>
    %c0_91 = arith.constant 0 : index
    %196 = arith.index_cast %c4_i32 : i32 to index
    %c0_92 = arith.constant 0 : index
    %197 = vector.load %arg8[%c0_91, %196, %c0_92] : memref<2x8x128xf32, #tpu.memory_space<vmem>>, vector<2x1x128xf32>
    tpu.vector_store %arg8[%c0_91, %196, %c0_92], %195 {strides = array<i32>} : memref<2x8x128xf32, #tpu.memory_space<vmem>>, vector<2x1x128xf32>,
    %c5_i32 = arith.constant 5 : i32
    %c0_93 = arith.constant 0 : index
    %198 = arith.index_cast %c5_i32 : i32 to index
    %c0_94 = arith.constant 0 : index
    %199 = vector.load %arg7[%c0_93, %198, %c0_94] : memref<2x8x512xf32, #tpu.memory_space<vmem>>, vector<2x1x512xf32>
    %200 = vector.shape_cast %199 : vector<2x1x512xf32> to vector<2x512xf32>
    %c0_95 = arith.constant 0 : index
    %c0_96 = arith.constant 0 : index
    %201 = vector.load %arg9[%c0_95, %c0_96] : memref<2x128xf32, #tpu.memory_space<vmem>>, vector<2x128xf32>
    %cst_97 = arith.constant dense<0.000000e+00> : vector<2x512xf32>
    %202 = tpu.matmul %201, %12, %cst_97 {dimension_numbers = #tpu.dot_dimension_numbers<[1], [0], [0], [1], [0, 0, 1, 1], [], []>} : vector<2x128xf32>, vector<128x512xf32>, vector<2x512xf32> -> vector<2x512xf32>
    %203 = arith.addf %200, %202 : vector<2x512xf32>
    %204 = vector.extract_strided_slice %203 {offsets = [0, 0], sizes = [2, 128], strides = [1, 1]} : vector<2x512xf32> to vector<2x128xf32>
    %205 = arith.negf %204 : vector<2x128xf32>
    %206 = math.exp %205 : vector<2x128xf32>
    %cst_98 = arith.constant 1.000000e+00 : f32
    %207 = vector.broadcast %cst_98 : f32 to vector<2x128xf32>
    %208 = arith.addf %207, %206 : vector<2x128xf32>
    %209 = arith.divf %207, %208 : vector<2x128xf32>
    %210 = vector.extract_strided_slice %203 {offsets = [0, 128], sizes = [2, 128], strides = [1, 1]} : vector<2x512xf32> to vector<2x128xf32>
    %211 = arith.negf %210 : vector<2x128xf32>
    %212 = math.exp %211 : vector<2x128xf32>
    %cst_99 = arith.constant 1.000000e+00 : f32
    %213 = vector.broadcast %cst_99 : f32 to vector<2x128xf32>
    %214 = arith.addf %213, %212 : vector<2x128xf32>
    %215 = arith.divf %213, %214 : vector<2x128xf32>
    %216 = vector.extract_strided_slice %203 {offsets = [0, 256], sizes = [2, 128], strides = [1, 1]} : vector<2x512xf32> to vector<2x128xf32>
    %217 = math.tanh %216 : vector<2x128xf32>
    %218 = vector.extract_strided_slice %203 {offsets = [0, 384], sizes = [2, 128], strides = [1, 1]} : vector<2x512xf32> to vector<2x128xf32>
    %219 = arith.negf %218 : vector<2x128xf32>
    %220 = math.exp %219 : vector<2x128xf32>
    %cst_100 = arith.constant 1.000000e+00 : f32
    %221 = vector.broadcast %cst_100 : f32 to vector<2x128xf32>
    %222 = arith.addf %221, %220 : vector<2x128xf32>
    %223 = arith.divf %221, %222 : vector<2x128xf32>
    %c0_101 = arith.constant 0 : index
    %c0_102 = arith.constant 0 : index
    %224 = vector.load %arg10[%c0_101, %c0_102] : memref<2x128xf32, #tpu.memory_space<vmem>>, vector<2x128xf32>
    %225 = arith.mulf %215, %224 : vector<2x128xf32>
    %226 = arith.mulf %209, %217 : vector<2x128xf32>
    %227 = arith.addf %225, %226 : vector<2x128xf32>
    %228 = math.tanh %227 : vector<2x128xf32>
    %229 = arith.mulf %223, %228 : vector<2x128xf32>
    %c0_103 = arith.constant 0 : index
    %c0_104 = arith.constant 0 : index
    %230 = vector.load %arg10[%c0_103, %c0_104] : memref<2x128xf32, #tpu.memory_space<vmem>>, vector<2x128xf32>
    tpu.vector_store %arg10[%c0_103, %c0_104], %227 {strides = array<i32>} : memref<2x128xf32, #tpu.memory_space<vmem>>, vector<2x128xf32>,
    %c0_105 = arith.constant 0 : index
    %c0_106 = arith.constant 0 : index
    %231 = vector.load %arg9[%c0_105, %c0_106] : memref<2x128xf32, #tpu.memory_space<vmem>>, vector<2x128xf32>
    tpu.vector_store %arg9[%c0_105, %c0_106], %229 {strides = array<i32>} : memref<2x128xf32, #tpu.memory_space<vmem>>, vector<2x128xf32>,
    %232 = vector.shape_cast %229 : vector<2x128xf32> to vector<2x1x128xf32>
    %c0_107 = arith.constant 0 : index
    %233 = arith.index_cast %c5_i32 : i32 to index
    %c0_108 = arith.constant 0 : index
    %234 = vector.load %arg8[%c0_107, %233, %c0_108] : memref<2x8x128xf32, #tpu.memory_space<vmem>>, vector<2x1x128xf32>
    tpu.vector_store %arg8[%c0_107, %233, %c0_108], %232 {strides = array<i32>} : memref<2x8x128xf32, #tpu.memory_space<vmem>>, vector<2x1x128xf32>,
    %c6_i32 = arith.constant 6 : i32
    %c0_109 = arith.constant 0 : index
    %235 = arith.index_cast %c6_i32 : i32 to index
    %c0_110 = arith.constant 0 : index
    %236 = vector.load %arg7[%c0_109, %235, %c0_110] : memref<2x8x512xf32, #tpu.memory_space<vmem>>, vector<2x1x512xf32>
    %237 = vector.shape_cast %236 : vector<2x1x512xf32> to vector<2x512xf32>
    %c0_111 = arith.constant 0 : index
    %c0_112 = arith.constant 0 : index
    %238 = vector.load %arg9[%c0_111, %c0_112] : memref<2x128xf32, #tpu.memory_space<vmem>>, vector<2x128xf32>
    %cst_113 = arith.constant dense<0.000000e+00> : vector<2x512xf32>
    %239 = tpu.matmul %238, %12, %cst_113 {dimension_numbers = #tpu.dot_dimension_numbers<[1], [0], [0], [1], [0, 0, 1, 1], [], []>} : vector<2x128xf32>, vector<128x512xf32>, vector<2x512xf32> -> vector<2x512xf32>
    %240 = arith.addf %237, %239 : vector<2x512xf32>
    %241 = vector.extract_strided_slice %240 {offsets = [0, 0], sizes = [2, 128], strides = [1, 1]} : vector<2x512xf32> to vector<2x128xf32>
    %242 = arith.negf %241 : vector<2x128xf32>
    %243 = math.exp %242 : vector<2x128xf32>
    %cst_114 = arith.constant 1.000000e+00 : f32
    %244 = vector.broadcast %cst_114 : f32 to vector<2x128xf32>
    %245 = arith.addf %244, %243 : vector<2x128xf32>
    %246 = arith.divf %244, %245 : vector<2x128xf32>
    %247 = vector.extract_strided_slice %240 {offsets = [0, 128], sizes = [2, 128], strides = [1, 1]} : vector<2x512xf32> to vector<2x128xf32>
    %248 = arith.negf %247 : vector<2x128xf32>
    %249 = math.exp %248 : vector<2x128xf32>
    %cst_115 = arith.constant 1.000000e+00 : f32
    %250 = vector.broadcast %cst_115 : f32 to vector<2x128xf32>
    %251 = arith.addf %250, %249 : vector<2x128xf32>
    %252 = arith.divf %250, %251 : vector<2x128xf32>
    %253 = vector.extract_strided_slice %240 {offsets = [0, 256], sizes = [2, 128], strides = [1, 1]} : vector<2x512xf32> to vector<2x128xf32>
    %254 = math.tanh %253 : vector<2x128xf32>
    %255 = vector.extract_strided_slice %240 {offsets = [0, 384], sizes = [2, 128], strides = [1, 1]} : vector<2x512xf32> to vector<2x128xf32>
    %256 = arith.negf %255 : vector<2x128xf32>
    %257 = math.exp %256 : vector<2x128xf32>
    %cst_116 = arith.constant 1.000000e+00 : f32
    %258 = vector.broadcast %cst_116 : f32 to vector<2x128xf32>
    %259 = arith.addf %258, %257 : vector<2x128xf32>
    %260 = arith.divf %258, %259 : vector<2x128xf32>
    %c0_117 = arith.constant 0 : index
    %c0_118 = arith.constant 0 : index
    %261 = vector.load %arg10[%c0_117, %c0_118] : memref<2x128xf32, #tpu.memory_space<vmem>>, vector<2x128xf32>
    %262 = arith.mulf %252, %261 : vector<2x128xf32>
    %263 = arith.mulf %246, %254 : vector<2x128xf32>
    %264 = arith.addf %262, %263 : vector<2x128xf32>
    %265 = math.tanh %264 : vector<2x128xf32>
    %266 = arith.mulf %260, %265 : vector<2x128xf32>
    %c0_119 = arith.constant 0 : index
    %c0_120 = arith.constant 0 : index
    %267 = vector.load %arg10[%c0_119, %c0_120] : memref<2x128xf32, #tpu.memory_space<vmem>>, vector<2x128xf32>
    tpu.vector_store %arg10[%c0_119, %c0_120], %264 {strides = array<i32>} : memref<2x128xf32, #tpu.memory_space<vmem>>, vector<2x128xf32>,
    %c0_121 = arith.constant 0 : index
    %c0_122 = arith.constant 0 : index
    %268 = vector.load %arg9[%c0_121, %c0_122] : memref<2x128xf32, #tpu.memory_space<vmem>>, vector<2x128xf32>
    tpu.vector_store %arg9[%c0_121, %c0_122], %266 {strides = array<i32>} : memref<2x128xf32, #tpu.memory_space<vmem>>, vector<2x128xf32>,
    %269 = vector.shape_cast %266 : vector<2x128xf32> to vector<2x1x128xf32>
    %c0_123 = arith.constant 0 : index
    %270 = arith.index_cast %c6_i32 : i32 to index
    %c0_124 = arith.constant 0 : index
    %271 = vector.load %arg8[%c0_123, %270, %c0_124] : memref<2x8x128xf32, #tpu.memory_space<vmem>>, vector<2x1x128xf32>
    tpu.vector_store %arg8[%c0_123, %270, %c0_124], %269 {strides = array<i32>} : memref<2x8x128xf32, #tpu.memory_space<vmem>>, vector<2x1x128xf32>,
    %c7_i32 = arith.constant 7 : i32
    %c0_125 = arith.constant 0 : index
    %272 = arith.index_cast %c7_i32 : i32 to index
    %c0_126 = arith.constant 0 : index
    %273 = vector.load %arg7[%c0_125, %272, %c0_126] : memref<2x8x512xf32, #tpu.memory_space<vmem>>, vector<2x1x512xf32>
    %274 = vector.shape_cast %273 : vector<2x1x512xf32> to vector<2x512xf32>
    %c0_127 = arith.constant 0 : index
    %c0_128 = arith.constant 0 : index
    %275 = vector.load %arg9[%c0_127, %c0_128] : memref<2x128xf32, #tpu.memory_space<vmem>>, vector<2x128xf32>
    %cst_129 = arith.constant dense<0.000000e+00> : vector<2x512xf32>
    %276 = tpu.matmul %275, %12, %cst_129 {dimension_numbers = #tpu.dot_dimension_numbers<[1], [0], [0], [1], [0, 0, 1, 1], [], []>} : vector<2x128xf32>, vector<128x512xf32>, vector<2x512xf32> -> vector<2x512xf32>
    %277 = arith.addf %274, %276 : vector<2x512xf32>
    %278 = vector.extract_strided_slice %277 {offsets = [0, 0], sizes = [2, 128], strides = [1, 1]} : vector<2x512xf32> to vector<2x128xf32>
    %279 = arith.negf %278 : vector<2x128xf32>
    %280 = math.exp %279 : vector<2x128xf32>
    %cst_130 = arith.constant 1.000000e+00 : f32
    %281 = vector.broadcast %cst_130 : f32 to vector<2x128xf32>
    %282 = arith.addf %281, %280 : vector<2x128xf32>
    %283 = arith.divf %281, %282 : vector<2x128xf32>
    %284 = vector.extract_strided_slice %277 {offsets = [0, 128], sizes = [2, 128], strides = [1, 1]} : vector<2x512xf32> to vector<2x128xf32>
    %285 = arith.negf %284 : vector<2x128xf32>
    %286 = math.exp %285 : vector<2x128xf32>
    %cst_131 = arith.constant 1.000000e+00 : f32
    %287 = vector.broadcast %cst_131 : f32 to vector<2x128xf32>
    %288 = arith.addf %287, %286 : vector<2x128xf32>
    %289 = arith.divf %287, %288 : vector<2x128xf32>
    %290 = vector.extract_strided_slice %277 {offsets = [0, 256], sizes = [2, 128], strides = [1, 1]} : vector<2x512xf32> to vector<2x128xf32>
    %291 = math.tanh %290 : vector<2x128xf32>
    %292 = vector.extract_strided_slice %277 {offsets = [0, 384], sizes = [2, 128], strides = [1, 1]} : vector<2x512xf32> to vector<2x128xf32>
    %293 = arith.negf %292 : vector<2x128xf32>
    %294 = math.exp %293 : vector<2x128xf32>
    %cst_132 = arith.constant 1.000000e+00 : f32
    %295 = vector.broadcast %cst_132 : f32 to vector<2x128xf32>
    %296 = arith.addf %295, %294 : vector<2x128xf32>
    %297 = arith.divf %295, %296 : vector<2x128xf32>
    %c0_133 = arith.constant 0 : index
    %c0_134 = arith.constant 0 : index
    %298 = vector.load %arg10[%c0_133, %c0_134] : memref<2x128xf32, #tpu.memory_space<vmem>>, vector<2x128xf32>
    %299 = arith.mulf %289, %298 : vector<2x128xf32>
    %300 = arith.mulf %283, %291 : vector<2x128xf32>
    %301 = arith.addf %299, %300 : vector<2x128xf32>
    %302 = math.tanh %301 : vector<2x128xf32>
    %303 = arith.mulf %297, %302 : vector<2x128xf32>
    %c0_135 = arith.constant 0 : index
    %c0_136 = arith.constant 0 : index
    %304 = vector.load %arg10[%c0_135, %c0_136] : memref<2x128xf32, #tpu.memory_space<vmem>>, vector<2x128xf32>
    tpu.vector_store %arg10[%c0_135, %c0_136], %301 {strides = array<i32>} : memref<2x128xf32, #tpu.memory_space<vmem>>, vector<2x128xf32>,
    %c0_137 = arith.constant 0 : index
    %c0_138 = arith.constant 0 : index
    %305 = vector.load %arg9[%c0_137, %c0_138] : memref<2x128xf32, #tpu.memory_space<vmem>>, vector<2x128xf32>
    tpu.vector_store %arg9[%c0_137, %c0_138], %303 {strides = array<i32>} : memref<2x128xf32, #tpu.memory_space<vmem>>, vector<2x128xf32>,
    %306 = vector.shape_cast %303 : vector<2x128xf32> to vector<2x1x128xf32>
    %c0_139 = arith.constant 0 : index
    %307 = arith.index_cast %c7_i32 : i32 to index
    %c0_140 = arith.constant 0 : index
    %308 = vector.load %arg8[%c0_139, %307, %c0_140] : memref<2x8x128xf32, #tpu.memory_space<vmem>>, vector<2x1x128xf32>
    tpu.vector_store %arg8[%c0_139, %307, %c0_140], %306 {strides = array<i32>} : memref<2x8x128xf32, #tpu.memory_space<vmem>>, vector<2x1x128xf32>,
    %c8_i32 = arith.constant 8 : i32
    %c0_141 = arith.constant 0 : index
    %c0_142 = arith.constant 0 : index
    %c0_143 = arith.constant 0 : index
    %309 = vector.load %arg8[%c0_141, %c0_142, %c0_143] : memref<2x8x128xf32, #tpu.memory_space<vmem>>, vector<2x8x128xf32>
    %c0_144 = arith.constant 0 : index
    %c0_145 = arith.constant 0 : index
    %c0_146 = arith.constant 0 : index
    %310 = vector.load %arg6[%c0_144, %c0_145, %c0_146] : memref<2x8x128xf32, #tpu.memory_space<vmem>>, vector<2x8x128xf32>
    tpu.vector_store %arg6[%c0_144, %c0_145, %c0_146], %309 {strides = array<i32>} : memref<2x8x128xf32, #tpu.memory_space<vmem>>, vector<2x8x128xf32>,
    return
  }
  func.func @transform_0(%arg0: i32, %arg1: i32) -> (i32, i32, i32) {
    %c0_i32 = arith.constant 0 : i32
    %c0_i32_0 = arith.constant 0 : i32
    return %arg0, %arg1, %c0_i32 : i32, i32, i32
  }
  func.func @transform_1(%arg0: i32, %arg1: i32) -> (i32, i32) {
    %c0_i32 = arith.constant 0 : i32
    %c0_i32_0 = arith.constant 0 : i32
    %c0_i32_1 = arith.constant 0 : i32
    return %c0_i32, %c0_i32_0 : i32, i32
  }
  func.func @transform_2(%arg0: i32, %arg1: i32) -> (i32, i32) {
    %c0_i32 = arith.constant 0 : i32
    %c0_i32_0 = arith.constant 0 : i32
    %c0_i32_1 = arith.constant 0 : i32
    return %c0_i32, %c0_i32_0 : i32, i32
  }
  func.func @transform_3(%arg0: i32, %arg1: i32) -> (i32, i32) {
    %c0_i32 = arith.constant 0 : i32
    %c0_i32_0 = arith.constant 0 : i32
    %c0_i32_1 = arith.constant 0 : i32
    return %c0_i32, %c0_i32_0 : i32, i32
  }
  func.func @transform_4(%arg0: i32, %arg1: i32) -> (i32, i32, i32) {
    %c0_i32 = arith.constant 0 : i32
    %c0_i32_0 = arith.constant 0 : i32
    return %arg0, %arg1, %c0_i32 : i32, i32, i32
  }
}

</mosaic_0001>

<llo_original>
// kernel: tpu_custom_call.1
$region0: #{tpu_custom_call.1}
  #allocation0 [shape = 'u32[]', space=smem, size = 0x4, offset = 0x4, fixed_abs, tag = 'smem constant byte address 0x4 - core index']
  #allocation1 [shape = 'u32[144,128]{1,0:T(1,128)}', space=vmem, size = 0x12000, scoped, tag = 'internal scratch']
  #allocation2 [shape = 'f32[2,8,512]{2,1,0:T(8,128)}', space=vmem, size = 0x8000, scoped, tag = 'scratch operand']
  #allocation3 [shape = 'f32[2,8,128]{2,1,0:T(8,128)}', space=vmem, size = 0x2000, scoped, tag = 'scratch operand']
  #allocation4 [shape = 'f32[2,128]{1,0:T(2,128)}', space=vmem, size = 0x400, scoped, tag = 'scratch operand']
  #allocation5 [shape = 'f32[2,128]{1,0:T(2,128)}', space=vmem, size = 0x400, scoped, tag = 'scratch operand']
  %s0 = inlined_call_operand.hbm [shape: f32[2,16,32], index: 0, kind: input, shape index: {}]
  %s1 = inlined_call_operand.hbm [shape: f32[32,512], index: 1, kind: input, shape index: {}]
  %s2 = inlined_call_operand.hbm [shape: f32[128,512], index: 2, kind: input, shape index: {}]
  %s3 = inlined_call_operand.hbm [shape: f32[1,512], index: 3, kind: input, shape index: {}]
  %s4 = inlined_call_operand.hbm [shape: f32[2,16,128], index: 4, kind: output, shape index: {}]
  %s5 = sld [smem:[#allocation0]]
  $region69: #{tpu_custom_call.1} parent=0
    _
  %s7 = ssub.s32 1, %s5
  %s8 = scalar_select 0, %s7, %s5
  $region1: #{tpu_custom_call.1} parent=0
    #allocation6 [shape = 'u8[16384]{0}', space=vmem, size = 0x4000, scoped, tag = 'input window, operand 0']
    #allocation7 [shape = 's32[2]{0}', space=sflag, size = 0x8, scoped, tag = 'scoped memory for tpu_custom_call.1']
    #allocation8 [shape = 's32[2]{0}', space=sflag, size = 0x8, scoped, tag = 'scoped memory for tpu_custom_call.1']
    #allocation9 [shape = 'u8[65536]{0}', space=vmem, size = 0x10000, scoped, tag = 'input window, operand 1, single buffered']
    #allocation10 [shape = 's32[1]{0}', space=sflag, size = 0x4, scoped, tag = 'scoped memory for tpu_custom_call.1']
    #allocation11 [shape = 'u8[262144]{0}', space=vmem, size = 0x40000, scoped, tag = 'input window, operand 2, single buffered']
    #allocation12 [shape = 'u8[2048]{0}', space=vmem, size = 0x800, scoped, tag = 'input window, operand 3, single buffered']
    #allocation13 [shape = 's32[1]{0}', space=sflag, size = 0x4, scoped, tag = 'scoped memory for tpu_custom_call.1']
    #allocation14 [shape = 'u8[16384]{0}', space=vmem, size = 0x4000, scoped, tag = 'output window, operand 0']
    %9 = vsyncpa [#allocation7], 0
    %s10 = scalar_lea.sflag [#allocation7], 1
    %11 = vsyncpa %s10, 0
    %12 = vsyncpa [#allocation10], 0
    %13 = vsyncpa [#allocation13], 0
    %14 = vsyncpa [#allocation8], 0
    %s15 = scalar_lea.sflag [#allocation8], 1
    %16 = vsyncpa %s15, 0
    loop: start=0, step=1, limit=4
    $region2: #{tpu_custom_call.1} parent=1 // loop_pre_header
      _
    $region3: #{tpu_custom_call.1} parent=1 // loop_header
      %s18 = sphi 0, %s22
      %p19 = scmp.ge.s32.totalorder %s18, 4
      %s25 = sphi 0, %s37
      %s26 = sphi 0, %s33
      %s27 = sphi 0, %s25
      %s28 = sphi 0, %s26
      %s29 = sphi 0, %s27
      %s30 = sphi 0, %s28
      %s42 = sphi 0, %s44
      %s45 = sphi 0, %s42
      %s46 = sphi 0, %s45
      %s62 = sphi 0, %s46
      %s66 = sphi 0, %s66
      %s68 = sphi 0, %s66
      %s69 = sphi 0, %s68
      %s83 = sphi 0, %s69
      %s87 = sphi 0, %s87
      %s89 = sphi 0, %s87
      %s90 = sphi 0, %s89
      %s104 = sphi 0, %s90
      %s108 = sphi 0, %s108
      %s110 = sphi 0, %s108
      %s111 = sphi 0, %s110
      %s125 = sphi 0, %s111
      %s133 = sphi 0, %s135
      %s136 = sphi 0, %s133
      %s137 = sphi 0, %s136
      %s153 = sphi 0, %s137
    $region4: #{tpu_custom_call.1} parent=1 // loop_header_branch
      %21 = sbr.rel (%p19) target = $region8
    $region5: #{tpu_custom_call.1} parent=1 // loop_body
      %s23 = ssub.s32 %s18, 1
      %s24 = ssub.s32 %s18, 2
      %s31 = sadd.s32 1, %s26
      %p32 = scmp.ge.s32.totalorder %s31, 2
      %s33 = scalar_select %p32, 0, %s31
      %s34 = sadd.s32 1, %s25
      %s35 = scalar_select %p32, %s34, %s25
      %p36 = scmp.ge.s32.totalorder %s35, 1
      %s37 = scalar_select %p36, 0, %s35
      %s38 = ssub.s32 %s25, %s37
      %s39 = ssub.s32 %s26, %s33
      %s40 = sor.u32 %s38, %s39
      %p41 = scmp.eq.s32.totalorder %s40, 0
      %s43 = sadd.s32 %s42, 1
      %s44 = scalar_select %p41, %s42, %s43
      %p47 = pneg %p41
      %p48 = scmp.eq.s32.totalorder %s18, 1
      %p49 = por %p47, %p48
      %p50 = scmp.ne.s32.totalorder %s42, %s45
      %p51 = scmp.eq.s32.totalorder %s18, 0
      %p52 = por %p50, %p51
      %p53 = scmp.ne.s32.totalorder %s42, %s45
      %p54 = scmp.eq.s32.totalorder %s23, 1
      %p55 = por %p53, %p54
      %p56 = scmp.ne.s32.totalorder %s45, %s46
      %p57 = scmp.eq.s32.totalorder %s23, 0
      %p58 = por %p56, %p57
      %p59 = scmp.ne.s32.totalorder %s45, %s46
      %p60 = scmp.eq.s32.totalorder %s24, 1
      %p61 = por %p59, %p60
      %p63 = scmp.ne.s32.totalorder %s46, %s62
      %p64 = scmp.eq.s32.totalorder %s24, 0
      %p65 = por %p63, %p64
      %s67 = sadd.s32 %s66, 1
      %p70 = scmp.eq.s32.totalorder %s18, 1
      %p71 = scmp.ne.s32.totalorder %s66, %s68
      %p72 = scmp.eq.s32.totalorder %s18, 0
      %p73 = por %p71, %p72
      %p74 = scmp.ne.s32.totalorder %s66, %s68
      %p75 = scmp.eq.s32.totalorder %s23, 1
      %p76 = por %p74, %p75
      %p77 = scmp.ne.s32.totalorder %s68, %s69
      %p78 = scmp.eq.s32.totalorder %s23, 0
      %p79 = por %p77, %p78
      %p80 = scmp.ne.s32.totalorder %s68, %s69
      %p81 = scmp.eq.s32.totalorder %s24, 1
      %p82 = por %p80, %p81
      %p84 = scmp.ne.s32.totalorder %s69, %s83
      %p85 = scmp.eq.s32.totalorder %s24, 0
      %p86 = por %p84, %p85
      %s88 = sadd.s32 %s87, 1
      %p91 = scmp.eq.s32.totalorder %s18, 1
      %p92 = scmp.ne.s32.totalorder %s87, %s89
      %p93 = scmp.eq.s32.totalorder %s18, 0
      %p94 = por %p92, %p93
      %p95 = scmp.ne.s32.totalorder %s87, %s89
      %p96 = scmp.eq.s32.totalorder %s23, 1
      %p97 = por %p95, %p96
      %p98 = scmp.ne.s32.totalorder %s89, %s90
      %p99 = scmp.eq.s32.totalorder %s23, 0
      %p100 = por %p98, %p99
      %p101 = scmp.ne.s32.totalorder %s89, %s90
      %p102 = scmp.eq.s32.totalorder %s24, 1
      %p103 = por %p101, %p102
      %p105 = scmp.ne.s32.totalorder %s90, %s104
      %p106 = scmp.eq.s32.totalorder %s24, 0
      %p107 = por %p105, %p106
      %s109 = sadd.s32 %s108, 1
      %p112 = scmp.eq.s32.totalorder %s18, 1
      %p113 = scmp.ne.s32.totalorder %s108, %s110
      %p114 = scmp.eq.s32.totalorder %s18, 0
      %p115 = por %p113, %p114
      %p116 = scmp.ne.s32.totalorder %s108, %s110
      %p117 = scmp.eq.s32.totalorder %s23, 1
      %p118 = por %p116, %p117
      %p119 = scmp.ne.s32.totalorder %s110, %s111
      %p120 = scmp.eq.s32.totalorder %s23, 0
      %p121 = por %p119, %p120
      %p122 = scmp.ne.s32.totalorder %s110, %s111
      %p123 = scmp.eq.s32.totalorder %s24, 1
      %p124 = por %p122, %p123
      %p126 = scmp.ne.s32.totalorder %s111, %s125
      %p127 = scmp.eq.s32.totalorder %s24, 0
      %p128 = por %p126, %p127
      %s129 = ssub.s32 %s25, %s37
      %s130 = ssub.s32 %s26, %s33
      %s131 = sor.u32 %s129, %s130
      %p132 = scmp.eq.s32.totalorder %s131, 0
      %s134 = sadd.s32 %s133, 1
      %s135 = scalar_select %p132, %s133, %s134
      %p138 = pneg %p132
      %p139 = scmp.eq.s32.totalorder %s18, 1
      %p140 = por %p138, %p139
      %p141 = scmp.ne.s32.totalorder %s133, %s136
      %p142 = scmp.eq.s32.totalorder %s18, 0
      %p143 = por %p141, %p142
      %p144 = scmp.ne.s32.totalorder %s133, %s136
      %p145 = scmp.eq.s32.totalorder %s23, 1
      %p146 = por %p144, %p145
      %p147 = scmp.ne.s32.totalorder %s136, %s137
      %p148 = scmp.eq.s32.totalorder %s23, 0
      %p149 = por %p147, %p148
      %p150 = scmp.ne.s32.totalorder %s136, %s137
      %p151 = scmp.eq.s32.totalorder %s24, 1
      %p152 = por %p150, %p151
      %p154 = scmp.ne.s32.totalorder %s137, %s153
      %p155 = scmp.eq.s32.totalorder %s24, 0
      %p156 = por %p154, %p155
      %p157 = scmp.le.s32.totalorder 1, %s18
      %p158 = scmp.lt.s32.totalorder %s18, 3
      %p159 = pnand %p157, %p158
      %p160 = pneg %p159
      // Predicated region
      $region9: #{tpu_custom_call.1} parent=5 // pred_check
        _
      $region10: #{tpu_custom_call.1} parent=5 // pred_check_branch
        %162 = sbr.rel (%p159) target = $region12
      $region11: #{tpu_custom_call.1} parent=5 // pred_region
        %s163 = ssub.s32 %s18, 1
        // Predicated region
        $region13: #{tpu_custom_call.1} parent=11 // pred_check
          %p164 = pneg %p79
        $region14: #{tpu_custom_call.1} parent=11 // pred_check_branch
          %166 = sbr.rel (%p164) target = $region16
        $region15: #{tpu_custom_call.1} parent=11 // pred_region
          %s168 = ssub.s32 2048, 2048
          %169 = vsyncadd [#allocation10], %s168
          %s170 = sshll.u32 [#allocation9], 4
          %s171 = int_to_ptr.vmem [resolvable:$true] %s170
          %176 = dma.hbm_to_vmem [thread:$0]  %s1, 2048, %s171, [#allocation10], 512, 512, 32
        $region16: #{tpu_custom_call.1} parent=11 // pred_fallthru
          _
        // Predicated region
        $region17: #{tpu_custom_call.1} parent=11 // pred_check
          %p177 = pneg %p100
        $region18: #{tpu_custom_call.1} parent=11 // pred_check_branch
          %179 = sbr.rel (%p177) target = $region20
        $region19: #{tpu_custom_call.1} parent=11 // pred_region
          %s181 = ssub.s32 8192, 8192
          %182 = vsyncadd [#allocation10], %s181
          %s183 = sshll.u32 [#allocation11], 4
          %s184 = int_to_ptr.vmem [resolvable:$true] %s183
          %189 = dma.hbm_to_vmem [thread:$0]  %s2, 8192, %s184, [#allocation10], 512, 512, 32
        $region20: #{tpu_custom_call.1} parent=11 // pred_fallthru
          _
        // Predicated region
        $region21: #{tpu_custom_call.1} parent=11 // pred_check
          %p190 = pneg %p121
        $region22: #{tpu_custom_call.1} parent=11 // pred_check_branch
          %192 = sbr.rel (%p190) target = $region24
        $region23: #{tpu_custom_call.1} parent=11 // pred_region
          %s194 = ssub.s32 64, 64
          %195 = vsyncadd [#allocation13], %s194
          %s197 = sshll.u32 [#allocation12], 4
          %s198 = int_to_ptr.vmem [resolvable:$true] %s197
          %200 = dma.hbm_to_vmem [thread:$0]  %s3, 64, %s198, [#allocation13]
        $region24: #{tpu_custom_call.1} parent=11 // pred_fallthru
          _
      $region12: #{tpu_custom_call.1} parent=5 // pred_fallthru
        _
      %p201 = scmp.lt.s32.totalorder %s18, 2
      // Predicated region
      $region25: #{tpu_custom_call.1} parent=5 // pred_check
        %p202 = pneg %p201
      $region26: #{tpu_custom_call.1} parent=5 // pred_check_branch
        %204 = sbr.rel (%p202) target = $region28
      $region27: #{tpu_custom_call.1} parent=5 // pred_region
        // Predicated region
        $region29: #{tpu_custom_call.1} parent=27 // pred_check
          %p205 = pneg %p52
        $region30: #{tpu_custom_call.1} parent=27 // pred_check_branch
          %207 = sbr.rel (%p205) target = $region32
        $region31: #{tpu_custom_call.1} parent=27 // pred_region
          %s208 = sand.u32 %s42, 1
          %s209 = scalar_lea.sflag [#allocation7], %s208
          %s210 = sand.u32 %s42, 1
          %s211 = smul.addr %s210, 16
          %s212 = scalar_lea.vmem [#allocation6], %s211
          %s213 = smul.u32 2, %s25
          %s215 = ssub.s32 256, 256
          %216 = vsyncadd %s209, %s215
          %s217 = smul.addr %s213, 2
          %s218 = sadd.s32 %s26, %s217
          %s219 = smul.addr %s218, 128
          %s220 = scalar_lea.hbm %s0, %s219
          %s221 = sshll.u32 %s212, 4
          %s222 = int_to_ptr.vmem [resolvable:$true] %s221
          %227 = dma.hbm_to_vmem [thread:$0]  %s220, 256, %s222, %s209, 256, 128, 8
        $region32: #{tpu_custom_call.1} parent=27 // pred_fallthru
          _
      $region28: #{tpu_custom_call.1} parent=5 // pred_fallthru
        _
      %p228 = scmp.le.s32.totalorder 1, %s18
      %p229 = scmp.lt.s32.totalorder %s18, 3
      %p230 = pnand %p228, %p229
      %p231 = pneg %p230
      // Predicated region
      $region33: #{tpu_custom_call.1} parent=5 // pred_check
        _
      $region34: #{tpu_custom_call.1} parent=5 // pred_check_branch
        %233 = sbr.rel (%p230) target = $region36
      $region35: #{tpu_custom_call.1} parent=5 // pred_region
        %s234 = ssub.s32 %s18, 1
        %s235 = sand.u32 %s45, 1
        %s236 = scalar_lea.sflag [#allocation7], %s235
        %s237 = sand.u32 %s45, 1
        %s238 = smul.addr %s237, 16
        %s239 = scalar_lea.vmem [#allocation6], %s238
        // Predicated region
        $region37: #{tpu_custom_call.1} parent=35 // pred_check
          %p240 = pneg %p58
        $region38: #{tpu_custom_call.1} parent=35 // pred_check_branch
          %242 = sbr.rel (%p240) target = $region40
        $region39: #{tpu_custom_call.1} parent=35 // pred_region
          %243 = dma.done %s236, 256
        $region40: #{tpu_custom_call.1} parent=35 // pred_fallthru
          _
        // Predicated region
        $region41: #{tpu_custom_call.1} parent=35 // pred_check
          %p244 = pneg %p79
        $region42: #{tpu_custom_call.1} parent=35 // pred_check_branch
          %246 = sbr.rel (%p244) target = $region44
        $region43: #{tpu_custom_call.1} parent=35 // pred_region
          %247 = dma.done [#allocation10], 2048
        $region44: #{tpu_custom_call.1} parent=35 // pred_fallthru
          _
        // Predicated region
        $region45: #{tpu_custom_call.1} parent=35 // pred_check
          %p248 = pneg %p100
        $region46: #{tpu_custom_call.1} parent=35 // pred_check_branch
          %250 = sbr.rel (%p248) target = $region48
        $region47: #{tpu_custom_call.1} parent=35 // pred_region
          %251 = dma.done [#allocation10], 8192
        $region48: #{tpu_custom_call.1} parent=35 // pred_fallthru
          _
        // Predicated region
        $region49: #{tpu_custom_call.1} parent=35 // pred_check
          %p252 = pneg %p121
        $region50: #{tpu_custom_call.1} parent=35 // pred_check_branch
          %254 = sbr.rel (%p252) target = $region52
        $region51: #{tpu_custom_call.1} parent=35 // pred_region
          %255 = dma.done [#allocation13], 64
        $region52: #{tpu_custom_call.1} parent=35 // pred_fallthru
          _
        %s256 = sand.u32 %s45, 1
        %s257 = scalar_lea.sflag [#allocation7], %s256
        %s258 = sand.u32 %s45, 1
        %s259 = smul.addr %s258, 16
        %s260 = scalar_lea.vmem [#allocation6], %s259
        %p261 = pneg %p58
        %p262 = pneg %p55
        %p263 = pneg %p79
        %p264 = pneg %p76
        %p265 = pneg %p100
        %p266 = pneg %p97
        %p267 = pneg %p121
        %p268 = pneg %p118
        %p269 = pneg %p149
        %p270 = pneg %p146
        %s271 = sand.u32 %s136, 1
        %s272 = scalar_lea.sflag [#allocation8], %s271
        %s273 = sand.u32 %s136, 1
        %s274 = smul.addr %s273, 16
        %s275 = scalar_lea.vmem [#allocation14], %s274
        %s276 = smul.u32 2, %s27
        %s277 = smul.u32 2, %s27
        %p278 = scmp.eq.s32.totalorder %s28, 0
        // Predicated region
        $region53: #{tpu_custom_call.1} parent=35 // pred_check
          %p279 = pneg %p278
        $region54: #{tpu_custom_call.1} parent=35 // pred_check_branch
          %281 = sbr.rel (%p279) target = $region56
        $region55: #{tpu_custom_call.1} parent=35 // pred_region
          %282 = vst [vmem:[#allocation4] sm:$0x3] 0.0
          %283 = vst [vmem:[#allocation5] sm:$0x3] 0.0
        $region56: #{tpu_custom_call.1} parent=35 // pred_fallthru
          _
        %v284 = vld [vmem:[%s239] sm:$0xff]
        %v285 = vld [vmem:[%s239 + $0x8] sm:$0xff]
        %v286 = vld [vmem:[#allocation9] sm:$0xff]
        %v287 = vld [vmem:[#allocation9 + $0x8] sm:$0xff]
        %v288 = vld [vmem:[#allocation9 + $0x10] sm:$0xff]
        %v289 = vld [vmem:[#allocation9 + $0x18] sm:$0xff]
        %v290 = vld [vmem:[#allocation9 + $0x20] sm:$0xff]
        %v291 = vld [vmem:[#allocation9 + $0x28] sm:$0xff]
        %v292 = vld [vmem:[#allocation9 + $0x30] sm:$0xff]
        %v293 = vld [vmem:[#allocation9 + $0x38] sm:$0xff]
        %v294 = vld [vmem:[#allocation9 + $0x40] sm:$0xff]
        %v295 = vld [vmem:[#allocation9 + $0x48] sm:$0xff]
        %v296 = vld [vmem:[#allocation9 + $0x50] sm:$0xff]
        %v297 = vld [vmem:[#allocation9 + $0x58] sm:$0xff]
        %v298 = vld [vmem:[#allocation9 + $0x60] sm:$0xff]
        %v299 = vld [vmem:[#allocation9 + $0x68] sm:$0xff]
        %v300 = vld [vmem:[#allocation9 + $0x70] sm:$0xff]
        %v301 = vld [vmem:[#allocation9 + $0x78] sm:$0xff]
        %v302 = vld [vmem:[#allocation12] sm:$0xf]
        %v304 = vlaneseq
        %v305 = vshrl.u32 %v304, 7
        %v306 = vsub.s32 0, %v305
        %v307 = vrot.slane %v302, %v306
        %v308 = vlaneseq
        %v309 = vshrl.u32 %v308, 7
        %v310 = vsub.s32 1, %v309
        %v311 = vrot.slane %v302, %v310
        %v312 = vlaneseq
        %v313 = vshrl.u32 %v312, 7
        %v314 = vsub.s32 2, %v313
        %v315 = vrot.slane %v302, %v314
        %v316 = vlaneseq
        %v317 = vshrl.u32 %v316, 7
        %v318 = vsub.s32 3, %v317
        %v319 = vrot.slane %v302, %v318
        %vm324 = vcmask 261120
        %v326 = vsel %vm324, %v284, 0
        %v329 = vsel %vm324, %v285, 0
        %331 = vmatprep.subr.mxu0 %v287
        %332 = vmatpush1.msra.mxu0 %v286
        %333 = vmatprep.subr.mxu0 %v291
        %334 = vmatpush1.msra.mxu0 %v290
        %335 = vmatprep.subr.mxu0 %v295
        %336 = vmatpush1.msra.mxu0 %v294
        %337 = vmatprep.subr.mxu0 %v299
        %338 = vmatpush1.msra.mxu0 %v298
        %339 = vmatprep.subr.mxu0 0.0
        %340 = vmatpush1.msra.mxu0 0.0
        %341 = vmatprep.subr.mxu0 0.0
        %342 = vmatpush1.msra.mxu0 0.0
        %343 = vmatprep.subr.mxu0 0.0
        %344 = vmatpush1.msra.mxu0 0.0
        %345 = vmatprep.subr.mxu0 0.0
        %346 = vmatpush1.msra.mxu0 0.0
        %347 = vmatprep.subr.mxu0 0.0
        %348 = vmatpush1.msra.mxu0 0.0
        %349 = vmatprep.subr.mxu0 0.0
        %350 = vmatpush1.msra.mxu0 0.0
        %351 = vmatprep.subr.mxu0 0.0
        %352 = vmatpush1.msra.mxu0 0.0
        %353 = vmatprep.subr.mxu0 0.0
        %354 = vmatpush1.msra.mxu0 0.0
        %355 = vmatprep.subr.mxu0 0.0
        %356 = vmatpush1.msra.mxu0 0.0
        %357 = vmatprep.subr.mxu0 0.0
        %358 = vmatpush1.msra.mxu0 0.0
        %359 = vmatprep.subr.mxu0 0.0
        %360 = vmatpush1.msra.mxu0 0.0
        %361 = vmatprep.subr.mxu0 0.0
        %362 = vmatpush1.msra.mxu0 0.0
        %363 = vmatprep.subr.mxu0 0.0
        %364 = vmatpush1.msra.mxu0 0.0
        %365 = vmatprep.subr.mxu0 0.0
        %366 = vmatpush1.msra.mxu0 0.0
        %367 = vmatprep.subr.mxu0 0.0
        %368 = vmatpush1.msra.mxu0 0.0
        %369 = vmatprep.subr.mxu0 0.0
        %370 = vmatpush1.msra.mxu0 0.0
        %371 = vmatprep.subr.mxu0 0.0
        %372 = vmatpush1.msra.mxu0 0.0
        %373 = vmatprep.subr.mxu0 0.0
        %374 = vmatpush1.msra.mxu0 0.0
        %375 = vmatprep.subr.mxu0 0.0
        %376 = vmatpush1.msra.mxu0 0.0
        %377 = vmatprep.subr.mxu0 0.0
        %378 = vmatpush1.msra.mxu0 0.0
        %379 = vmatprep.subr.mxu0 0.0
        %380 = vmatpush1.msra.mxu0 0.0
        %381 = vmatprep.subr.mxu0 0.0
        %382 = vmatpush1.msra.mxu0 0.0
        %383 = vmatprep.subr.mxu0 0.0
        %384 = vmatpush1.msra.mxu0 0.0
        %385 = vmatprep.subr.mxu0 0.0
        %386 = vmatpush1.msra.mxu0 0.0
        %387 = vmatprep.subr.mxu0 0.0
        %388 = vmatpush1.msra.mxu0 0.0
        %389 = vmatprep.subr.mxu0 0.0
        %390 = vmatpush1.msra.mxu0 0.0
        %391 = vmatprep.subr.mxu0 0.0
        %392 = vmatpush1.msra.mxu0 0.0
        %393 = vmatprep.subr.mxu0 0.0
        %394 = vmatpush1.msra.mxu0 0.0
        %395 = vmatprep.mubr.f32.mxu0 0.0
        %396 = vmatmul.mubr.f32.gmra.mrb[0].mxu0 %v326
        %v397 = vpop.f32.mrb[0].mxu0
        %v398 = vadd.f32 %v307, %v397
        %v399 = vpop.f32.mrb[0].mxu0
        %v400 = vadd.f32 %v311, %v399
        %401 = vmatprep.mubr.f32.mxu0 0.0
        %402 = vmatmul.mubr.f32.gmra.mrb[0].mxu0 %v329
        %v403 = vpop.f32.mrb[0].mxu0
        %v404 = vadd.f32 %v307, %v403
        %v405 = vpop.f32.mrb[0].mxu0
        %v406 = vadd.f32 %v311, %v405
        %407 = vdwg.mxu0
        %408 = vmatprep.subr.mxu0 %v289
        %409 = vmatpush1.msra.mxu0 %v288
        %410 = vmatprep.subr.mxu0 %v293
        %411 = vmatpush1.msra.mxu0 %v292
        %412 = vmatprep.subr.mxu0 %v297
        %413 = vmatpush1.msra.mxu0 %v296
        %414 = vmatprep.subr.mxu0 %v301
        %415 = vmatpush1.msra.mxu0 %v300
        %416 = vmatprep.subr.mxu0 0.0
        %417 = vmatpush1.msra.mxu0 0.0
        %418 = vmatprep.subr.mxu0 0.0
        %419 = vmatpush1.msra.mxu0 0.0
        %420 = vmatprep.subr.mxu0 0.0
        %421 = vmatpush1.msra.mxu0 0.0
        %422 = vmatprep.subr.mxu0 0.0
        %423 = vmatpush1.msra.mxu0 0.0
        %424 = vmatprep.subr.mxu0 0.0
        %425 = vmatpush1.msra.mxu0 0.0
        %426 = vmatprep.subr.mxu0 0.0
        %427 = vmatpush1.msra.mxu0 0.0
        %428 = vmatprep.subr.mxu0 0.0
        %429 = vmatpush1.msra.mxu0 0.0
        %430 = vmatprep.subr.mxu0 0.0
        %431 = vmatpush1.msra.mxu0 0.0
        %432 = vmatprep.subr.mxu0 0.0
        %433 = vmatpush1.msra.mxu0 0.0
        %434 = vmatprep.subr.mxu0 0.0
        %435 = vmatpush1.msra.mxu0 0.0
        %436 = vmatprep.subr.mxu0 0.0
        %437 = vmatpush1.msra.mxu0 0.0
        %438 = vmatprep.subr.mxu0 0.0
        %439 = vmatpush1.msra.mxu0 0.0
        %440 = vmatprep.subr.mxu0 0.0
        %441 = vmatpush1.msra.mxu0 0.0
        %442 = vmatprep.subr.mxu0 0.0
        %443 = vmatpush1.msra.mxu0 0.0
        %444 = vmatprep.subr.mxu0 0.0
        %445 = vmatpush1.msra.mxu0 0.0
        %446 = vmatprep.subr.mxu0 0.0
        %447 = vmatpush1.msra.mxu0 0.0
        %448 = vmatprep.subr.mxu0 0.0
        %449 = vmatpush1.msra.mxu0 0.0
        %450 = vmatprep.subr.mxu0 0.0
        %451 = vmatpush1.msra.mxu0 0.0
        %452 = vmatprep.subr.mxu0 0.0
        %453 = vmatpush1.msra.mxu0 0.0
        %454 = vmatprep.subr.mxu0 0.0
        %455 = vmatpush1.msra.mxu0 0.0
        %456 = vmatprep.subr.mxu0 0.0
        %457 = vmatpush1.msra.mxu0 0.0
        %458 = vmatprep.subr.mxu0 0.0
        %459 = vmatpush1.msra.mxu0 0.0
        %460 = vmatprep.subr.mxu0 0.0
        %461 = vmatpush1.msra.mxu0 0.0
        %462 = vmatprep.subr.mxu0 0.0
        %463 = vmatpush1.msra.mxu0 0.0
        %464 = vmatprep.subr.mxu0 0.0
        %465 = vmatpush1.msra.mxu0 0.0
        %466 = vmatprep.subr.mxu0 0.0
        %467 = vmatpush1.msra.mxu0 0.0
        %468 = vmatprep.subr.mxu0 0.0
        %469 = vmatpush1.msra.mxu0 0.0
        %470 = vmatprep.subr.mxu0 0.0
        %471 = vmatpush1.msra.mxu0 0.0
        %472 = vmatprep.mubr.f32.mxu0 0.0
        %473 = vmatmul.mubr.f32.gmra.mrb[0].mxu0 %v326
        %v474 = vpop.f32.mrb[0].mxu0
        %v475 = vadd.f32 %v315, %v474
        %v476 = vpop.f32.mrb[0].mxu0
        %v477 = vadd.f32 %v319, %v476
        %478 = vmatprep.mubr.f32.mxu0 0.0
        %479 = vmatmul.mubr.f32.gmra.mrb[0].mxu0 %v329
        %v480 = vpop.f32.mrb[0].mxu0
        %v481 = vadd.f32 %v315, %v480
        %v482 = vpop.f32.mrb[0].mxu0
        %v483 = vadd.f32 %v319, %v482
        %484 = vdwg.mxu0
        %485 = vst [vmem:[#allocation2] sm:$0xff] %v398
        %486 = vst [vmem:[#allocation2 + $0x8] sm:$0xff] %v400
        %487 = vst [vmem:[#allocation2 + $0x10] sm:$0xff] %v475
        %488 = vst [vmem:[#allocation2 + $0x18] sm:$0xff] %v477
        %489 = vst [vmem:[#allocation2 + $0x20] sm:$0xff] %v404
        %490 = vst [vmem:[#allocation2 + $0x28] sm:$0xff] %v406
        %491 = vst [vmem:[#allocation2 + $0x30] sm:$0xff] %v481
        %492 = vst [vmem:[#allocation2 + $0x38] sm:$0xff] %v483
        %v493 = vld [vmem:[#allocation11] sm:$0xff]
        %v494 = vld [vmem:[#allocation11 + $0x8] sm:$0xff]
        %v495 = vld [vmem:[#allocation11 + $0x10] sm:$0xff]
        %v496 = vld [vmem:[#allocation11 + $0x18] sm:$0xff]
        %v497 = vld [vmem:[#allocation11 + $0x20] sm:$0xff]
        %v498 = vld [vmem:[#allocation11 + $0x28] sm:$0xff]
        %v499 = vld [vmem:[#allocation11 + $0x30] sm:$0xff]
        %v500 = vld [vmem:[#allocation11 + $0x38] sm:$0xff]
        %v501 = vld [vmem:[#allocation11 + $0x40] sm:$0xff]
        %v502 = vld [vmem:[#allocation11 + $0x48] sm:$0xff]
        %v503 = vld [vmem:[#allocation11 + $0x50] sm:$0xff]
        %v504 = vld [vmem:[#allocation11 + $0x58] sm:$0xff]
        %v505 = vld [vmem:[#allocation11 + $0x60] sm:$0xff]
        %v506 = vld [vmem:[#allocation11 + $0x68] sm:$0xff]
        %v507 = vld [vmem:[#allocation11 + $0x70] sm:$0xff]
        %v508 = vld [vmem:[#allocation11 + $0x78] sm:$0xff]
        %v509 = vld [vmem:[#allocation11 + $0x80] sm:$0xff]
        %v510 = vld [vmem:[#allocation11 + $0x88] sm:$0xff]
        %v511 = vld [vmem:[#allocation11 + $0x90] sm:$0xff]
        %v512 = vld [vmem:[#allocation11 + $0x98] sm:$0xff]
        %v513 = vld [vmem:[#allocation11 + $0xa0] sm:$0xff]
        %v514 = vld [vmem:[#allocation11 + $0xa8] sm:$0xff]
        %v515 = vld [vmem:[#allocation11 + $0xb0] sm:$0xff]
        %v516 = vld [vmem:[#allocation11 + $0xb8] sm:$0xff]
        %v517 = vld [vmem:[#allocation11 + $0xc0] sm:$0xff]
        %v518 = vld [vmem:[#allocation11 + $0xc8] sm:$0xff]
        %v519 = vld [vmem:[#allocation11 + $0xd0] sm:$0xff]
        %v520 = vld [vmem:[#allocation11 + $0xd8] sm:$0xff]
        %v521 = vld [vmem:[#allocation11 + $0xe0] sm:$0xff]
        %v522 = vld [vmem:[#allocation11 + $0xe8] sm:$0xff]
        %v523 = vld [vmem:[#allocation11 + $0xf0] sm:$0xff]
        %v524 = vld [vmem:[#allocation11 + $0xf8] sm:$0xff]
        %v525 = vld [vmem:[#allocation11 + $0x100] sm:$0xff]
        %v526 = vld [vmem:[#allocation11 + $0x108] sm:$0xff]
        %v527 = vld [vmem:[#allocation11 + $0x110] sm:$0xff]
        %v528 = vld [vmem:[#allocation11 + $0x118] sm:$0xff]
        %v529 = vld [vmem:[#allocation11 + $0x120] sm:$0xff]
        %v530 = vld [vmem:[#allocation11 + $0x128] sm:$0xff]
        %v531 = vld [vmem:[#allocation11 + $0x130] sm:$0xff]
        %v532 = vld [vmem:[#allocation11 + $0x138] sm:$0xff]
        %v533 = vld [vmem:[#allocation11 + $0x140] sm:$0xff]
        %v534 = vld [vmem:[#allocation11 + $0x148] sm:$0xff]
        %v535 = vld [vmem:[#allocation11 + $0x150] sm:$0xff]
        %v536 = vld [vmem:[#allocation11 + $0x158] sm:$0xff]
        %v537 = vld [vmem:[#allocation11 + $0x160] sm:$0xff]
        %v538 = vld [vmem:[#allocation11 + $0x168] sm:$0xff]
        %v539 = vld [vmem:[#allocation11 + $0x170] sm:$0xff]
        %v540 = vld [vmem:[#allocation11 + $0x178] sm:$0xff]
        %v541 = vld [vmem:[#allocation11 + $0x180] sm:$0xff]
        %v542 = vld [vmem:[#allocation11 + $0x188] sm:$0xff]
        %v543 = vld [vmem:[#allocation11 + $0x190] sm:$0xff]
        %v544 = vld [vmem:[#allocation11 + $0x198] sm:$0xff]
        %v545 = vld [vmem:[#allocation11 + $0x1a0] sm:$0xff]
        %v546 = vld [vmem:[#allocation11 + $0x1a8] sm:$0xff]
        %v547 = vld [vmem:[#allocation11 + $0x1b0] sm:$0xff]
        %v548 = vld [vmem:[#allocation11 + $0x1b8] sm:$0xff]
        %v549 = vld [vmem:[#allocation11 + $0x1c0] sm:$0xff]
        %v550 = vld [vmem:[#allocation11 + $0x1c8] sm:$0xff]
        %v551 = vld [vmem:[#allocation11 + $0x1d0] sm:$0xff]
        %v552 = vld [vmem:[#allocation11 + $0x1d8] sm:$0xff]
        %v553 = vld [vmem:[#allocation11 + $0x1e0] sm:$0xff]
        %v554 = vld [vmem:[#allocation11 + $0x1e8] sm:$0xff]
        %v555 = vld [vmem:[#allocation11 + $0x1f0] sm:$0xff]
        %v556 = vld [vmem:[#allocation11 + $0x1f8] sm:$0xff]
        %v557 = vld [vmem:[#allocation2] ss:$8 sm:$0xf]
        %s558 = scalar_lea.vmem [#allocation2], 32
        %v559 = vld [vmem:[%s558] ss:$8 sm:$0xf]
        %v560 = vld [vmem:[#allocation4] sm:$0x3]
        %561 = vmatprep.subr.mxu0 %v494
        %562 = vmatpush1.msra.mxu0 %v493
        %563 = vmatprep.subr.mxu0 %v498
        %564 = vmatpush1.msra.mxu0 %v497
        %565 = vmatprep.subr.mxu0 %v502
        %566 = vmatpush1.msra.mxu0 %v501
        %567 = vmatprep.subr.mxu0 %v506
        %568 = vmatpush1.msra.mxu0 %v505
        %569 = vmatprep.subr.mxu0 %v510
        %570 = vmatpush1.msra.mxu0 %v509
        %571 = vmatprep.subr.mxu0 %v514
        %572 = vmatpush1.msra.mxu0 %v513
        %573 = vmatprep.subr.mxu0 %v518
        %574 = vmatpush1.msra.mxu0 %v517
        %575 = vmatprep.subr.mxu0 %v522
        %576 = vmatpush1.msra.mxu0 %v521
        %577 = vmatprep.subr.mxu0 %v526
        %578 = vmatpush1.msra.mxu0 %v525
        %579 = vmatprep.subr.mxu0 %v530
        %580 = vmatpush1.msra.mxu0 %v529
        %581 = vmatprep.subr.mxu0 %v534
        %582 = vmatpush1.msra.mxu0 %v533
        %583 = vmatprep.subr.mxu0 %v538
        %584 = vmatpush1.msra.mxu0 %v537
        %585 = vmatprep.subr.mxu0 %v542
        %586 = vmatpush1.msra.mxu0 %v541
        %587 = vmatprep.subr.mxu0 %v546
        %588 = vmatpush1.msra.mxu0 %v545
        %589 = vmatprep.subr.mxu0 %v550
        %590 = vmatpush1.msra.mxu0 %v549
        %591 = vmatprep.subr.mxu0 %v554
        %592 = vmatpush1.msra.mxu0 %v553
        %593 = vmatprep.subr.mxu0 0.0
        %594 = vmatpush1.msra.mxu0 0.0
        %595 = vmatprep.subr.mxu0 0.0
        %596 = vmatpush1.msra.mxu0 0.0
        %597 = vmatprep.subr.mxu0 0.0
        %598 = vmatpush1.msra.mxu0 0.0
        %599 = vmatprep.subr.mxu0 0.0
        %600 = vmatpush1.msra.mxu0 0.0
        %601 = vmatprep.subr.mxu0 0.0
        %602 = vmatpush1.msra.mxu0 0.0
        %603 = vmatprep.subr.mxu0 0.0
        %604 = vmatpush1.msra.mxu0 0.0
        %605 = vmatprep.subr.mxu0 0.0
        %606 = vmatpush1.msra.mxu0 0.0
        %607 = vmatprep.subr.mxu0 0.0
        %608 = vmatpush1.msra.mxu0 0.0
        %609 = vmatprep.subr.mxu0 0.0
        %610 = vmatpush1.msra.mxu0 0.0
        %611 = vmatprep.subr.mxu0 0.0
        %612 = vmatpush1.msra.mxu0 0.0
        %613 = vmatprep.subr.mxu0 0.0
        %614 = vmatpush1.msra.mxu0 0.0
        %615 = vmatprep.subr.mxu0 0.0
        %616 = vmatpush1.msra.mxu0 0.0
        %617 = vmatprep.subr.mxu0 0.0
        %618 = vmatpush1.msra.mxu0 0.0
        %619 = vmatprep.subr.mxu0 0.0
        %620 = vmatpush1.msra.mxu0 0.0
        %621 = vmatprep.subr.mxu0 0.0
        %622 = vmatpush1.msra.mxu0 0.0
        %623 = vmatprep.subr.mxu0 0.0
        %624 = vmatpush1.msra.mxu0 0.0
        %625 = vmatprep.mubr.f32.mxu0 0.0
        %626 = vmatmul.mubr.f32.gmra.mrb[0].mxu0 %v560
        %v627 = vpop.f32.mrb[0].mxu0
        %v628 = vadd.f32 0.0, %v627
        %v629 = vpop.f32.mrb[0].mxu0
        %v630 = vadd.f32 0.0, %v629
        %631 = vdwg.mxu0
        %632 = vmatprep.subr.mxu0 %v496
        %633 = vmatpush1.msra.mxu0 %v495
        %634 = vmatprep.subr.mxu0 %v500
        %635 = vmatpush1.msra.mxu0 %v499
        %636 = vmatprep.subr.mxu0 %v504
        %637 = vmatpush1.msra.mxu0 %v503
        %638 = vmatprep.subr.mxu0 %v508
        %639 = vmatpush1.msra.mxu0 %v507
        %640 = vmatprep.subr.mxu0 %v512
        %641 = vmatpush1.msra.mxu0 %v511
        %642 = vmatprep.subr.mxu0 %v516
        %643 = vmatpush1.msra.mxu0 %v515
        %644 = vmatprep.subr.mxu0 %v520
        %645 = vmatpush1.msra.mxu0 %v519
        %646 = vmatprep.subr.mxu0 %v524
        %647 = vmatpush1.msra.mxu0 %v523
        %648 = vmatprep.subr.mxu0 %v528
        %649 = vmatpush1.msra.mxu0 %v527
        %650 = vmatprep.subr.mxu0 %v532
        %651 = vmatpush1.msra.mxu0 %v531
        %652 = vmatprep.subr.mxu0 %v536
        %653 = vmatpush1.msra.mxu0 %v535
        %654 = vmatprep.subr.mxu0 %v540
        %655 = vmatpush1.msra.mxu0 %v539
        %656 = vmatprep.subr.mxu0 %v544
        %657 = vmatpush1.msra.mxu0 %v543
        %658 = vmatprep.subr.mxu0 %v548
        %659 = vmatpush1.msra.mxu0 %v547
        %660 = vmatprep.subr.mxu0 %v552
        %661 = vmatpush1.msra.mxu0 %v551
        %662 = vmatprep.subr.mxu0 %v556
        %663 = vmatpush1.msra.mxu0 %v555
        %664 = vmatprep.subr.mxu0 0.0
        %665 = vmatpush1.msra.mxu0 0.0
        %666 = vmatprep.subr.mxu0 0.0
        %667 = vmatpush1.msra.mxu0 0.0
        %668 = vmatprep.subr.mxu0 0.0
        %669 = vmatpush1.msra.mxu0 0.0
        %670 = vmatprep.subr.mxu0 0.0
        %671 = vmatpush1.msra.mxu0 0.0
        %672 = vmatprep.subr.mxu0 0.0
        %673 = vmatpush1.msra.mxu0 0.0
        %674 = vmatprep.subr.mxu0 0.0
        %675 = vmatpush1.msra.mxu0 0.0
        %676 = vmatprep.subr.mxu0 0.0
        %677 = vmatpush1.msra.mxu0 0.0
        %678 = vmatprep.subr.mxu0 0.0
        %679 = vmatpush1.msra.mxu0 0.0
        %680 = vmatprep.subr.mxu0 0.0
        %681 = vmatpush1.msra.mxu0 0.0
        %682 = vmatprep.subr.mxu0 0.0
        %683 = vmatpush1.msra.mxu0 0.0
        %684 = vmatprep.subr.mxu0 0.0
        %685 = vmatpush1.msra.mxu0 0.0
        %686 = vmatprep.subr.mxu0 0.0
        %687 = vmatpush1.msra.mxu0 0.0
        %688 = vmatprep.subr.mxu0 0.0
        %689 = vmatpush1.msra.mxu0 0.0
        %690 = vmatprep.subr.mxu0 0.0
        %691 = vmatpush1.msra.mxu0 0.0
        %692 = vmatprep.subr.mxu0 0.0
        %693 = vmatpush1.msra.mxu0 0.0
        %694 = vmatprep.subr.mxu0 0.0
        %695 = vmatpush1.msra.mxu0 0.0
        %696 = vmatprep.mubr.f32.mxu0 0.0
        %697 = vmatmul.mubr.f32.gmra.mrb[0].mxu0 %v560
        %v698 = vpop.f32.mrb[0].mxu0
        %v699 = vadd.f32 0.0, %v698
        %v700 = vpop.f32.mrb[0].mxu0
        %v701 = vadd.f32 0.0, %v700
        %702 = vdwg.mxu0
        %v707 = vcombine.low %v628, %v630
        %v708 = vcombine.low %v699, %v701
        %v710 = vunpack.c.l.s4 1966171168
        %v711 = vunpack.c.0.s8 %v710
        %v712 = vlaneseq
        %v713 = vshrl.u32 %v712, 7
        %v714 = vsub.s32 %v711, %v713
        %v715 = vrot.slane %v707, %v714
        %v717 = vunpack.c.l.s4 1966171168
        %v718 = vunpack.c.0.s8 %v717
        %v719 = vlaneseq
        %v720 = vshrl.u32 %v719, 7
        %v721 = vsub.s32 %v718, %v720
        %v722 = vrot.slane %v708, %v721
        %v723 = vcombine.low %v715, %v722
        %v724 = vcombine.high %v715, %v722
        %v726 = vunpack.c.l.s4 1966171168
        %v727 = vunpack.c.0.s8 %v726
        %v728 = vlaneseq
        %v729 = vshrl.u32 %v728, 7
        %v730 = vsub.s32 %v727, %v729
        %v731 = vrot.slane %v723, %v730
        %v733 = vunpack.c.l.s4 1966171168
        %v734 = vunpack.c.0.s8 %v733
        %v735 = vlaneseq
        %v736 = vshrl.u32 %v735, 7
        %v737 = vsub.s32 %v734, %v736
        %v738 = vrot.slane %v724, %v737
        %v741 = vadd.f32 %v557, %v731
        %v742 = vadd.f32 %v559, %v738
        %v743 = vxor.u32 %v741, 2147483648
        %v744 = vxor.u32 %v742, 2147483648
        %v745 = vmul.f32 %v743, 1.442695
        %v746 = vpow.pop %v745
        %v747 = vmul.f32 %v744, 1.442695
        %v748 = vpow.pop %v747
        %v749 = vadd.f32 %v746, 1.0
        %v750 = vadd.f32 %v748, 1.0
        %v751 = vrcp.pop %v749
        %v752 = vmul.f32 1.0, %v751
        %v753 = vrcp.pop %v750
        %v754 = vmul.f32 1.0, %v753
        %v757 = vrot.slane %v741, 1
        %v758 = vrot.slane %v742, 1
        %v761 = vxor.u32 %v757, 2147483648
        %v762 = vxor.u32 %v758, 2147483648
        %v763 = vmul.f32 %v761, 1.442695
        %v764 = vpow.pop %v763
        %v765 = vmul.f32 %v762, 1.442695
        %v766 = vpow.pop %v765
        %v767 = vadd.f32 %v764, 1.0
        %v768 = vadd.f32 %v766, 1.0
        %v769 = vrcp.pop %v767
        %v770 = vmul.f32 1.0, %v769
        %v771 = vrcp.pop %v768
        %v772 = vmul.f32 1.0, %v771
        %v773 = vrot.slane %v741, 2
        %v774 = vrot.slane %v742, 2
        %v777 = vtanh.pop %v773
        %v778 = vtanh.pop %v774
        %v779 = vrot.slane %v741, 3
        %v780 = vrot.slane %v742, 3
        %v783 = vxor.u32 %v779, 2147483648
        %v784 = vxor.u32 %v780, 2147483648
        %v785 = vmul.f32 %v783, 1.442695
        %v786 = vpow.pop %v785
        %v787 = vmul.f32 %v784, 1.442695
        %v788 = vpow.pop %v787
        %v789 = vadd.f32 %v786, 1.0
        %v790 = vadd.f32 %v788, 1.0
        %v791 = vrcp.pop %v789
        %v792 = vmul.f32 1.0, %v791
        %v793 = vrcp.pop %v790
        %v794 = vmul.f32 1.0, %v793
        %v795 = vld [vmem:[#allocation5] sm:$0x3]
        %v798 = vunpack.c.l.s4 1966171168
        %v799 = vunpack.c.0.s8 %v798
        %v800 = vlaneseq
        %v801 = vshrl.u32 %v800, 7
        %v802 = vsub.s32 %v799, %v801
        %v803 = vrot.slane %v795, %v802
        %v804 = vcombine.high %v803, %v803
        %v806 = vunpack.c.l.s4 1966171168
        %v807 = vunpack.c.0.s8 %v806
        %v808 = vlaneseq
        %v809 = vshrl.u32 %v808, 7
        %v810 = vsub.s32 %v807, %v809
        %v811 = vrot.slane %v803, %v810
        %v813 = vunpack.c.l.s4 1966171168
        %v814 = vunpack.c.0.s8 %v813
        %v815 = vlaneseq
        %v816 = vshrl.u32 %v815, 7
        %v817 = vsub.s32 %v814, %v816
        %v818 = vrot.slane %v804, %v817
        %v821 = vmul.f32 %v770, %v811
        %v822 = vmul.f32 %v772, %v818
        %v823 = vmul.f32 %v752, %v777
        %v824 = vmul.f32 %v754, %v778
        %v825 = vadd.f32 %v821, %v823
        %v826 = vadd.f32 %v822, %v824
        %v827 = vtanh.pop %v825
        %v828 = vtanh.pop %v826
        %v829 = vmul.f32 %v792, %v827
        %v830 = vmul.f32 %v794, %v828
        %v833 = vcombine.low %v825, %v826
        %v835 = vunpack.c.l.s4 1966171168
        %v836 = vunpack.c.0.s8 %v835
        %v837 = vlaneseq
        %v838 = vshrl.u32 %v837, 7
        %v839 = vsub.s32 %v836, %v838
        %v840 = vrot.slane %v833, %v839
        %v842 = vunpack.c.l.s4 1966171168
        %v843 = vunpack.c.0.s8 %v842
        %v844 = vlaneseq
        %v845 = vshrl.u32 %v844, 7
        %v846 = vsub.s32 %v843, %v845
        %v847 = vrot.slane %v840, %v846
        %849 = vst [vmem:[#allocation5] sm:$0x3] %v847
        %v852 = vcombine.low %v829, %v830
        %v854 = vunpack.c.l.s4 1966171168
        %v855 = vunpack.c.0.s8 %v854
        %v856 = vlaneseq
        %v857 = vshrl.u32 %v856, 7
        %v858 = vsub.s32 %v855, %v857
        %v859 = vrot.slane %v852, %v858
        %v861 = vunpack.c.l.s4 1966171168
        %v862 = vunpack.c.0.s8 %v861
        %v863 = vlaneseq
        %v864 = vshrl.u32 %v863, 7
        %v865 = vsub.s32 %v862, %v864
        %v866 = vrot.slane %v859, %v865
        %868 = vst [vmem:[#allocation4] sm:$0x3] %v866
        %869 = vst [vmem:[#allocation3] sm:$0x1] %v829
        %870 = vst [vmem:[#allocation3 + $0x8] sm:$0x1] %v830
        %s871 = scalar_lea.vmem [#allocation2], 1
        %v872 = vld [vmem:[%s871] ss:$8 sm:$0xf]
        %s873 = scalar_lea.vmem [#allocation2], 33
        %v874 = vld [vmem:[%s873] ss:$8 sm:$0xf]
        %v875 = vld [vmem:[#allocation4] sm:$0x3]
        %876 = vmatprep.subr.mxu0 %v494
        %877 = vmatpush1.msra.mxu0 %v493
        %878 = vmatprep.subr.mxu0 %v498
        %879 = vmatpush1.msra.mxu0 %v497
        %880 = vmatprep.subr.mxu0 %v502
        %881 = vmatpush1.msra.mxu0 %v501
        %882 = vmatprep.subr.mxu0 %v506
        %883 = vmatpush1.msra.mxu0 %v505
        %884 = vmatprep.subr.mxu0 %v510
        %885 = vmatpush1.msra.mxu0 %v509
        %886 = vmatprep.subr.mxu0 %v514
        %887 = vmatpush1.msra.mxu0 %v513
        %888 = vmatprep.subr.mxu0 %v518
        %889 = vmatpush1.msra.mxu0 %v517
        %890 = vmatprep.subr.mxu0 %v522
        %891 = vmatpush1.msra.mxu0 %v521
        %892 = vmatprep.subr.mxu0 %v526
        %893 = vmatpush1.msra.mxu0 %v525
        %894 = vmatprep.subr.mxu0 %v530
        %895 = vmatpush1.msra.mxu0 %v529
        %896 = vmatprep.subr.mxu0 %v534
        %897 = vmatpush1.msra.mxu0 %v533
        %898 = vmatprep.subr.mxu0 %v538
        %899 = vmatpush1.msra.mxu0 %v537
        %900 = vmatprep.subr.mxu0 %v542
        %901 = vmatpush1.msra.mxu0 %v541
        %902 = vmatprep.subr.mxu0 %v546
        %903 = vmatpush1.msra.mxu0 %v545
        %904 = vmatprep.subr.mxu0 %v550
        %905 = vmatpush1.msra.mxu0 %v549
        %906 = vmatprep.subr.mxu0 %v554
        %907 = vmatpush1.msra.mxu0 %v553
        %908 = vmatprep.subr.mxu0 0.0
        %909 = vmatpush1.msra.mxu0 0.0
        %910 = vmatprep.subr.mxu0 0.0
        %911 = vmatpush1.msra.mxu0 0.0
        %912 = vmatprep.subr.mxu0 0.0
        %913 = vmatpush1.msra.mxu0 0.0
        %914 = vmatprep.subr.mxu0 0.0
        %915 = vmatpush1.msra.mxu0 0.0
        %916 = vmatprep.subr.mxu0 0.0
        %917 = vmatpush1.msra.mxu0 0.0
        %918 = vmatprep.subr.mxu0 0.0
        %919 = vmatpush1.msra.mxu0 0.0
        %920 = vmatprep.subr.mxu0 0.0
        %921 = vmatpush1.msra.mxu0 0.0
        %922 = vmatprep.subr.mxu0 0.0
        %923 = vmatpush1.msra.mxu0 0.0
        %924 = vmatprep.subr.mxu0 0.0
        %925 = vmatpush1.msra.mxu0 0.0
        %926 = vmatprep.subr.mxu0 0.0
        %927 = vmatpush1.msra.mxu0 0.0
        %928 = vmatprep.subr.mxu0 0.0
        %929 = vmatpush1.msra.mxu0 0.0
        %930 = vmatprep.subr.mxu0 0.0
        %931 = vmatpush1.msra.mxu0 0.0
        %932 = vmatprep.subr.mxu0 0.0
        %933 = vmatpush1.msra.mxu0 0.0
        %934 = vmatprep.subr.mxu0 0.0
        %935 = vmatpush1.msra.mxu0 0.0
        %936 = vmatprep.subr.mxu0 0.0
        %937 = vmatpush1.msra.mxu0 0.0
        %938 = vmatprep.subr.mxu0 0.0
        %939 = vmatpush1.msra.mxu0 0.0
        %940 = vmatprep.mubr.f32.mxu0 0.0
        %941 = vmatmul.mubr.f32.gmra.mrb[0].mxu0 %v875
        %v942 = vpop.f32.mrb[0].mxu0
        %v943 = vadd.f32 0.0, %v942
        %v944 = vpop.f32.mrb[0].mxu0
        %v945 = vadd.f32 0.0, %v944
        %946 = vdwg.mxu0
        %947 = vmatprep.subr.mxu0 %v496
        %948 = vmatpush1.msra.mxu0 %v495
        %949 = vmatprep.subr.mxu0 %v500
        %950 = vmatpush1.msra.mxu0 %v499
        %951 = vmatprep.subr.mxu0 %v504
        %952 = vmatpush1.msra.mxu0 %v503
        %953 = vmatprep.subr.mxu0 %v508
        %954 = vmatpush1.msra.mxu0 %v507
        %955 = vmatprep.subr.mxu0 %v512
        %956 = vmatpush1.msra.mxu0 %v511
        %957 = vmatprep.subr.mxu0 %v516
        %958 = vmatpush1.msra.mxu0 %v515
        %959 = vmatprep.subr.mxu0 %v520
        %960 = vmatpush1.msra.mxu0 %v519
        %961 = vmatprep.subr.mxu0 %v524
        %962 = vmatpush1.msra.mxu0 %v523
        %963 = vmatprep.subr.mxu0 %v528
        %964 = vmatpush1.msra.mxu0 %v527
        %965 = vmatprep.subr.mxu0 %v532
        %966 = vmatpush1.msra.mxu0 %v531
        %967 = vmatprep.subr.mxu0 %v536
        %968 = vmatpush1.msra.mxu0 %v535
        %969 = vmatprep.subr.mxu0 %v540
        %970 = vmatpush1.msra.mxu0 %v539
        %971 = vmatprep.subr.mxu0 %v544
        %972 = vmatpush1.msra.mxu0 %v543
        %973 = vmatprep.subr.mxu0 %v548
        %974 = vmatpush1.msra.mxu0 %v547
        %975 = vmatprep.subr.mxu0 %v552
        %976 = vmatpush1.msra.mxu0 %v551
        %977 = vmatprep.subr.mxu0 %v556
        %978 = vmatpush1.msra.mxu0 %v555
        %979 = vmatprep.subr.mxu0 0.0
        %980 = vmatpush1.msra.mxu0 0.0
        %981 = vmatprep.subr.mxu0 0.0
        %982 = vmatpush1.msra.mxu0 0.0
        %983 = vmatprep.subr.mxu0 0.0
        %984 = vmatpush1.msra.mxu0 0.0
        %985 = vmatprep.subr.mxu0 0.0
        %986 = vmatpush1.msra.mxu0 0.0
        %987 = vmatprep.subr.mxu0 0.0
        %988 = vmatpush1.msra.mxu0 0.0
        %989 = vmatprep.subr.mxu0 0.0
        %990 = vmatpush1.msra.mxu0 0.0
        %991 = vmatprep.subr.mxu0 0.0
        %992 = vmatpush1.msra.mxu0 0.0
        %993 = vmatprep.subr.mxu0 0.0
        %994 = vmatpush1.msra.mxu0 0.0
        %995 = vmatprep.subr.mxu0 0.0
        %996 = vmatpush1.msra.mxu0 0.0
        %997 = vmatprep.subr.mxu0 0.0
        %998 = vmatpush1.msra.mxu0 0.0
        %999 = vmatprep.subr.mxu0 0.0
        %1000 = vmatpush1.msra.mxu0 0.0
        %1001 = vmatprep.subr.mxu0 0.0
        %1002 = vmatpush1.msra.mxu0 0.0
        %1003 = vmatprep.subr.mxu0 0.0
        %1004 = vmatpush1.msra.mxu0 0.0
        %1005 = vmatprep.subr.mxu0 0.0
        %1006 = vmatpush1.msra.mxu0 0.0
        %1007 = vmatprep.subr.mxu0 0.0
        %1008 = vmatpush1.msra.mxu0 0.0
        %1009 = vmatprep.subr.mxu0 0.0
        %1010 = vmatpush1.msra.mxu0 0.0
        %1011 = vmatprep.mubr.f32.mxu0 0.0
        %1012 = vmatmul.mubr.f32.gmra.mrb[0].mxu0 %v875
        %v1013 = vpop.f32.mrb[0].mxu0
        %v1014 = vadd.f32 0.0, %v1013
        %v1015 = vpop.f32.mrb[0].mxu0
        %v1016 = vadd.f32 0.0, %v1015
        %1017 = vdwg.mxu0
        %v1022 = vcombine.low %v943, %v945
        %v1023 = vcombine.low %v1014, %v1016
        %v1025 = vunpack.c.l.s4 1966171168
        %v1026 = vunpack.c.0.s8 %v1025
        %v1027 = vlaneseq
        %v1028 = vshrl.u32 %v1027, 7
        %v1029 = vsub.s32 %v1026, %v1028
        %v1030 = vrot.slane %v1022, %v1029
        %v1032 = vunpack.c.l.s4 1966171168
        %v1033 = vunpack.c.0.s8 %v1032
        %v1034 = vlaneseq
        %v1035 = vshrl.u32 %v1034, 7
        %v1036 = vsub.s32 %v1033, %v1035
        %v1037 = vrot.slane %v1023, %v1036
        %v1038 = vcombine.low %v1030, %v1037
        %v1039 = vcombine.high %v1030, %v1037
        %v1041 = vunpack.c.l.s4 1966171168
        %v1042 = vunpack.c.0.s8 %v1041
        %v1043 = vlaneseq
        %v1044 = vshrl.u32 %v1043, 7
        %v1045 = vsub.s32 %v1042, %v1044
        %v1046 = vrot.slane %v1038, %v1045
        %v1048 = vunpack.c.l.s4 1966171168
        %v1049 = vunpack.c.0.s8 %v1048
        %v1050 = vlaneseq
        %v1051 = vshrl.u32 %v1050, 7
        %v1052 = vsub.s32 %v1049, %v1051
        %v1053 = vrot.slane %v1039, %v1052
        %v1056 = vadd.f32 %v872, %v1046
        %v1057 = vadd.f32 %v874, %v1053
        %v1058 = vxor.u32 %v1056, 2147483648
        %v1059 = vxor.u32 %v1057, 2147483648
        %v1060 = vmul.f32 %v1058, 1.442695
        %v1061 = vpow.pop %v1060
        %v1062 = vmul.f32 %v1059, 1.442695
        %v1063 = vpow.pop %v1062
        %v1064 = vadd.f32 %v1061, 1.0
        %v1065 = vadd.f32 %v1063, 1.0
        %v1066 = vrcp.pop %v1064
        %v1067 = vmul.f32 1.0, %v1066
        %v1068 = vrcp.pop %v1065
        %v1069 = vmul.f32 1.0, %v1068
        %v1072 = vrot.slane %v1056, 1
        %v1073 = vrot.slane %v1057, 1
        %v1076 = vxor.u32 %v1072, 2147483648
        %v1077 = vxor.u32 %v1073, 2147483648
        %v1078 = vmul.f32 %v1076, 1.442695
        %v1079 = vpow.pop %v1078
        %v1080 = vmul.f32 %v1077, 1.442695
        %v1081 = vpow.pop %v1080
        %v1082 = vadd.f32 %v1079, 1.0
        %v1083 = vadd.f32 %v1081, 1.0
        %v1084 = vrcp.pop %v1082
        %v1085 = vmul.f32 1.0, %v1084
        %v1086 = vrcp.pop %v1083
        %v1087 = vmul.f32 1.0, %v1086
        %v1088 = vrot.slane %v1056, 2
        %v1089 = vrot.slane %v1057, 2
        %v1092 = vtanh.pop %v1088
        %v1093 = vtanh.pop %v1089
        %v1094 = vrot.slane %v1056, 3
        %v1095 = vrot.slane %v1057, 3
        %v1098 = vxor.u32 %v1094, 2147483648
        %v1099 = vxor.u32 %v1095, 2147483648
        %v1100 = vmul.f32 %v1098, 1.442695
        %v1101 = vpow.pop %v1100
        %v1102 = vmul.f32 %v1099, 1.442695
        %v1103 = vpow.pop %v1102
        %v1104 = vadd.f32 %v1101, 1.0
        %v1105 = vadd.f32 %v1103, 1.0
        %v1106 = vrcp.pop %v1104
        %v1107 = vmul.f32 1.0, %v1106
        %v1108 = vrcp.pop %v1105
        %v1109 = vmul.f32 1.0, %v1108
        %v1110 = vld [vmem:[#allocation5] sm:$0x3]
        %v1113 = vunpack.c.l.s4 1966171168
        %v1114 = vunpack.c.0.s8 %v1113
        %v1115 = vlaneseq
        %v1116 = vshrl.u32 %v1115, 7
        %v1117 = vsub.s32 %v1114, %v1116
        %v1118 = vrot.slane %v1110, %v1117
        %v1119 = vcombine.high %v1118, %v1118
        %v1121 = vunpack.c.l.s4 1966171168
        %v1122 = vunpack.c.0.s8 %v1121
        %v1123 = vlaneseq
        %v1124 = vshrl.u32 %v1123, 7
        %v1125 = vsub.s32 %v1122, %v1124
        %v1126 = vrot.slane %v1118, %v1125
        %v1128 = vunpack.c.l.s4 1966171168
        %v1129 = vunpack.c.0.s8 %v1128
        %v1130 = vlaneseq
        %v1131 = vshrl.u32 %v1130, 7
        %v1132 = vsub.s32 %v1129, %v1131
        %v1133 = vrot.slane %v1119, %v1132
        %v1136 = vmul.f32 %v1085, %v1126
        %v1137 = vmul.f32 %v1087, %v1133
        %v1138 = vmul.f32 %v1067, %v1092
        %v1139 = vmul.f32 %v1069, %v1093
        %v1140 = vadd.f32 %v1136, %v1138
        %v1141 = vadd.f32 %v1137, %v1139
        %v1142 = vtanh.pop %v1140
        %v1143 = vtanh.pop %v1141
        %v1144 = vmul.f32 %v1107, %v1142
        %v1145 = vmul.f32 %v1109, %v1143
        %v1148 = vcombine.low %v1140, %v1141
        %v1150 = vunpack.c.l.s4 1966171168
        %v1151 = vunpack.c.0.s8 %v1150
        %v1152 = vlaneseq
        %v1153 = vshrl.u32 %v1152, 7
        %v1154 = vsub.s32 %v1151, %v1153
        %v1155 = vrot.slane %v1148, %v1154
        %v1157 = vunpack.c.l.s4 1966171168
        %v1158 = vunpack.c.0.s8 %v1157
        %v1159 = vlaneseq
        %v1160 = vshrl.u32 %v1159, 7
        %v1161 = vsub.s32 %v1158, %v1160
        %v1162 = vrot.slane %v1155, %v1161
        %1164 = vst [vmem:[#allocation5] sm:$0x3] %v1162
        %v1167 = vcombine.low %v1144, %v1145
        %v1169 = vunpack.c.l.s4 1966171168
        %v1170 = vunpack.c.0.s8 %v1169
        %v1171 = vlaneseq
        %v1172 = vshrl.u32 %v1171, 7
        %v1173 = vsub.s32 %v1170, %v1172
        %v1174 = vrot.slane %v1167, %v1173
        %v1176 = vunpack.c.l.s4 1966171168
        %v1177 = vunpack.c.0.s8 %v1176
        %v1178 = vlaneseq
        %v1179 = vshrl.u32 %v1178, 7
        %v1180 = vsub.s32 %v1177, %v1179
        %v1181 = vrot.slane %v1174, %v1180
        %1183 = vst [vmem:[#allocation4] sm:$0x3] %v1181
        %1184 = vst [vmem:[#allocation3 + $0x1] sm:$0x1] %v1144
        %1185 = vst [vmem:[#allocation3 + $0x9] sm:$0x1] %v1145
        %s1186 = scalar_lea.vmem [#allocation2], 2
        %v1187 = vld [vmem:[%s1186] ss:$8 sm:$0xf]
        %s1188 = scalar_lea.vmem [#allocation2], 34
        %v1189 = vld [vmem:[%s1188] ss:$8 sm:$0xf]
        %v1190 = vld [vmem:[#allocation4] sm:$0x3]
        %1191 = vmatprep.subr.mxu0 %v494
        %1192 = vmatpush1.msra.mxu0 %v493
        %1193 = vmatprep.subr.mxu0 %v498
        %1194 = vmatpush1.msra.mxu0 %v497
        %1195 = vmatprep.subr.mxu0 %v502
        %1196 = vmatpush1.msra.mxu0 %v501
        %1197 = vmatprep.subr.mxu0 %v506
        %1198 = vmatpush1.msra.mxu0 %v505
        %1199 = vmatprep.subr.mxu0 %v510
        %1200 = vmatpush1.msra.mxu0 %v509
        %1201 = vmatprep.subr.mxu0 %v514
        %1202 = vmatpush1.msra.mxu0 %v513
        %1203 = vmatprep.subr.mxu0 %v518
        %1204 = vmatpush1.msra.mxu0 %v517
        %1205 = vmatprep.subr.mxu0 %v522
        %1206 = vmatpush1.msra.mxu0 %v521
        %1207 = vmatprep.subr.mxu0 %v526
        %1208 = vmatpush1.msra.mxu0 %v525
        %1209 = vmatprep.subr.mxu0 %v530
        %1210 = vmatpush1.msra.mxu0 %v529
        %1211 = vmatprep.subr.mxu0 %v534
        %1212 = vmatpush1.msra.mxu0 %v533
        %1213 = vmatprep.subr.mxu0 %v538
        %1214 = vmatpush1.msra.mxu0 %v537
        %1215 = vmatprep.subr.mxu0 %v542
        %1216 = vmatpush1.msra.mxu0 %v541
        %1217 = vmatprep.subr.mxu0 %v546
        %1218 = vmatpush1.msra.mxu0 %v545
        %1219 = vmatprep.subr.mxu0 %v550
        %1220 = vmatpush1.msra.mxu0 %v549
        %1221 = vmatprep.subr.mxu0 %v554
        %1222 = vmatpush1.msra.mxu0 %v553
        %1223 = vmatprep.subr.mxu0 0.0
        %1224 = vmatpush1.msra.mxu0 0.0
        %1225 = vmatprep.subr.mxu0 0.0
        %1226 = vmatpush1.msra.mxu0 0.0
        %1227 = vmatprep.subr.mxu0 0.0
        %1228 = vmatpush1.msra.mxu0 0.0
        %1229 = vmatprep.subr.mxu0 0.0
        %1230 = vmatpush1.msra.mxu0 0.0
        %1231 = vmatprep.subr.mxu0 0.0
        %1232 = vmatpush1.msra.mxu0 0.0
        %1233 = vmatprep.subr.mxu0 0.0
        %1234 = vmatpush1.msra.mxu0 0.0
        %1235 = vmatprep.subr.mxu0 0.0
        %1236 = vmatpush1.msra.mxu0 0.0
        %1237 = vmatprep.subr.mxu0 0.0
        %1238 = vmatpush1.msra.mxu0 0.0
        %1239 = vmatprep.subr.mxu0 0.0
        %1240 = vmatpush1.msra.mxu0 0.0
        %1241 = vmatprep.subr.mxu0 0.0
        %1242 = vmatpush1.msra.mxu0 0.0
        %1243 = vmatprep.subr.mxu0 0.0
        %1244 = vmatpush1.msra.mxu0 0.0
        %1245 = vmatprep.subr.mxu0 0.0
        %1246 = vmatpush1.msra.mxu0 0.0
        %1247 = vmatprep.subr.mxu0 0.0
        %1248 = vmatpush1.msra.mxu0 0.0
        %1249 = vmatprep.subr.mxu0 0.0
        %1250 = vmatpush1.msra.mxu0 0.0
        %1251 = vmatprep.subr.mxu0 0.0
        %1252 = vmatpush1.msra.mxu0 0.0
        %1253 = vmatprep.subr.mxu0 0.0
        %1254 = vmatpush1.msra.mxu0 0.0
        %1255 = vmatprep.mubr.f32.mxu0 0.0
        %1256 = vmatmul.mubr.f32.gmra.mrb[0].mxu0 %v1190
        %v1257 = vpop.f32.mrb[0].mxu0
        %v1258 = vadd.f32 0.0, %v1257
        %v1259 = vpop.f32.mrb[0].mxu0
        %v1260 = vadd.f32 0.0, %v1259
        %1261 = vdwg.mxu0
        %1262 = vmatprep.subr.mxu0 %v496
        %1263 = vmatpush1.msra.mxu0 %v495
        %1264 = vmatprep.subr.mxu0 %v500
        %1265 = vmatpush1.msra.mxu0 %v499
        %1266 = vmatprep.subr.mxu0 %v504
        %1267 = vmatpush1.msra.mxu0 %v503
        %1268 = vmatprep.subr.mxu0 %v508
        %1269 = vmatpush1.msra.mxu0 %v507
        %1270 = vmatprep.subr.mxu0 %v512
        %1271 = vmatpush1.msra.mxu0 %v511
        %1272 = vmatprep.subr.mxu0 %v516
        %1273 = vmatpush1.msra.mxu0 %v515
        %1274 = vmatprep.subr.mxu0 %v520
        %1275 = vmatpush1.msra.mxu0 %v519
        %1276 = vmatprep.subr.mxu0 %v524
        %1277 = vmatpush1.msra.mxu0 %v523
        %1278 = vmatprep.subr.mxu0 %v528
        %1279 = vmatpush1.msra.mxu0 %v527
        %1280 = vmatprep.subr.mxu0 %v532
        %1281 = vmatpush1.msra.mxu0 %v531
        %1282 = vmatprep.subr.mxu0 %v536
        %1283 = vmatpush1.msra.mxu0 %v535
        %1284 = vmatprep.subr.mxu0 %v540
        %1285 = vmatpush1.msra.mxu0 %v539
        %1286 = vmatprep.subr.mxu0 %v544
        %1287 = vmatpush1.msra.mxu0 %v543
        %1288 = vmatprep.subr.mxu0 %v548
        %1289 = vmatpush1.msra.mxu0 %v547
        %1290 = vmatprep.subr.mxu0 %v552
        %1291 = vmatpush1.msra.mxu0 %v551
        %1292 = vmatprep.subr.mxu0 %v556
        %1293 = vmatpush1.msra.mxu0 %v555
        %1294 = vmatprep.subr.mxu0 0.0
        %1295 = vmatpush1.msra.mxu0 0.0
        %1296 = vmatprep.subr.mxu0 0.0
        %1297 = vmatpush1.msra.mxu0 0.0
        %1298 = vmatprep.subr.mxu0 0.0
        %1299 = vmatpush1.msra.mxu0 0.0
        %1300 = vmatprep.subr.mxu0 0.0
        %1301 = vmatpush1.msra.mxu0 0.0
        %1302 = vmatprep.subr.mxu0 0.0
        %1303 = vmatpush1.msra.mxu0 0.0
        %1304 = vmatprep.subr.mxu0 0.0
        %1305 = vmatpush1.msra.mxu0 0.0
        %1306 = vmatprep.subr.mxu0 0.0
        %1307 = vmatpush1.msra.mxu0 0.0
        %1308 = vmatprep.subr.mxu0 0.0
        %1309 = vmatpush1.msra.mxu0 0.0
        %1310 = vmatprep.subr.mxu0 0.0
        %1311 = vmatpush1.msra.mxu0 0.0
        %1312 = vmatprep.subr.mxu0 0.0
        %1313 = vmatpush1.msra.mxu0 0.0
        %1314 = vmatprep.subr.mxu0 0.0
        %1315 = vmatpush1.msra.mxu0 0.0
        %1316 = vmatprep.subr.mxu0 0.0
        %1317 = vmatpush1.msra.mxu0 0.0
        %1318 = vmatprep.subr.mxu0 0.0
        %1319 = vmatpush1.msra.mxu0 0.0
        %1320 = vmatprep.subr.mxu0 0.0
        %1321 = vmatpush1.msra.mxu0 0.0
        %1322 = vmatprep.subr.mxu0 0.0
        %1323 = vmatpush1.msra.mxu0 0.0
        %1324 = vmatprep.subr.mxu0 0.0
        %1325 = vmatpush1.msra.mxu0 0.0
        %1326 = vmatprep.mubr.f32.mxu0 0.0
        %1327 = vmatmul.mubr.f32.gmra.mrb[0].mxu0 %v1190
        %v1328 = vpop.f32.mrb[0].mxu0
        %v1329 = vadd.f32 0.0, %v1328
        %v1330 = vpop.f32.mrb[0].mxu0
        %v1331 = vadd.f32 0.0, %v1330
        %1332 = vdwg.mxu0
        %v1337 = vcombine.low %v1258, %v1260
        %v1338 = vcombine.low %v1329, %v1331
        %v1340 = vunpack.c.l.s4 1966171168
        %v1341 = vunpack.c.0.s8 %v1340
        %v1342 = vlaneseq
        %v1343 = vshrl.u32 %v1342, 7
        %v1344 = vsub.s32 %v1341, %v1343
        %v1345 = vrot.slane %v1337, %v1344
        %v1347 = vunpack.c.l.s4 1966171168
        %v1348 = vunpack.c.0.s8 %v1347
        %v1349 = vlaneseq
        %v1350 = vshrl.u32 %v1349, 7
        %v1351 = vsub.s32 %v1348, %v1350
        %v1352 = vrot.slane %v1338, %v1351
        %v1353 = vcombine.low %v1345, %v1352
        %v1354 = vcombine.high %v1345, %v1352
        %v1356 = vunpack.c.l.s4 1966171168
        %v1357 = vunpack.c.0.s8 %v1356
        %v1358 = vlaneseq
        %v1359 = vshrl.u32 %v1358, 7
        %v1360 = vsub.s32 %v1357, %v1359
        %v1361 = vrot.slane %v1353, %v1360
        %v1363 = vunpack.c.l.s4 1966171168
        %v1364 = vunpack.c.0.s8 %v1363
        %v1365 = vlaneseq
        %v1366 = vshrl.u32 %v1365, 7
        %v1367 = vsub.s32 %v1364, %v1366
        %v1368 = vrot.slane %v1354, %v1367
        %v1371 = vadd.f32 %v1187, %v1361
        %v1372 = vadd.f32 %v1189, %v1368
        %v1373 = vxor.u32 %v1371, 2147483648
        %v1374 = vxor.u32 %v1372, 2147483648
        %v1375 = vmul.f32 %v1373, 1.442695
        %v1376 = vpow.pop %v1375
        %v1377 = vmul.f32 %v1374, 1.442695
        %v1378 = vpow.pop %v1377
        %v1379 = vadd.f32 %v1376, 1.0
        %v1380 = vadd.f32 %v1378, 1.0
        %v1381 = vrcp.pop %v1379
        %v1382 = vmul.f32 1.0, %v1381
        %v1383 = vrcp.pop %v1380
        %v1384 = vmul.f32 1.0, %v1383
        %v1387 = vrot.slane %v1371, 1
        %v1388 = vrot.slane %v1372, 1
        %v1391 = vxor.u32 %v1387, 2147483648
        %v1392 = vxor.u32 %v1388, 2147483648
        %v1393 = vmul.f32 %v1391, 1.442695
        %v1394 = vpow.pop %v1393
        %v1395 = vmul.f32 %v1392, 1.442695
        %v1396 = vpow.pop %v1395
        %v1397 = vadd.f32 %v1394, 1.0
        %v1398 = vadd.f32 %v1396, 1.0
        %v1399 = vrcp.pop %v1397
        %v1400 = vmul.f32 1.0, %v1399
        %v1401 = vrcp.pop %v1398
        %v1402 = vmul.f32 1.0, %v1401
        %v1403 = vrot.slane %v1371, 2
        %v1404 = vrot.slane %v1372, 2
        %v1407 = vtanh.pop %v1403
        %v1408 = vtanh.pop %v1404
        %v1409 = vrot.slane %v1371, 3
        %v1410 = vrot.slane %v1372, 3
        %v1413 = vxor.u32 %v1409, 2147483648
        %v1414 = vxor.u32 %v1410, 2147483648
        %v1415 = vmul.f32 %v1413, 1.442695
        %v1416 = vpow.pop %v1415
        %v1417 = vmul.f32 %v1414, 1.442695
        %v1418 = vpow.pop %v1417
        %v1419 = vadd.f32 %v1416, 1.0
        %v1420 = vadd.f32 %v1418, 1.0
        %v1421 = vrcp.pop %v1419
        %v1422 = vmul.f32 1.0, %v1421
        %v1423 = vrcp.pop %v1420
        %v1424 = vmul.f32 1.0, %v1423
        %v1425 = vld [vmem:[#allocation5] sm:$0x3]
        %v1428 = vunpack.c.l.s4 1966171168
        %v1429 = vunpack.c.0.s8 %v1428
        %v1430 = vlaneseq
        %v1431 = vshrl.u32 %v1430, 7
        %v1432 = vsub.s32 %v1429, %v1431
        %v1433 = vrot.slane %v1425, %v1432
        %v1434 = vcombine.high %v1433, %v1433
        %v1436 = vunpack.c.l.s4 1966171168
        %v1437 = vunpack.c.0.s8 %v1436
        %v1438 = vlaneseq
        %v1439 = vshrl.u32 %v1438, 7
        %v1440 = vsub.s32 %v1437, %v1439
        %v1441 = vrot.slane %v1433, %v1440
        %v1443 = vunpack.c.l.s4 1966171168
        %v1444 = vunpack.c.0.s8 %v1443
        %v1445 = vlaneseq
        %v1446 = vshrl.u32 %v1445, 7
        %v1447 = vsub.s32 %v1444, %v1446
        %v1448 = vrot.slane %v1434, %v1447
        %v1451 = vmul.f32 %v1400, %v1441
        %v1452 = vmul.f32 %v1402, %v1448
        %v1453 = vmul.f32 %v1382, %v1407
        %v1454 = vmul.f32 %v1384, %v1408
        %v1455 = vadd.f32 %v1451, %v1453
        %v1456 = vadd.f32 %v1452, %v1454
        %v1457 = vtanh.pop %v1455
        %v1458 = vtanh.pop %v1456
        %v1459 = vmul.f32 %v1422, %v1457
        %v1460 = vmul.f32 %v1424, %v1458
        %v1463 = vcombine.low %v1455, %v1456
        %v1465 = vunpack.c.l.s4 1966171168
        %v1466 = vunpack.c.0.s8 %v1465
        %v1467 = vlaneseq
        %v1468 = vshrl.u32 %v1467, 7
        %v1469 = vsub.s32 %v1466, %v1468
        %v1470 = vrot.slane %v1463, %v1469
        %v1472 = vunpack.c.l.s4 1966171168
        %v1473 = vunpack.c.0.s8 %v1472
        %v1474 = vlaneseq
        %v1475 = vshrl.u32 %v1474, 7
        %v1476 = vsub.s32 %v1473, %v1475
        %v1477 = vrot.slane %v1470, %v1476
        %1479 = vst [vmem:[#allocation5] sm:$0x3] %v1477
        %v1482 = vcombine.low %v1459, %v1460
        %v1484 = vunpack.c.l.s4 1966171168
        %v1485 = vunpack.c.0.s8 %v1484
        %v1486 = vlaneseq
        %v1487 = vshrl.u32 %v1486, 7
        %v1488 = vsub.s32 %v1485, %v1487
        %v1489 = vrot.slane %v1482, %v1488
        %v1491 = vunpack.c.l.s4 1966171168
        %v1492 = vunpack.c.0.s8 %v1491
        %v1493 = vlaneseq
        %v1494 = vshrl.u32 %v1493, 7
        %v1495 = vsub.s32 %v1492, %v1494
        %v1496 = vrot.slane %v1489, %v1495
        %1498 = vst [vmem:[#allocation4] sm:$0x3] %v1496
        %1499 = vst [vmem:[#allocation3 + $0x2] sm:$0x1] %v1459
        %1500 = vst [vmem:[#allocation3 + $0xa] sm:$0x1] %v1460
        %s1501 = scalar_lea.vmem [#allocation2], 3
        %v1502 = vld [vmem:[%s1501] ss:$8 sm:$0xf]
        %s1503 = scalar_lea.vmem [#allocation2], 35
        %v1504 = vld [vmem:[%s1503] ss:$8 sm:$0xf]
        %v1505 = vld [vmem:[#allocation4] sm:$0x3]
        %1506 = vmatprep.subr.mxu0 %v494
        %1507 = vmatpush1.msra.mxu0 %v493
        %1508 = vmatprep.subr.mxu0 %v498
        %1509 = vmatpush1.msra.mxu0 %v497
        %1510 = vmatprep.subr.mxu0 %v502
        %1511 = vmatpush1.msra.mxu0 %v501
        %1512 = vmatprep.subr.mxu0 %v506
        %1513 = vmatpush1.msra.mxu0 %v505
        %1514 = vmatprep.subr.mxu0 %v510
        %1515 = vmatpush1.msra.mxu0 %v509
        %1516 = vmatprep.subr.mxu0 %v514
        %1517 = vmatpush1.msra.mxu0 %v513
        %1518 = vmatprep.subr.mxu0 %v518
        %1519 = vmatpush1.msra.mxu0 %v517
        %1520 = vmatprep.subr.mxu0 %v522
        %1521 = vmatpush1.msra.mxu0 %v521
        %1522 = vmatprep.subr.mxu0 %v526
        %1523 = vmatpush1.msra.mxu0 %v525
        %1524 = vmatprep.subr.mxu0 %v530
        %1525 = vmatpush1.msra.mxu0 %v529
        %1526 = vmatprep.subr.mxu0 %v534
        %1527 = vmatpush1.msra.mxu0 %v533
        %1528 = vmatprep.subr.mxu0 %v538
        %1529 = vmatpush1.msra.mxu0 %v537
        %1530 = vmatprep.subr.mxu0 %v542
        %1531 = vmatpush1.msra.mxu0 %v541
        %1532 = vmatprep.subr.mxu0 %v546
        %1533 = vmatpush1.msra.mxu0 %v545
        %1534 = vmatprep.subr.mxu0 %v550
        %1535 = vmatpush1.msra.mxu0 %v549
        %1536 = vmatprep.subr.mxu0 %v554
        %1537 = vmatpush1.msra.mxu0 %v553
        %1538 = vmatprep.subr.mxu0 0.0
        %1539 = vmatpush1.msra.mxu0 0.0
        %1540 = vmatprep.subr.mxu0 0.0
        %1541 = vmatpush1.msra.mxu0 0.0
        %1542 = vmatprep.subr.mxu0 0.0
        %1543 = vmatpush1.msra.mxu0 0.0
        %1544 = vmatprep.subr.mxu0 0.0
        %1545 = vmatpush1.msra.mxu0 0.0
        %1546 = vmatprep.subr.mxu0 0.0
        %1547 = vmatpush1.msra.mxu0 0.0
        %1548 = vmatprep.subr.mxu0 0.0
        %1549 = vmatpush1.msra.mxu0 0.0
        %1550 = vmatprep.subr.mxu0 0.0
        %1551 = vmatpush1.msra.mxu0 0.0
        %1552 = vmatprep.subr.mxu0 0.0
        %1553 = vmatpush1.msra.mxu0 0.0
        %1554 = vmatprep.subr.mxu0 0.0
        %1555 = vmatpush1.msra.mxu0 0.0
        %1556 = vmatprep.subr.mxu0 0.0
        %1557 = vmatpush1.msra.mxu0 0.0
        %1558 = vmatprep.subr.mxu0 0.0
        %1559 = vmatpush1.msra.mxu0 0.0
        %1560 = vmatprep.subr.mxu0 0.0
        %1561 = vmatpush1.msra.mxu0 0.0
        %1562 = vmatprep.subr.mxu0 0.0
        %1563 = vmatpush1.msra.mxu0 0.0
        %1564 = vmatprep.subr.mxu0 0.0
        %1565 = vmatpush1.msra.mxu0 0.0
        %1566 = vmatprep.subr.mxu0 0.0
        %1567 = vmatpush1.msra.mxu0 0.0
        %1568 = vmatprep.subr.mxu0 0.0
        %1569 = vmatpush1.msra.mxu0 0.0
        %1570 = vmatprep.mubr.f32.mxu0 0.0
        %1571 = vmatmul.mubr.f32.gmra.mrb[0].mxu0 %v1505
        %v1572 = vpop.f32.mrb[0].mxu0
        %v1573 = vadd.f32 0.0, %v1572
        %v1574 = vpop.f32.mrb[0].mxu0
        %v1575 = vadd.f32 0.0, %v1574
        %1576 = vdwg.mxu0
        %1577 = vmatprep.subr.mxu0 %v496
        %1578 = vmatpush1.msra.mxu0 %v495
        %1579 = vmatprep.subr.mxu0 %v500
        %1580 = vmatpush1.msra.mxu0 %v499
        %1581 = vmatprep.subr.mxu0 %v504
        %1582 = vmatpush1.msra.mxu0 %v503
        %1583 = vmatprep.subr.mxu0 %v508
        %1584 = vmatpush1.msra.mxu0 %v507
        %1585 = vmatprep.subr.mxu0 %v512
        %1586 = vmatpush1.msra.mxu0 %v511
        %1587 = vmatprep.subr.mxu0 %v516
        %1588 = vmatpush1.msra.mxu0 %v515
        %1589 = vmatprep.subr.mxu0 %v520
        %1590 = vmatpush1.msra.mxu0 %v519
        %1591 = vmatprep.subr.mxu0 %v524
        %1592 = vmatpush1.msra.mxu0 %v523
        %1593 = vmatprep.subr.mxu0 %v528
        %1594 = vmatpush1.msra.mxu0 %v527
        %1595 = vmatprep.subr.mxu0 %v532
        %1596 = vmatpush1.msra.mxu0 %v531
        %1597 = vmatprep.subr.mxu0 %v536
        %1598 = vmatpush1.msra.mxu0 %v535
        %1599 = vmatprep.subr.mxu0 %v540
        %1600 = vmatpush1.msra.mxu0 %v539
        %1601 = vmatprep.subr.mxu0 %v544
        %1602 = vmatpush1.msra.mxu0 %v543
        %1603 = vmatprep.subr.mxu0 %v548
        %1604 = vmatpush1.msra.mxu0 %v547
        %1605 = vmatprep.subr.mxu0 %v552
        %1606 = vmatpush1.msra.mxu0 %v551
        %1607 = vmatprep.subr.mxu0 %v556
        %1608 = vmatpush1.msra.mxu0 %v555
        %1609 = vmatprep.subr.mxu0 0.0
        %1610 = vmatpush1.msra.mxu0 0.0
        %1611 = vmatprep.subr.mxu0 0.0
        %1612 = vmatpush1.msra.mxu0 0.0
        %1613 = vmatprep.subr.mxu0 0.0
        %1614 = vmatpush1.msra.mxu0 0.0
        %1615 = vmatprep.subr.mxu0 0.0
        %1616 = vmatpush1.msra.mxu0 0.0
        %1617 = vmatprep.subr.mxu0 0.0
        %1618 = vmatpush1.msra.mxu0 0.0
        %1619 = vmatprep.subr.mxu0 0.0
        %1620 = vmatpush1.msra.mxu0 0.0
        %1621 = vmatprep.subr.mxu0 0.0
        %1622 = vmatpush1.msra.mxu0 0.0
        %1623 = vmatprep.subr.mxu0 0.0
        %1624 = vmatpush1.msra.mxu0 0.0
        %1625 = vmatprep.subr.mxu0 0.0
        %1626 = vmatpush1.msra.mxu0 0.0
        %1627 = vmatprep.subr.mxu0 0.0
        %1628 = vmatpush1.msra.mxu0 0.0
        %1629 = vmatprep.subr.mxu0 0.0
        %1630 = vmatpush1.msra.mxu0 0.0
        %1631 = vmatprep.subr.mxu0 0.0
        %1632 = vmatpush1.msra.mxu0 0.0
        %1633 = vmatprep.subr.mxu0 0.0
        %1634 = vmatpush1.msra.mxu0 0.0
        %1635 = vmatprep.subr.mxu0 0.0
        %1636 = vmatpush1.msra.mxu0 0.0
        %1637 = vmatprep.subr.mxu0 0.0
        %1638 = vmatpush1.msra.mxu0 0.0
        %1639 = vmatprep.subr.mxu0 0.0
        %1640 = vmatpush1.msra.mxu0 0.0
        %1641 = vmatprep.mubr.f32.mxu0 0.0
        %1642 = vmatmul.mubr.f32.gmra.mrb[0].mxu0 %v1505
        %v1643 = vpop.f32.mrb[0].mxu0
        %v1644 = vadd.f32 0.0, %v1643
        %v1645 = vpop.f32.mrb[0].mxu0
        %v1646 = vadd.f32 0.0, %v1645
        %1647 = vdwg.mxu0
        %v1652 = vcombine.low %v1573, %v1575
        %v1653 = vcombine.low %v1644, %v1646
        %v1655 = vunpack.c.l.s4 1966171168
        %v1656 = vunpack.c.0.s8 %v1655
        %v1657 = vlaneseq
        %v1658 = vshrl.u32 %v1657, 7
        %v1659 = vsub.s32 %v1656, %v1658
        %v1660 = vrot.slane %v1652, %v1659
        %v1662 = vunpack.c.l.s4 1966171168
        %v1663 = vunpack.c.0.s8 %v1662
        %v1664 = vlaneseq
        %v1665 = vshrl.u32 %v1664, 7
        %v1666 = vsub.s32 %v1663, %v1665
        %v1667 = vrot.slane %v1653, %v1666
        %v1668 = vcombine.low %v1660, %v1667
        %v1669 = vcombine.high %v1660, %v1667
        %v1671 = vunpack.c.l.s4 1966171168
        %v1672 = vunpack.c.0.s8 %v1671
        %v1673 = vlaneseq
        %v1674 = vshrl.u32 %v1673, 7
        %v1675 = vsub.s32 %v1672, %v1674
        %v1676 = vrot.slane %v1668, %v1675
        %v1678 = vunpack.c.l.s4 1966171168
        %v1679 = vunpack.c.0.s8 %v1678
        %v1680 = vlaneseq
        %v1681 = vshrl.u32 %v1680, 7
        %v1682 = vsub.s32 %v1679, %v1681
        %v1683 = vrot.slane %v1669, %v1682
        %v1686 = vadd.f32 %v1502, %v1676
        %v1687 = vadd.f32 %v1504, %v1683
        %v1688 = vxor.u32 %v1686, 2147483648
        %v1689 = vxor.u32 %v1687, 2147483648
        %v1690 = vmul.f32 %v1688, 1.442695
        %v1691 = vpow.pop %v1690
        %v1692 = vmul.f32 %v1689, 1.442695
        %v1693 = vpow.pop %v1692
        %v1694 = vadd.f32 %v1691, 1.0
        %v1695 = vadd.f32 %v1693, 1.0
        %v1696 = vrcp.pop %v1694
        %v1697 = vmul.f32 1.0, %v1696
        %v1698 = vrcp.pop %v1695
        %v1699 = vmul.f32 1.0, %v1698
        %v1702 = vrot.slane %v1686, 1
        %v1703 = vrot.slane %v1687, 1
        %v1706 = vxor.u32 %v1702, 2147483648
        %v1707 = vxor.u32 %v1703, 2147483648
        %v1708 = vmul.f32 %v1706, 1.442695
        %v1709 = vpow.pop %v1708
        %v1710 = vmul.f32 %v1707, 1.442695
        %v1711 = vpow.pop %v1710
        %v1712 = vadd.f32 %v1709, 1.0
        %v1713 = vadd.f32 %v1711, 1.0
        %v1714 = vrcp.pop %v1712
        %v1715 = vmul.f32 1.0, %v1714
        %v1716 = vrcp.pop %v1713
        %v1717 = vmul.f32 1.0, %v1716
        %v1718 = vrot.slane %v1686, 2
        %v1719 = vrot.slane %v1687, 2
        %v1722 = vtanh.pop %v1718
        %v1723 = vtanh.pop %v1719
        %v1724 = vrot.slane %v1686, 3
        %v1725 = vrot.slane %v1687, 3
        %v1728 = vxor.u32 %v1724, 2147483648
        %v1729 = vxor.u32 %v1725, 2147483648
        %v1730 = vmul.f32 %v1728, 1.442695
        %v1731 = vpow.pop %v1730
        %v1732 = vmul.f32 %v1729, 1.442695
        %v1733 = vpow.pop %v1732
        %v1734 = vadd.f32 %v1731, 1.0
        %v1735 = vadd.f32 %v1733, 1.0
        %v1736 = vrcp.pop %v1734
        %v1737 = vmul.f32 1.0, %v1736
        %v1738 = vrcp.pop %v1735
        %v1739 = vmul.f32 1.0, %v1738
        %v1740 = vld [vmem:[#allocation5] sm:$0x3]
        %v1743 = vunpack.c.l.s4 1966171168
        %v1744 = vunpack.c.0.s8 %v1743
        %v1745 = vlaneseq
        %v1746 = vshrl.u32 %v1745, 7
        %v1747 = vsub.s32 %v1744, %v1746
        %v1748 = vrot.slane %v1740, %v1747
        %v1749 = vcombine.high %v1748, %v1748
        %v1751 = vunpack.c.l.s4 1966171168
        %v1752 = vunpack.c.0.s8 %v1751
        %v1753 = vlaneseq
        %v1754 = vshrl.u32 %v1753, 7
        %v1755 = vsub.s32 %v1752, %v1754
        %v1756 = vrot.slane %v1748, %v1755
        %v1758 = vunpack.c.l.s4 1966171168
        %v1759 = vunpack.c.0.s8 %v1758
        %v1760 = vlaneseq
        %v1761 = vshrl.u32 %v1760, 7
        %v1762 = vsub.s32 %v1759, %v1761
        %v1763 = vrot.slane %v1749, %v1762
        %v1766 = vmul.f32 %v1715, %v1756
        %v1767 = vmul.f32 %v1717, %v1763
        %v1768 = vmul.f32 %v1697, %v1722
        %v1769 = vmul.f32 %v1699, %v1723
        %v1770 = vadd.f32 %v1766, %v1768
        %v1771 = vadd.f32 %v1767, %v1769
        %v1772 = vtanh.pop %v1770
        %v1773 = vtanh.pop %v1771
        %v1774 = vmul.f32 %v1737, %v1772
        %v1775 = vmul.f32 %v1739, %v1773
        %v1778 = vcombine.low %v1770, %v1771
        %v1780 = vunpack.c.l.s4 1966171168
        %v1781 = vunpack.c.0.s8 %v1780
        %v1782 = vlaneseq
        %v1783 = vshrl.u32 %v1782, 7
        %v1784 = vsub.s32 %v1781, %v1783
        %v1785 = vrot.slane %v1778, %v1784
        %v1787 = vunpack.c.l.s4 1966171168
        %v1788 = vunpack.c.0.s8 %v1787
        %v1789 = vlaneseq
        %v1790 = vshrl.u32 %v1789, 7
        %v1791 = vsub.s32 %v1788, %v1790
        %v1792 = vrot.slane %v1785, %v1791
        %1794 = vst [vmem:[#allocation5] sm:$0x3] %v1792
        %v1797 = vcombine.low %v1774, %v1775
        %v1799 = vunpack.c.l.s4 1966171168
        %v1800 = vunpack.c.0.s8 %v1799
        %v1801 = vlaneseq
        %v1802 = vshrl.u32 %v1801, 7
        %v1803 = vsub.s32 %v1800, %v1802
        %v1804 = vrot.slane %v1797, %v1803
        %v1806 = vunpack.c.l.s4 1966171168
        %v1807 = vunpack.c.0.s8 %v1806
        %v1808 = vlaneseq
        %v1809 = vshrl.u32 %v1808, 7
        %v1810 = vsub.s32 %v1807, %v1809
        %v1811 = vrot.slane %v1804, %v1810
        %1813 = vst [vmem:[#allocation4] sm:$0x3] %v1811
        %1814 = vst [vmem:[#allocation3 + $0x3] sm:$0x1] %v1774
        %1815 = vst [vmem:[#allocation3 + $0xb] sm:$0x1] %v1775
        %s1816 = scalar_lea.vmem [#allocation2], 4
        %v1817 = vld [vmem:[%s1816] ss:$8 sm:$0xf]
        %s1818 = scalar_lea.vmem [#allocation2], 36
        %v1819 = vld [vmem:[%s1818] ss:$8 sm:$0xf]
        %v1820 = vld [vmem:[#allocation4] sm:$0x3]
        %1821 = vmatprep.subr.mxu0 %v494
        %1822 = vmatpush1.msra.mxu0 %v493
        %1823 = vmatprep.subr.mxu0 %v498
        %1824 = vmatpush1.msra.mxu0 %v497
        %1825 = vmatprep.subr.mxu0 %v502
        %1826 = vmatpush1.msra.mxu0 %v501
        %1827 = vmatprep.subr.mxu0 %v506
        %1828 = vmatpush1.msra.mxu0 %v505
        %1829 = vmatprep.subr.mxu0 %v510
        %1830 = vmatpush1.msra.mxu0 %v509
        %1831 = vmatprep.subr.mxu0 %v514
        %1832 = vmatpush1.msra.mxu0 %v513
        %1833 = vmatprep.subr.mxu0 %v518
        %1834 = vmatpush1.msra.mxu0 %v517
        %1835 = vmatprep.subr.mxu0 %v522
        %1836 = vmatpush1.msra.mxu0 %v521
        %1837 = vmatprep.subr.mxu0 %v526
        %1838 = vmatpush1.msra.mxu0 %v525
        %1839 = vmatprep.subr.mxu0 %v530
        %1840 = vmatpush1.msra.mxu0 %v529
        %1841 = vmatprep.subr.mxu0 %v534
        %1842 = vmatpush1.msra.mxu0 %v533
        %1843 = vmatprep.subr.mxu0 %v538
        %1844 = vmatpush1.msra.mxu0 %v537
        %1845 = vmatprep.subr.mxu0 %v542
        %1846 = vmatpush1.msra.mxu0 %v541
        %1847 = vmatprep.subr.mxu0 %v546
        %1848 = vmatpush1.msra.mxu0 %v545
        %1849 = vmatprep.subr.mxu0 %v550
        %1850 = vmatpush1.msra.mxu0 %v549
        %1851 = vmatprep.subr.mxu0 %v554
        %1852 = vmatpush1.msra.mxu0 %v553
        %1853 = vmatprep.subr.mxu0 0.0
        %1854 = vmatpush1.msra.mxu0 0.0
        %1855 = vmatprep.subr.mxu0 0.0
        %1856 = vmatpush1.msra.mxu0 0.0
        %1857 = vmatprep.subr.mxu0 0.0
        %1858 = vmatpush1.msra.mxu0 0.0
        %1859 = vmatprep.subr.mxu0 0.0
        %1860 = vmatpush1.msra.mxu0 0.0
        %1861 = vmatprep.subr.mxu0 0.0
        %1862 = vmatpush1.msra.mxu0 0.0
        %1863 = vmatprep.subr.mxu0 0.0
        %1864 = vmatpush1.msra.mxu0 0.0
        %1865 = vmatprep.subr.mxu0 0.0
        %1866 = vmatpush1.msra.mxu0 0.0
        %1867 = vmatprep.subr.mxu0 0.0
        %1868 = vmatpush1.msra.mxu0 0.0
        %1869 = vmatprep.subr.mxu0 0.0
        %1870 = vmatpush1.msra.mxu0 0.0
        %1871 = vmatprep.subr.mxu0 0.0
        %1872 = vmatpush1.msra.mxu0 0.0
        %1873 = vmatprep.subr.mxu0 0.0
        %1874 = vmatpush1.msra.mxu0 0.0
        %1875 = vmatprep.subr.mxu0 0.0
        %1876 = vmatpush1.msra.mxu0 0.0
        %1877 = vmatprep.subr.mxu0 0.0
        %1878 = vmatpush1.msra.mxu0 0.0
        %1879 = vmatprep.subr.mxu0 0.0
        %1880 = vmatpush1.msra.mxu0 0.0
        %1881 = vmatprep.subr.mxu0 0.0
        %1882 = vmatpush1.msra.mxu0 0.0
        %1883 = vmatprep.subr.mxu0 0.0
        %1884 = vmatpush1.msra.mxu0 0.0
        %1885 = vmatprep.mubr.f32.mxu0 0.0
        %1886 = vmatmul.mubr.f32.gmra.mrb[0].mxu0 %v1820
        %v1887 = vpop.f32.mrb[0].mxu0
        %v1888 = vadd.f32 0.0, %v1887
        %v1889 = vpop.f32.mrb[0].mxu0
        %v1890 = vadd.f32 0.0, %v1889
        %1891 = vdwg.mxu0
        %1892 = vmatprep.subr.mxu0 %v496
        %1893 = vmatpush1.msra.mxu0 %v495
        %1894 = vmatprep.subr.mxu0 %v500
        %1895 = vmatpush1.msra.mxu0 %v499
        %1896 = vmatprep.subr.mxu0 %v504
        %1897 = vmatpush1.msra.mxu0 %v503
        %1898 = vmatprep.subr.mxu0 %v508
        %1899 = vmatpush1.msra.mxu0 %v507
        %1900 = vmatprep.subr.mxu0 %v512
        %1901 = vmatpush1.msra.mxu0 %v511
        %1902 = vmatprep.subr.mxu0 %v516
        %1903 = vmatpush1.msra.mxu0 %v515
        %1904 = vmatprep.subr.mxu0 %v520
        %1905 = vmatpush1.msra.mxu0 %v519
        %1906 = vmatprep.subr.mxu0 %v524
        %1907 = vmatpush1.msra.mxu0 %v523
        %1908 = vmatprep.subr.mxu0 %v528
        %1909 = vmatpush1.msra.mxu0 %v527
        %1910 = vmatprep.subr.mxu0 %v532
        %1911 = vmatpush1.msra.mxu0 %v531
        %1912 = vmatprep.subr.mxu0 %v536
        %1913 = vmatpush1.msra.mxu0 %v535
        %1914 = vmatprep.subr.mxu0 %v540
        %1915 = vmatpush1.msra.mxu0 %v539
        %1916 = vmatprep.subr.mxu0 %v544
        %1917 = vmatpush1.msra.mxu0 %v543
        %1918 = vmatprep.subr.mxu0 %v548
        %1919 = vmatpush1.msra.mxu0 %v547
        %1920 = vmatprep.subr.mxu0 %v552
        %1921 = vmatpush1.msra.mxu0 %v551
        %1922 = vmatprep.subr.mxu0 %v556
        %1923 = vmatpush1.msra.mxu0 %v555
        %1924 = vmatprep.subr.mxu0 0.0
        %1925 = vmatpush1.msra.mxu0 0.0
        %1926 = vmatprep.subr.mxu0 0.0
        %1927 = vmatpush1.msra.mxu0 0.0
        %1928 = vmatprep.subr.mxu0 0.0
        %1929 = vmatpush1.msra.mxu0 0.0
        %1930 = vmatprep.subr.mxu0 0.0
        %1931 = vmatpush1.msra.mxu0 0.0
        %1932 = vmatprep.subr.mxu0 0.0
        %1933 = vmatpush1.msra.mxu0 0.0
        %1934 = vmatprep.subr.mxu0 0.0
        %1935 = vmatpush1.msra.mxu0 0.0
        %1936 = vmatprep.subr.mxu0 0.0
        %1937 = vmatpush1.msra.mxu0 0.0
        %1938 = vmatprep.subr.mxu0 0.0
        %1939 = vmatpush1.msra.mxu0 0.0
        %1940 = vmatprep.subr.mxu0 0.0
        %1941 = vmatpush1.msra.mxu0 0.0
        %1942 = vmatprep.subr.mxu0 0.0
        %1943 = vmatpush1.msra.mxu0 0.0
        %1944 = vmatprep.subr.mxu0 0.0
        %1945 = vmatpush1.msra.mxu0 0.0
        %1946 = vmatprep.subr.mxu0 0.0
        %1947 = vmatpush1.msra.mxu0 0.0
        %1948 = vmatprep.subr.mxu0 0.0
        %1949 = vmatpush1.msra.mxu0 0.0
        %1950 = vmatprep.subr.mxu0 0.0
        %1951 = vmatpush1.msra.mxu0 0.0
        %1952 = vmatprep.subr.mxu0 0.0
        %1953 = vmatpush1.msra.mxu0 0.0
        %1954 = vmatprep.subr.mxu0 0.0
        %1955 = vmatpush1.msra.mxu0 0.0
        %1956 = vmatprep.mubr.f32.mxu0 0.0
        %1957 = vmatmul.mubr.f32.gmra.mrb[0].mxu0 %v1820
        %v1958 = vpop.f32.mrb[0].mxu0
        %v1959 = vadd.f32 0.0, %v1958
        %v1960 = vpop.f32.mrb[0].mxu0
        %v1961 = vadd.f32 0.0, %v1960
        %1962 = vdwg.mxu0
        %v1967 = vcombine.low %v1888, %v1890
        %v1968 = vcombine.low %v1959, %v1961
        %v1970 = vunpack.c.l.s4 1966171168
        %v1971 = vunpack.c.0.s8 %v1970
        %v1972 = vlaneseq
        %v1973 = vshrl.u32 %v1972, 7
        %v1974 = vsub.s32 %v1971, %v1973
        %v1975 = vrot.slane %v1967, %v1974
        %v1977 = vunpack.c.l.s4 1966171168
        %v1978 = vunpack.c.0.s8 %v1977
        %v1979 = vlaneseq
        %v1980 = vshrl.u32 %v1979, 7
        %v1981 = vsub.s32 %v1978, %v1980
        %v1982 = vrot.slane %v1968, %v1981
        %v1983 = vcombine.low %v1975, %v1982
        %v1984 = vcombine.high %v1975, %v1982
        %v1986 = vunpack.c.l.s4 1966171168
        %v1987 = vunpack.c.0.s8 %v1986
        %v1988 = vlaneseq
        %v1989 = vshrl.u32 %v1988, 7
        %v1990 = vsub.s32 %v1987, %v1989
        %v1991 = vrot.slane %v1983, %v1990
        %v1993 = vunpack.c.l.s4 1966171168
        %v1994 = vunpack.c.0.s8 %v1993
        %v1995 = vlaneseq
        %v1996 = vshrl.u32 %v1995, 7
        %v1997 = vsub.s32 %v1994, %v1996
        %v1998 = vrot.slane %v1984, %v1997
        %v2001 = vadd.f32 %v1817, %v1991
        %v2002 = vadd.f32 %v1819, %v1998
        %v2003 = vxor.u32 %v2001, 2147483648
        %v2004 = vxor.u32 %v2002, 2147483648
        %v2005 = vmul.f32 %v2003, 1.442695
        %v2006 = vpow.pop %v2005
        %v2007 = vmul.f32 %v2004, 1.442695
        %v2008 = vpow.pop %v2007
        %v2009 = vadd.f32 %v2006, 1.0
        %v2010 = vadd.f32 %v2008, 1.0
        %v2011 = vrcp.pop %v2009
        %v2012 = vmul.f32 1.0, %v2011
        %v2013 = vrcp.pop %v2010
        %v2014 = vmul.f32 1.0, %v2013
        %v2017 = vrot.slane %v2001, 1
        %v2018 = vrot.slane %v2002, 1
        %v2021 = vxor.u32 %v2017, 2147483648
        %v2022 = vxor.u32 %v2018, 2147483648
        %v2023 = vmul.f32 %v2021, 1.442695
        %v2024 = vpow.pop %v2023
        %v2025 = vmul.f32 %v2022, 1.442695
        %v2026 = vpow.pop %v2025
        %v2027 = vadd.f32 %v2024, 1.0
        %v2028 = vadd.f32 %v2026, 1.0
        %v2029 = vrcp.pop %v2027
        %v2030 = vmul.f32 1.0, %v2029
        %v2031 = vrcp.pop %v2028
        %v2032 = vmul.f32 1.0, %v2031
        %v2033 = vrot.slane %v2001, 2
        %v2034 = vrot.slane %v2002, 2
        %v2037 = vtanh.pop %v2033
        %v2038 = vtanh.pop %v2034
        %v2039 = vrot.slane %v2001, 3
        %v2040 = vrot.slane %v2002, 3
        %v2043 = vxor.u32 %v2039, 2147483648
        %v2044 = vxor.u32 %v2040, 2147483648
        %v2045 = vmul.f32 %v2043, 1.442695
        %v2046 = vpow.pop %v2045
        %v2047 = vmul.f32 %v2044, 1.442695
        %v2048 = vpow.pop %v2047
        %v2049 = vadd.f32 %v2046, 1.0
        %v2050 = vadd.f32 %v2048, 1.0
        %v2051 = vrcp.pop %v2049
        %v2052 = vmul.f32 1.0, %v2051
        %v2053 = vrcp.pop %v2050
        %v2054 = vmul.f32 1.0, %v2053
        %v2055 = vld [vmem:[#allocation5] sm:$0x3]
        %v2058 = vunpack.c.l.s4 1966171168
        %v2059 = vunpack.c.0.s8 %v2058
        %v2060 = vlaneseq
        %v2061 = vshrl.u32 %v2060, 7
        %v2062 = vsub.s32 %v2059, %v2061
        %v2063 = vrot.slane %v2055, %v2062
        %v2064 = vcombine.high %v2063, %v2063
        %v2066 = vunpack.c.l.s4 1966171168
        %v2067 = vunpack.c.0.s8 %v2066
        %v2068 = vlaneseq
        %v2069 = vshrl.u32 %v2068, 7
        %v2070 = vsub.s32 %v2067, %v2069
        %v2071 = vrot.slane %v2063, %v2070
        %v2073 = vunpack.c.l.s4 1966171168
        %v2074 = vunpack.c.0.s8 %v2073
        %v2075 = vlaneseq
        %v2076 = vshrl.u32 %v2075, 7
        %v2077 = vsub.s32 %v2074, %v2076
        %v2078 = vrot.slane %v2064, %v2077
        %v2081 = vmul.f32 %v2030, %v2071
        %v2082 = vmul.f32 %v2032, %v2078
        %v2083 = vmul.f32 %v2012, %v2037
        %v2084 = vmul.f32 %v2014, %v2038
        %v2085 = vadd.f32 %v2081, %v2083
        %v2086 = vadd.f32 %v2082, %v2084
        %v2087 = vtanh.pop %v2085
        %v2088 = vtanh.pop %v2086
        %v2089 = vmul.f32 %v2052, %v2087
        %v2090 = vmul.f32 %v2054, %v2088
        %v2093 = vcombine.low %v2085, %v2086
        %v2095 = vunpack.c.l.s4 1966171168
        %v2096 = vunpack.c.0.s8 %v2095
        %v2097 = vlaneseq
        %v2098 = vshrl.u32 %v2097, 7
        %v2099 = vsub.s32 %v2096, %v2098
        %v2100 = vrot.slane %v2093, %v2099
        %v2102 = vunpack.c.l.s4 1966171168
        %v2103 = vunpack.c.0.s8 %v2102
        %v2104 = vlaneseq
        %v2105 = vshrl.u32 %v2104, 7
        %v2106 = vsub.s32 %v2103, %v2105
        %v2107 = vrot.slane %v2100, %v2106
        %2109 = vst [vmem:[#allocation5] sm:$0x3] %v2107
        %v2112 = vcombine.low %v2089, %v2090
        %v2114 = vunpack.c.l.s4 1966171168
        %v2115 = vunpack.c.0.s8 %v2114
        %v2116 = vlaneseq
        %v2117 = vshrl.u32 %v2116, 7
        %v2118 = vsub.s32 %v2115, %v2117
        %v2119 = vrot.slane %v2112, %v2118
        %v2121 = vunpack.c.l.s4 1966171168
        %v2122 = vunpack.c.0.s8 %v2121
        %v2123 = vlaneseq
        %v2124 = vshrl.u32 %v2123, 7
        %v2125 = vsub.s32 %v2122, %v2124
        %v2126 = vrot.slane %v2119, %v2125
        %2128 = vst [vmem:[#allocation4] sm:$0x3] %v2126
        %2129 = vst [vmem:[#allocation3 + $0x4] sm:$0x1] %v2089
        %2130 = vst [vmem:[#allocation3 + $0xc] sm:$0x1] %v2090
        %s2131 = scalar_lea.vmem [#allocation2], 5
        %v2132 = vld [vmem:[%s2131] ss:$8 sm:$0xf]
        %s2133 = scalar_lea.vmem [#allocation2], 37
        %v2134 = vld [vmem:[%s2133] ss:$8 sm:$0xf]
        %v2135 = vld [vmem:[#allocation4] sm:$0x3]
        %2136 = vmatprep.subr.mxu0 %v494
        %2137 = vmatpush1.msra.mxu0 %v493
        %2138 = vmatprep.subr.mxu0 %v498
        %2139 = vmatpush1.msra.mxu0 %v497
        %2140 = vmatprep.subr.mxu0 %v502
        %2141 = vmatpush1.msra.mxu0 %v501
        %2142 = vmatprep.subr.mxu0 %v506
        %2143 = vmatpush1.msra.mxu0 %v505
        %2144 = vmatprep.subr.mxu0 %v510
        %2145 = vmatpush1.msra.mxu0 %v509
        %2146 = vmatprep.subr.mxu0 %v514
        %2147 = vmatpush1.msra.mxu0 %v513
        %2148 = vmatprep.subr.mxu0 %v518
        %2149 = vmatpush1.msra.mxu0 %v517
        %2150 = vmatprep.subr.mxu0 %v522
        %2151 = vmatpush1.msra.mxu0 %v521
        %2152 = vmatprep.subr.mxu0 %v526
        %2153 = vmatpush1.msra.mxu0 %v525
        %2154 = vmatprep.subr.mxu0 %v530
        %2155 = vmatpush1.msra.mxu0 %v529
        %2156 = vmatprep.subr.mxu0 %v534
        %2157 = vmatpush1.msra.mxu0 %v533
        %2158 = vmatprep.subr.mxu0 %v538
        %2159 = vmatpush1.msra.mxu0 %v537
        %2160 = vmatprep.subr.mxu0 %v542
        %2161 = vmatpush1.msra.mxu0 %v541
        %2162 = vmatprep.subr.mxu0 %v546
        %2163 = vmatpush1.msra.mxu0 %v545
        %2164 = vmatprep.subr.mxu0 %v550
        %2165 = vmatpush1.msra.mxu0 %v549
        %2166 = vmatprep.subr.mxu0 %v554
        %2167 = vmatpush1.msra.mxu0 %v553
        %2168 = vmatprep.subr.mxu0 0.0
        %2169 = vmatpush1.msra.mxu0 0.0
        %2170 = vmatprep.subr.mxu0 0.0
        %2171 = vmatpush1.msra.mxu0 0.0
        %2172 = vmatprep.subr.mxu0 0.0
        %2173 = vmatpush1.msra.mxu0 0.0
        %2174 = vmatprep.subr.mxu0 0.0
        %2175 = vmatpush1.msra.mxu0 0.0
        %2176 = vmatprep.subr.mxu0 0.0
        %2177 = vmatpush1.msra.mxu0 0.0
        %2178 = vmatprep.subr.mxu0 0.0
        %2179 = vmatpush1.msra.mxu0 0.0
        %2180 = vmatprep.subr.mxu0 0.0
        %2181 = vmatpush1.msra.mxu0 0.0
        %2182 = vmatprep.subr.mxu0 0.0
        %2183 = vmatpush1.msra.mxu0 0.0
        %2184 = vmatprep.subr.mxu0 0.0
        %2185 = vmatpush1.msra.mxu0 0.0
        %2186 = vmatprep.subr.mxu0 0.0
        %2187 = vmatpush1.msra.mxu0 0.0
        %2188 = vmatprep.subr.mxu0 0.0
        %2189 = vmatpush1.msra.mxu0 0.0
        %2190 = vmatprep.subr.mxu0 0.0
        %2191 = vmatpush1.msra.mxu0 0.0
        %2192 = vmatprep.subr.mxu0 0.0
        %2193 = vmatpush1.msra.mxu0 0.0
        %2194 = vmatprep.subr.mxu0 0.0
        %2195 = vmatpush1.msra.mxu0 0.0
        %2196 = vmatprep.subr.mxu0 0.0
        %2197 = vmatpush1.msra.mxu0 0.0
        %2198 = vmatprep.subr.mxu0 0.0
        %2199 = vmatpush1.msra.mxu0 0.0
        %2200 = vmatprep.mubr.f32.mxu0 0.0
        %2201 = vmatmul.mubr.f32.gmra.mrb[0].mxu0 %v2135
        %v2202 = vpop.f32.mrb[0].mxu0
        %v2203 = vadd.f32 0.0, %v2202
        %v2204 = vpop.f32.mrb[0].mxu0
        %v2205 = vadd.f32 0.0, %v2204
        %2206 = vdwg.mxu0
        %2207 = vmatprep.subr.mxu0 %v496
        %2208 = vmatpush1.msra.mxu0 %v495
        %2209 = vmatprep.subr.mxu0 %v500
        %2210 = vmatpush1.msra.mxu0 %v499
        %2211 = vmatprep.subr.mxu0 %v504
        %2212 = vmatpush1.msra.mxu0 %v503
        %2213 = vmatprep.subr.mxu0 %v508
        %2214 = vmatpush1.msra.mxu0 %v507
        %2215 = vmatprep.subr.mxu0 %v512
        %2216 = vmatpush1.msra.mxu0 %v511
        %2217 = vmatprep.subr.mxu0 %v516
        %2218 = vmatpush1.msra.mxu0 %v515
        %2219 = vmatprep.subr.mxu0 %v520
        %2220 = vmatpush1.msra.mxu0 %v519
        %2221 = vmatprep.subr.mxu0 %v524
        %2222 = vmatpush1.msra.mxu0 %v523
        %2223 = vmatprep.subr.mxu0 %v528
        %2224 = vmatpush1.msra.mxu0 %v527
        %2225 = vmatprep.subr.mxu0 %v532
        %2226 = vmatpush1.msra.mxu0 %v531
        %2227 = vmatprep.subr.mxu0 %v536
        %2228 = vmatpush1.msra.mxu0 %v535
        %2229 = vmatprep.subr.mxu0 %v540
        %2230 = vmatpush1.msra.mxu0 %v539
        %2231 = vmatprep.subr.mxu0 %v544
        %2232 = vmatpush1.msra.mxu0 %v543
        %2233 = vmatprep.subr.mxu0 %v548
        %2234 = vmatpush1.msra.mxu0 %v547
        %2235 = vmatprep.subr.mxu0 %v552
        %2236 = vmatpush1.msra.mxu0 %v551
        %2237 = vmatprep.subr.mxu0 %v556
        %2238 = vmatpush1.msra.mxu0 %v555
        %2239 = vmatprep.subr.mxu0 0.0
        %2240 = vmatpush1.msra.mxu0 0.0
        %2241 = vmatprep.subr.mxu0 0.0
        %2242 = vmatpush1.msra.mxu0 0.0
        %2243 = vmatprep.subr.mxu0 0.0
        %2244 = vmatpush1.msra.mxu0 0.0
        %2245 = vmatprep.subr.mxu0 0.0
        %2246 = vmatpush1.msra.mxu0 0.0
        %2247 = vmatprep.subr.mxu0 0.0
        %2248 = vmatpush1.msra.mxu0 0.0
        %2249 = vmatprep.subr.mxu0 0.0
        %2250 = vmatpush1.msra.mxu0 0.0
        %2251 = vmatprep.subr.mxu0 0.0
        %2252 = vmatpush1.msra.mxu0 0.0
        %2253 = vmatprep.subr.mxu0 0.0
        %2254 = vmatpush1.msra.mxu0 0.0
        %2255 = vmatprep.subr.mxu0 0.0
        %2256 = vmatpush1.msra.mxu0 0.0
        %2257 = vmatprep.subr.mxu0 0.0
        %2258 = vmatpush1.msra.mxu0 0.0
        %2259 = vmatprep.subr.mxu0 0.0
        %2260 = vmatpush1.msra.mxu0 0.0
        %2261 = vmatprep.subr.mxu0 0.0
        %2262 = vmatpush1.msra.mxu0 0.0
        %2263 = vmatprep.subr.mxu0 0.0
        %2264 = vmatpush1.msra.mxu0 0.0
        %2265 = vmatprep.subr.mxu0 0.0
        %2266 = vmatpush1.msra.mxu0 0.0
        %2267 = vmatprep.subr.mxu0 0.0
        %2268 = vmatpush1.msra.mxu0 0.0
        %2269 = vmatprep.subr.mxu0 0.0
        %2270 = vmatpush1.msra.mxu0 0.0
        %2271 = vmatprep.mubr.f32.mxu0 0.0
        %2272 = vmatmul.mubr.f32.gmra.mrb[0].mxu0 %v2135
        %v2273 = vpop.f32.mrb[0].mxu0
        %v2274 = vadd.f32 0.0, %v2273
        %v2275 = vpop.f32.mrb[0].mxu0
        %v2276 = vadd.f32 0.0, %v2275
        %2277 = vdwg.mxu0
        %v2282 = vcombine.low %v2203, %v2205
        %v2283 = vcombine.low %v2274, %v2276
        %v2285 = vunpack.c.l.s4 1966171168
        %v2286 = vunpack.c.0.s8 %v2285
        %v2287 = vlaneseq
        %v2288 = vshrl.u32 %v2287, 7
        %v2289 = vsub.s32 %v2286, %v2288
        %v2290 = vrot.slane %v2282, %v2289
        %v2292 = vunpack.c.l.s4 1966171168
        %v2293 = vunpack.c.0.s8 %v2292
        %v2294 = vlaneseq
        %v2295 = vshrl.u32 %v2294, 7
        %v2296 = vsub.s32 %v2293, %v2295
        %v2297 = vrot.slane %v2283, %v2296
        %v2298 = vcombine.low %v2290, %v2297
        %v2299 = vcombine.high %v2290, %v2297
        %v2301 = vunpack.c.l.s4 1966171168
        %v2302 = vunpack.c.0.s8 %v2301
        %v2303 = vlaneseq
        %v2304 = vshrl.u32 %v2303, 7
        %v2305 = vsub.s32 %v2302, %v2304
        %v2306 = vrot.slane %v2298, %v2305
        %v2308 = vunpack.c.l.s4 1966171168
        %v2309 = vunpack.c.0.s8 %v2308
        %v2310 = vlaneseq
        %v2311 = vshrl.u32 %v2310, 7
        %v2312 = vsub.s32 %v2309, %v2311
        %v2313 = vrot.slane %v2299, %v2312
        %v2316 = vadd.f32 %v2132, %v2306
        %v2317 = vadd.f32 %v2134, %v2313
        %v2318 = vxor.u32 %v2316, 2147483648
        %v2319 = vxor.u32 %v2317, 2147483648
        %v2320 = vmul.f32 %v2318, 1.442695
        %v2321 = vpow.pop %v2320
        %v2322 = vmul.f32 %v2319, 1.442695
        %v2323 = vpow.pop %v2322
        %v2324 = vadd.f32 %v2321, 1.0
        %v2325 = vadd.f32 %v2323, 1.0
        %v2326 = vrcp.pop %v2324
        %v2327 = vmul.f32 1.0, %v2326
        %v2328 = vrcp.pop %v2325
        %v2329 = vmul.f32 1.0, %v2328
        %v2332 = vrot.slane %v2316, 1
        %v2333 = vrot.slane %v2317, 1
        %v2336 = vxor.u32 %v2332, 2147483648
        %v2337 = vxor.u32 %v2333, 2147483648
        %v2338 = vmul.f32 %v2336, 1.442695
        %v2339 = vpow.pop %v2338
        %v2340 = vmul.f32 %v2337, 1.442695
        %v2341 = vpow.pop %v2340
        %v2342 = vadd.f32 %v2339, 1.0
        %v2343 = vadd.f32 %v2341, 1.0
        %v2344 = vrcp.pop %v2342
        %v2345 = vmul.f32 1.0, %v2344
        %v2346 = vrcp.pop %v2343
        %v2347 = vmul.f32 1.0, %v2346
        %v2348 = vrot.slane %v2316, 2
        %v2349 = vrot.slane %v2317, 2
        %v2352 = vtanh.pop %v2348
        %v2353 = vtanh.pop %v2349
        %v2354 = vrot.slane %v2316, 3
        %v2355 = vrot.slane %v2317, 3
        %v2358 = vxor.u32 %v2354, 2147483648
        %v2359 = vxor.u32 %v2355, 2147483648
        %v2360 = vmul.f32 %v2358, 1.442695
        %v2361 = vpow.pop %v2360
        %v2362 = vmul.f32 %v2359, 1.442695
        %v2363 = vpow.pop %v2362
        %v2364 = vadd.f32 %v2361, 1.0
        %v2365 = vadd.f32 %v2363, 1.0
        %v2366 = vrcp.pop %v2364
        %v2367 = vmul.f32 1.0, %v2366
        %v2368 = vrcp.pop %v2365
        %v2369 = vmul.f32 1.0, %v2368
        %v2370 = vld [vmem:[#allocation5] sm:$0x3]
        %v2373 = vunpack.c.l.s4 1966171168
        %v2374 = vunpack.c.0.s8 %v2373
        %v2375 = vlaneseq
        %v2376 = vshrl.u32 %v2375, 7
        %v2377 = vsub.s32 %v2374, %v2376
        %v2378 = vrot.slane %v2370, %v2377
        %v2379 = vcombine.high %v2378, %v2378
        %v2381 = vunpack.c.l.s4 1966171168
        %v2382 = vunpack.c.0.s8 %v2381
        %v2383 = vlaneseq
        %v2384 = vshrl.u32 %v2383, 7
        %v2385 = vsub.s32 %v2382, %v2384
        %v2386 = vrot.slane %v2378, %v2385
        %v2388 = vunpack.c.l.s4 1966171168
        %v2389 = vunpack.c.0.s8 %v2388
        %v2390 = vlaneseq
        %v2391 = vshrl.u32 %v2390, 7
        %v2392 = vsub.s32 %v2389, %v2391
        %v2393 = vrot.slane %v2379, %v2392
        %v2396 = vmul.f32 %v2345, %v2386
        %v2397 = vmul.f32 %v2347, %v2393
        %v2398 = vmul.f32 %v2327, %v2352
        %v2399 = vmul.f32 %v2329, %v2353
        %v2400 = vadd.f32 %v2396, %v2398
        %v2401 = vadd.f32 %v2397, %v2399
        %v2402 = vtanh.pop %v2400
        %v2403 = vtanh.pop %v2401
        %v2404 = vmul.f32 %v2367, %v2402
        %v2405 = vmul.f32 %v2369, %v2403
        %v2408 = vcombine.low %v2400, %v2401
        %v2410 = vunpack.c.l.s4 1966171168
        %v2411 = vunpack.c.0.s8 %v2410
        %v2412 = vlaneseq
        %v2413 = vshrl.u32 %v2412, 7
        %v2414 = vsub.s32 %v2411, %v2413
        %v2415 = vrot.slane %v2408, %v2414
        %v2417 = vunpack.c.l.s4 1966171168
        %v2418 = vunpack.c.0.s8 %v2417
        %v2419 = vlaneseq
        %v2420 = vshrl.u32 %v2419, 7
        %v2421 = vsub.s32 %v2418, %v2420
        %v2422 = vrot.slane %v2415, %v2421
        %2424 = vst [vmem:[#allocation5] sm:$0x3] %v2422
        %v2427 = vcombine.low %v2404, %v2405
        %v2429 = vunpack.c.l.s4 1966171168
        %v2430 = vunpack.c.0.s8 %v2429
        %v2431 = vlaneseq
        %v2432 = vshrl.u32 %v2431, 7
        %v2433 = vsub.s32 %v2430, %v2432
        %v2434 = vrot.slane %v2427, %v2433
        %v2436 = vunpack.c.l.s4 1966171168
        %v2437 = vunpack.c.0.s8 %v2436
        %v2438 = vlaneseq
        %v2439 = vshrl.u32 %v2438, 7
        %v2440 = vsub.s32 %v2437, %v2439
        %v2441 = vrot.slane %v2434, %v2440
        %2443 = vst [vmem:[#allocation4] sm:$0x3] %v2441
        %2444 = vst [vmem:[#allocation3 + $0x5] sm:$0x1] %v2404
        %2445 = vst [vmem:[#allocation3 + $0xd] sm:$0x1] %v2405
        %s2446 = scalar_lea.vmem [#allocation2], 6
        %v2447 = vld [vmem:[%s2446] ss:$8 sm:$0xf]
        %s2448 = scalar_lea.vmem [#allocation2], 38
        %v2449 = vld [vmem:[%s2448] ss:$8 sm:$0xf]
        %v2450 = vld [vmem:[#allocation4] sm:$0x3]
        %2451 = vmatprep.subr.mxu0 %v494
        %2452 = vmatpush1.msra.mxu0 %v493
        %2453 = vmatprep.subr.mxu0 %v498
        %2454 = vmatpush1.msra.mxu0 %v497
        %2455 = vmatprep.subr.mxu0 %v502
        %2456 = vmatpush1.msra.mxu0 %v501
        %2457 = vmatprep.subr.mxu0 %v506
        %2458 = vmatpush1.msra.mxu0 %v505
        %2459 = vmatprep.subr.mxu0 %v510
        %2460 = vmatpush1.msra.mxu0 %v509
        %2461 = vmatprep.subr.mxu0 %v514
        %2462 = vmatpush1.msra.mxu0 %v513
        %2463 = vmatprep.subr.mxu0 %v518
        %2464 = vmatpush1.msra.mxu0 %v517
        %2465 = vmatprep.subr.mxu0 %v522
        %2466 = vmatpush1.msra.mxu0 %v521
        %2467 = vmatprep.subr.mxu0 %v526
        %2468 = vmatpush1.msra.mxu0 %v525
        %2469 = vmatprep.subr.mxu0 %v530
        %2470 = vmatpush1.msra.mxu0 %v529
        %2471 = vmatprep.subr.mxu0 %v534
        %2472 = vmatpush1.msra.mxu0 %v533
        %2473 = vmatprep.subr.mxu0 %v538
        %2474 = vmatpush1.msra.mxu0 %v537
        %2475 = vmatprep.subr.mxu0 %v542
        %2476 = vmatpush1.msra.mxu0 %v541
        %2477 = vmatprep.subr.mxu0 %v546
        %2478 = vmatpush1.msra.mxu0 %v545
        %2479 = vmatprep.subr.mxu0 %v550
        %2480 = vmatpush1.msra.mxu0 %v549
        %2481 = vmatprep.subr.mxu0 %v554
        %2482 = vmatpush1.msra.mxu0 %v553
        %2483 = vmatprep.subr.mxu0 0.0
        %2484 = vmatpush1.msra.mxu0 0.0
        %2485 = vmatprep.subr.mxu0 0.0
        %2486 = vmatpush1.msra.mxu0 0.0
        %2487 = vmatprep.subr.mxu0 0.0
        %2488 = vmatpush1.msra.mxu0 0.0
        %2489 = vmatprep.subr.mxu0 0.0
        %2490 = vmatpush1.msra.mxu0 0.0
        %2491 = vmatprep.subr.mxu0 0.0
        %2492 = vmatpush1.msra.mxu0 0.0
        %2493 = vmatprep.subr.mxu0 0.0
        %2494 = vmatpush1.msra.mxu0 0.0
        %2495 = vmatprep.subr.mxu0 0.0
        %2496 = vmatpush1.msra.mxu0 0.0
        %2497 = vmatprep.subr.mxu0 0.0
        %2498 = vmatpush1.msra.mxu0 0.0
        %2499 = vmatprep.subr.mxu0 0.0
        %2500 = vmatpush1.msra.mxu0 0.0
        %2501 = vmatprep.subr.mxu0 0.0
        %2502 = vmatpush1.msra.mxu0 0.0
        %2503 = vmatprep.subr.mxu0 0.0
        %2504 = vmatpush1.msra.mxu0 0.0
        %2505 = vmatprep.subr.mxu0 0.0
        %2506 = vmatpush1.msra.mxu0 0.0
        %2507 = vmatprep.subr.mxu0 0.0
        %2508 = vmatpush1.msra.mxu0 0.0
        %2509 = vmatprep.subr.mxu0 0.0
        %2510 = vmatpush1.msra.mxu0 0.0
        %2511 = vmatprep.subr.mxu0 0.0
        %2512 = vmatpush1.msra.mxu0 0.0
        %2513 = vmatprep.subr.mxu0 0.0
        %2514 = vmatpush1.msra.mxu0 0.0
        %2515 = vmatprep.mubr.f32.mxu0 0.0
        %2516 = vmatmul.mubr.f32.gmra.mrb[0].mxu0 %v2450
        %v2517 = vpop.f32.mrb[0].mxu0
        %v2518 = vadd.f32 0.0, %v2517
        %v2519 = vpop.f32.mrb[0].mxu0
        %v2520 = vadd.f32 0.0, %v2519
        %2521 = vdwg.mxu0
        %2522 = vmatprep.subr.mxu0 %v496
        %2523 = vmatpush1.msra.mxu0 %v495
        %2524 = vmatprep.subr.mxu0 %v500
        %2525 = vmatpush1.msra.mxu0 %v499
        %2526 = vmatprep.subr.mxu0 %v504
        %2527 = vmatpush1.msra.mxu0 %v503
        %2528 = vmatprep.subr.mxu0 %v508
        %2529 = vmatpush1.msra.mxu0 %v507
        %2530 = vmatprep.subr.mxu0 %v512
        %2531 = vmatpush1.msra.mxu0 %v511
        %2532 = vmatprep.subr.mxu0 %v516
        %2533 = vmatpush1.msra.mxu0 %v515
        %2534 = vmatprep.subr.mxu0 %v520
        %2535 = vmatpush1.msra.mxu0 %v519
        %2536 = vmatprep.subr.mxu0 %v524
        %2537 = vmatpush1.msra.mxu0 %v523
        %2538 = vmatprep.subr.mxu0 %v528
        %2539 = vmatpush1.msra.mxu0 %v527
        %2540 = vmatprep.subr.mxu0 %v532
        %2541 = vmatpush1.msra.mxu0 %v531
        %2542 = vmatprep.subr.mxu0 %v536
        %2543 = vmatpush1.msra.mxu0 %v535
        %2544 = vmatprep.subr.mxu0 %v540
        %2545 = vmatpush1.msra.mxu0 %v539
        %2546 = vmatprep.subr.mxu0 %v544
        %2547 = vmatpush1.msra.mxu0 %v543
        %2548 = vmatprep.subr.mxu0 %v548
        %2549 = vmatpush1.msra.mxu0 %v547
        %2550 = vmatprep.subr.mxu0 %v552
        %2551 = vmatpush1.msra.mxu0 %v551
        %2552 = vmatprep.subr.mxu0 %v556
        %2553 = vmatpush1.msra.mxu0 %v555
        %2554 = vmatprep.subr.mxu0 0.0
        %2555 = vmatpush1.msra.mxu0 0.0
        %2556 = vmatprep.subr.mxu0 0.0
        %2557 = vmatpush1.msra.mxu0 0.0
        %2558 = vmatprep.subr.mxu0 0.0
        %2559 = vmatpush1.msra.mxu0 0.0
        %2560 = vmatprep.subr.mxu0 0.0
        %2561 = vmatpush1.msra.mxu0 0.0
        %2562 = vmatprep.subr.mxu0 0.0
        %2563 = vmatpush1.msra.mxu0 0.0
        %2564 = vmatprep.subr.mxu0 0.0
        %2565 = vmatpush1.msra.mxu0 0.0
        %2566 = vmatprep.subr.mxu0 0.0
        %2567 = vmatpush1.msra.mxu0 0.0
        %2568 = vmatprep.subr.mxu0 0.0
        %2569 = vmatpush1.msra.mxu0 0.0
        %2570 = vmatprep.subr.mxu0 0.0
        %2571 = vmatpush1.msra.mxu0 0.0
        %2572 = vmatprep.subr.mxu0 0.0
        %2573 = vmatpush1.msra.mxu0 0.0
        %2574 = vmatprep.subr.mxu0 0.0
        %2575 = vmatpush1.msra.mxu0 0.0
        %2576 = vmatprep.subr.mxu0 0.0
        %2577 = vmatpush1.msra.mxu0 0.0
        %2578 = vmatprep.subr.mxu0 0.0
        %2579 = vmatpush1.msra.mxu0 0.0
        %2580 = vmatprep.subr.mxu0 0.0
        %2581 = vmatpush1.msra.mxu0 0.0
        %2582 = vmatprep.subr.mxu0 0.0
        %2583 = vmatpush1.msra.mxu0 0.0
        %2584 = vmatprep.subr.mxu0 0.0
        %2585 = vmatpush1.msra.mxu0 0.0
        %2586 = vmatprep.mubr.f32.mxu0 0.0
        %2587 = vmatmul.mubr.f32.gmra.mrb[0].mxu0 %v2450
        %v2588 = vpop.f32.mrb[0].mxu0
        %v2589 = vadd.f32 0.0, %v2588
        %v2590 = vpop.f32.mrb[0].mxu0
        %v2591 = vadd.f32 0.0, %v2590
        %2592 = vdwg.mxu0
        %v2597 = vcombine.low %v2518, %v2520
        %v2598 = vcombine.low %v2589, %v2591
        %v2600 = vunpack.c.l.s4 1966171168
        %v2601 = vunpack.c.0.s8 %v2600
        %v2602 = vlaneseq
        %v2603 = vshrl.u32 %v2602, 7
        %v2604 = vsub.s32 %v2601, %v2603
        %v2605 = vrot.slane %v2597, %v2604
        %v2607 = vunpack.c.l.s4 1966171168
        %v2608 = vunpack.c.0.s8 %v2607
        %v2609 = vlaneseq
        %v2610 = vshrl.u32 %v2609, 7
        %v2611 = vsub.s32 %v2608, %v2610
        %v2612 = vrot.slane %v2598, %v2611
        %v2613 = vcombine.low %v2605, %v2612
        %v2614 = vcombine.high %v2605, %v2612
        %v2616 = vunpack.c.l.s4 1966171168
        %v2617 = vunpack.c.0.s8 %v2616
        %v2618 = vlaneseq
        %v2619 = vshrl.u32 %v2618, 7
        %v2620 = vsub.s32 %v2617, %v2619
        %v2621 = vrot.slane %v2613, %v2620
        %v2623 = vunpack.c.l.s4 1966171168
        %v2624 = vunpack.c.0.s8 %v2623
        %v2625 = vlaneseq
        %v2626 = vshrl.u32 %v2625, 7
        %v2627 = vsub.s32 %v2624, %v2626
        %v2628 = vrot.slane %v2614, %v2627
        %v2631 = vadd.f32 %v2447, %v2621
        %v2632 = vadd.f32 %v2449, %v2628
        %v2633 = vxor.u32 %v2631, 2147483648
        %v2634 = vxor.u32 %v2632, 2147483648
        %v2635 = vmul.f32 %v2633, 1.442695
        %v2636 = vpow.pop %v2635
        %v2637 = vmul.f32 %v2634, 1.442695
        %v2638 = vpow.pop %v2637
        %v2639 = vadd.f32 %v2636, 1.0
        %v2640 = vadd.f32 %v2638, 1.0
        %v2641 = vrcp.pop %v2639
        %v2642 = vmul.f32 1.0, %v2641
        %v2643 = vrcp.pop %v2640
        %v2644 = vmul.f32 1.0, %v2643
        %v2647 = vrot.slane %v2631, 1
        %v2648 = vrot.slane %v2632, 1
        %v2651 = vxor.u32 %v2647, 2147483648
        %v2652 = vxor.u32 %v2648, 2147483648
        %v2653 = vmul.f32 %v2651, 1.442695
        %v2654 = vpow.pop %v2653
        %v2655 = vmul.f32 %v2652, 1.442695
        %v2656 = vpow.pop %v2655
        %v2657 = vadd.f32 %v2654, 1.0
        %v2658 = vadd.f32 %v2656, 1.0
        %v2659 = vrcp.pop %v2657
        %v2660 = vmul.f32 1.0, %v2659
        %v2661 = vrcp.pop %v2658
        %v2662 = vmul.f32 1.0, %v2661
        %v2663 = vrot.slane %v2631, 2
        %v2664 = vrot.slane %v2632, 2
        %v2667 = vtanh.pop %v2663
        %v2668 = vtanh.pop %v2664
        %v2669 = vrot.slane %v2631, 3
        %v2670 = vrot.slane %v2632, 3
        %v2673 = vxor.u32 %v2669, 2147483648
        %v2674 = vxor.u32 %v2670, 2147483648
        %v2675 = vmul.f32 %v2673, 1.442695
        %v2676 = vpow.pop %v2675
        %v2677 = vmul.f32 %v2674, 1.442695
        %v2678 = vpow.pop %v2677
        %v2679 = vadd.f32 %v2676, 1.0
        %v2680 = vadd.f32 %v2678, 1.0
        %v2681 = vrcp.pop %v2679
        %v2682 = vmul.f32 1.0, %v2681
        %v2683 = vrcp.pop %v2680
        %v2684 = vmul.f32 1.0, %v2683
        %v2685 = vld [vmem:[#allocation5] sm:$0x3]
        %v2688 = vunpack.c.l.s4 1966171168
        %v2689 = vunpack.c.0.s8 %v2688
        %v2690 = vlaneseq
        %v2691 = vshrl.u32 %v2690, 7
        %v2692 = vsub.s32 %v2689, %v2691
        %v2693 = vrot.slane %v2685, %v2692
        %v2694 = vcombine.high %v2693, %v2693
        %v2696 = vunpack.c.l.s4 1966171168
        %v2697 = vunpack.c.0.s8 %v2696
        %v2698 = vlaneseq
        %v2699 = vshrl.u32 %v2698, 7
        %v2700 = vsub.s32 %v2697, %v2699
        %v2701 = vrot.slane %v2693, %v2700
        %v2703 = vunpack.c.l.s4 1966171168
        %v2704 = vunpack.c.0.s8 %v2703
        %v2705 = vlaneseq
        %v2706 = vshrl.u32 %v2705, 7
        %v2707 = vsub.s32 %v2704, %v2706
        %v2708 = vrot.slane %v2694, %v2707
        %v2711 = vmul.f32 %v2660, %v2701
        %v2712 = vmul.f32 %v2662, %v2708
        %v2713 = vmul.f32 %v2642, %v2667
        %v2714 = vmul.f32 %v2644, %v2668
        %v2715 = vadd.f32 %v2711, %v2713
        %v2716 = vadd.f32 %v2712, %v2714
        %v2717 = vtanh.pop %v2715
        %v2718 = vtanh.pop %v2716
        %v2719 = vmul.f32 %v2682, %v2717
        %v2720 = vmul.f32 %v2684, %v2718
        %v2723 = vcombine.low %v2715, %v2716
        %v2725 = vunpack.c.l.s4 1966171168
        %v2726 = vunpack.c.0.s8 %v2725
        %v2727 = vlaneseq
        %v2728 = vshrl.u32 %v2727, 7
        %v2729 = vsub.s32 %v2726, %v2728
        %v2730 = vrot.slane %v2723, %v2729
        %v2732 = vunpack.c.l.s4 1966171168
        %v2733 = vunpack.c.0.s8 %v2732
        %v2734 = vlaneseq
        %v2735 = vshrl.u32 %v2734, 7
        %v2736 = vsub.s32 %v2733, %v2735
        %v2737 = vrot.slane %v2730, %v2736
        %2739 = vst [vmem:[#allocation5] sm:$0x3] %v2737
        %v2742 = vcombine.low %v2719, %v2720
        %v2744 = vunpack.c.l.s4 1966171168
        %v2745 = vunpack.c.0.s8 %v2744
        %v2746 = vlaneseq
        %v2747 = vshrl.u32 %v2746, 7
        %v2748 = vsub.s32 %v2745, %v2747
        %v2749 = vrot.slane %v2742, %v2748
        %v2751 = vunpack.c.l.s4 1966171168
        %v2752 = vunpack.c.0.s8 %v2751
        %v2753 = vlaneseq
        %v2754 = vshrl.u32 %v2753, 7
        %v2755 = vsub.s32 %v2752, %v2754
        %v2756 = vrot.slane %v2749, %v2755
        %2758 = vst [vmem:[#allocation4] sm:$0x3] %v2756
        %2759 = vst [vmem:[#allocation3 + $0x6] sm:$0x1] %v2719
        %2760 = vst [vmem:[#allocation3 + $0xe] sm:$0x1] %v2720
        %s2761 = scalar_lea.vmem [#allocation2], 7
        %v2762 = vld [vmem:[%s2761] ss:$8 sm:$0xf]
        %s2763 = scalar_lea.vmem [#allocation2], 39
        %v2764 = vld [vmem:[%s2763] ss:$8 sm:$0xf]
        %v2765 = vld [vmem:[#allocation4] sm:$0x3]
        %2766 = vmatprep.subr.mxu0 %v494
        %2767 = vmatpush1.msra.mxu0 %v493
        %2768 = vmatprep.subr.mxu0 %v498
        %2769 = vmatpush1.msra.mxu0 %v497
        %2770 = vmatprep.subr.mxu0 %v502
        %2771 = vmatpush1.msra.mxu0 %v501
        %2772 = vmatprep.subr.mxu0 %v506
        %2773 = vmatpush1.msra.mxu0 %v505
        %2774 = vmatprep.subr.mxu0 %v510
        %2775 = vmatpush1.msra.mxu0 %v509
        %2776 = vmatprep.subr.mxu0 %v514
        %2777 = vmatpush1.msra.mxu0 %v513
        %2778 = vmatprep.subr.mxu0 %v518
        %2779 = vmatpush1.msra.mxu0 %v517
        %2780 = vmatprep.subr.mxu0 %v522
        %2781 = vmatpush1.msra.mxu0 %v521
        %2782 = vmatprep.subr.mxu0 %v526
        %2783 = vmatpush1.msra.mxu0 %v525
        %2784 = vmatprep.subr.mxu0 %v530
        %2785 = vmatpush1.msra.mxu0 %v529
        %2786 = vmatprep.subr.mxu0 %v534
        %2787 = vmatpush1.msra.mxu0 %v533
        %2788 = vmatprep.subr.mxu0 %v538
        %2789 = vmatpush1.msra.mxu0 %v537
        %2790 = vmatprep.subr.mxu0 %v542
        %2791 = vmatpush1.msra.mxu0 %v541
        %2792 = vmatprep.subr.mxu0 %v546
        %2793 = vmatpush1.msra.mxu0 %v545
        %2794 = vmatprep.subr.mxu0 %v550
        %2795 = vmatpush1.msra.mxu0 %v549
        %2796 = vmatprep.subr.mxu0 %v554
        %2797 = vmatpush1.msra.mxu0 %v553
        %2798 = vmatprep.subr.mxu0 0.0
        %2799 = vmatpush1.msra.mxu0 0.0
        %2800 = vmatprep.subr.mxu0 0.0
        %2801 = vmatpush1.msra.mxu0 0.0
        %2802 = vmatprep.subr.mxu0 0.0
        %2803 = vmatpush1.msra.mxu0 0.0
        %2804 = vmatprep.subr.mxu0 0.0
        %2805 = vmatpush1.msra.mxu0 0.0
        %2806 = vmatprep.subr.mxu0 0.0
        %2807 = vmatpush1.msra.mxu0 0.0
        %2808 = vmatprep.subr.mxu0 0.0
        %2809 = vmatpush1.msra.mxu0 0.0
        %2810 = vmatprep.subr.mxu0 0.0
        %2811 = vmatpush1.msra.mxu0 0.0
        %2812 = vmatprep.subr.mxu0 0.0
        %2813 = vmatpush1.msra.mxu0 0.0
        %2814 = vmatprep.subr.mxu0 0.0
        %2815 = vmatpush1.msra.mxu0 0.0
        %2816 = vmatprep.subr.mxu0 0.0
        %2817 = vmatpush1.msra.mxu0 0.0
        %2818 = vmatprep.subr.mxu0 0.0
        %2819 = vmatpush1.msra.mxu0 0.0
        %2820 = vmatprep.subr.mxu0 0.0
        %2821 = vmatpush1.msra.mxu0 0.0
        %2822 = vmatprep.subr.mxu0 0.0
        %2823 = vmatpush1.msra.mxu0 0.0
        %2824 = vmatprep.subr.mxu0 0.0
        %2825 = vmatpush1.msra.mxu0 0.0
        %2826 = vmatprep.subr.mxu0 0.0
        %2827 = vmatpush1.msra.mxu0 0.0
        %2828 = vmatprep.subr.mxu0 0.0
        %2829 = vmatpush1.msra.mxu0 0.0
        %2830 = vmatprep.mubr.f32.mxu0 0.0
        %2831 = vmatmul.mubr.f32.gmra.mrb[0].mxu0 %v2765
        %v2832 = vpop.f32.mrb[0].mxu0
        %v2833 = vadd.f32 0.0, %v2832
        %v2834 = vpop.f32.mrb[0].mxu0
        %v2835 = vadd.f32 0.0, %v2834
        %2836 = vdwg.mxu0
        %2837 = vmatprep.subr.mxu0 %v496
        %2838 = vmatpush1.msra.mxu0 %v495
        %2839 = vmatprep.subr.mxu0 %v500
        %2840 = vmatpush1.msra.mxu0 %v499
        %2841 = vmatprep.subr.mxu0 %v504
        %2842 = vmatpush1.msra.mxu0 %v503
        %2843 = vmatprep.subr.mxu0 %v508
        %2844 = vmatpush1.msra.mxu0 %v507
        %2845 = vmatprep.subr.mxu0 %v512
        %2846 = vmatpush1.msra.mxu0 %v511
        %2847 = vmatprep.subr.mxu0 %v516
        %2848 = vmatpush1.msra.mxu0 %v515
        %2849 = vmatprep.subr.mxu0 %v520
        %2850 = vmatpush1.msra.mxu0 %v519
        %2851 = vmatprep.subr.mxu0 %v524
        %2852 = vmatpush1.msra.mxu0 %v523
        %2853 = vmatprep.subr.mxu0 %v528
        %2854 = vmatpush1.msra.mxu0 %v527
        %2855 = vmatprep.subr.mxu0 %v532
        %2856 = vmatpush1.msra.mxu0 %v531
        %2857 = vmatprep.subr.mxu0 %v536
        %2858 = vmatpush1.msra.mxu0 %v535
        %2859 = vmatprep.subr.mxu0 %v540
        %2860 = vmatpush1.msra.mxu0 %v539
        %2861 = vmatprep.subr.mxu0 %v544
        %2862 = vmatpush1.msra.mxu0 %v543
        %2863 = vmatprep.subr.mxu0 %v548
        %2864 = vmatpush1.msra.mxu0 %v547
        %2865 = vmatprep.subr.mxu0 %v552
        %2866 = vmatpush1.msra.mxu0 %v551
        %2867 = vmatprep.subr.mxu0 %v556
        %2868 = vmatpush1.msra.mxu0 %v555
        %2869 = vmatprep.subr.mxu0 0.0
        %2870 = vmatpush1.msra.mxu0 0.0
        %2871 = vmatprep.subr.mxu0 0.0
        %2872 = vmatpush1.msra.mxu0 0.0
        %2873 = vmatprep.subr.mxu0 0.0
        %2874 = vmatpush1.msra.mxu0 0.0
        %2875 = vmatprep.subr.mxu0 0.0
        %2876 = vmatpush1.msra.mxu0 0.0
        %2877 = vmatprep.subr.mxu0 0.0
        %2878 = vmatpush1.msra.mxu0 0.0
        %2879 = vmatprep.subr.mxu0 0.0
        %2880 = vmatpush1.msra.mxu0 0.0
        %2881 = vmatprep.subr.mxu0 0.0
        %2882 = vmatpush1.msra.mxu0 0.0
        %2883 = vmatprep.subr.mxu0 0.0
        %2884 = vmatpush1.msra.mxu0 0.0
        %2885 = vmatprep.subr.mxu0 0.0
        %2886 = vmatpush1.msra.mxu0 0.0
        %2887 = vmatprep.subr.mxu0 0.0
        %2888 = vmatpush1.msra.mxu0 0.0
        %2889 = vmatprep.subr.mxu0 0.0
        %2890 = vmatpush1.msra.mxu0 0.0
        %2891 = vmatprep.subr.mxu0 0.0
        %2892 = vmatpush1.msra.mxu0 0.0
        %2893 = vmatprep.subr.mxu0 0.0
        %2894 = vmatpush1.msra.mxu0 0.0
        %2895 = vmatprep.subr.mxu0 0.0
        %2896 = vmatpush1.msra.mxu0 0.0
        %2897 = vmatprep.subr.mxu0 0.0
        %2898 = vmatpush1.msra.mxu0 0.0
        %2899 = vmatprep.subr.mxu0 0.0
        %2900 = vmatpush1.msra.mxu0 0.0
        %2901 = vmatprep.mubr.f32.mxu0 0.0
        %2902 = vmatmul.mubr.f32.gmra.mrb[0].mxu0 %v2765
        %v2903 = vpop.f32.mrb[0].mxu0
        %v2904 = vadd.f32 0.0, %v2903
        %v2905 = vpop.f32.mrb[0].mxu0
        %v2906 = vadd.f32 0.0, %v2905
        %2907 = vdwg.mxu0
        %v2912 = vcombine.low %v2833, %v2835
        %v2913 = vcombine.low %v2904, %v2906
        %v2915 = vunpack.c.l.s4 1966171168
        %v2916 = vunpack.c.0.s8 %v2915
        %v2917 = vlaneseq
        %v2918 = vshrl.u32 %v2917, 7
        %v2919 = vsub.s32 %v2916, %v2918
        %v2920 = vrot.slane %v2912, %v2919
        %v2922 = vunpack.c.l.s4 1966171168
        %v2923 = vunpack.c.0.s8 %v2922
        %v2924 = vlaneseq
        %v2925 = vshrl.u32 %v2924, 7
        %v2926 = vsub.s32 %v2923, %v2925
        %v2927 = vrot.slane %v2913, %v2926
        %v2928 = vcombine.low %v2920, %v2927
        %v2929 = vcombine.high %v2920, %v2927
        %v2931 = vunpack.c.l.s4 1966171168
        %v2932 = vunpack.c.0.s8 %v2931
        %v2933 = vlaneseq
        %v2934 = vshrl.u32 %v2933, 7
        %v2935 = vsub.s32 %v2932, %v2934
        %v2936 = vrot.slane %v2928, %v2935
        %v2938 = vunpack.c.l.s4 1966171168
        %v2939 = vunpack.c.0.s8 %v2938
        %v2940 = vlaneseq
        %v2941 = vshrl.u32 %v2940, 7
        %v2942 = vsub.s32 %v2939, %v2941
        %v2943 = vrot.slane %v2929, %v2942
        %v2946 = vadd.f32 %v2762, %v2936
        %v2947 = vadd.f32 %v2764, %v2943
        %v2948 = vxor.u32 %v2946, 2147483648
        %v2949 = vxor.u32 %v2947, 2147483648
        %v2950 = vmul.f32 %v2948, 1.442695
        %v2951 = vpow.pop %v2950
        %v2952 = vmul.f32 %v2949, 1.442695
        %v2953 = vpow.pop %v2952
        %v2954 = vadd.f32 %v2951, 1.0
        %v2955 = vadd.f32 %v2953, 1.0
        %v2956 = vrcp.pop %v2954
        %v2957 = vmul.f32 1.0, %v2956
        %v2958 = vrcp.pop %v2955
        %v2959 = vmul.f32 1.0, %v2958
        %v2962 = vrot.slane %v2946, 1
        %v2963 = vrot.slane %v2947, 1
        %v2966 = vxor.u32 %v2962, 2147483648
        %v2967 = vxor.u32 %v2963, 2147483648
        %v2968 = vmul.f32 %v2966, 1.442695
        %v2969 = vpow.pop %v2968
        %v2970 = vmul.f32 %v2967, 1.442695
        %v2971 = vpow.pop %v2970
        %v2972 = vadd.f32 %v2969, 1.0
        %v2973 = vadd.f32 %v2971, 1.0
        %v2974 = vrcp.pop %v2972
        %v2975 = vmul.f32 1.0, %v2974
        %v2976 = vrcp.pop %v2973
        %v2977 = vmul.f32 1.0, %v2976
        %v2978 = vrot.slane %v2946, 2
        %v2979 = vrot.slane %v2947, 2
        %v2982 = vtanh.pop %v2978
        %v2983 = vtanh.pop %v2979
        %v2984 = vrot.slane %v2946, 3
        %v2985 = vrot.slane %v2947, 3
        %v2988 = vxor.u32 %v2984, 2147483648
        %v2989 = vxor.u32 %v2985, 2147483648
        %v2990 = vmul.f32 %v2988, 1.442695
        %v2991 = vpow.pop %v2990
        %v2992 = vmul.f32 %v2989, 1.442695
        %v2993 = vpow.pop %v2992
        %v2994 = vadd.f32 %v2991, 1.0
        %v2995 = vadd.f32 %v2993, 1.0
        %v2996 = vrcp.pop %v2994
        %v2997 = vmul.f32 1.0, %v2996
        %v2998 = vrcp.pop %v2995
        %v2999 = vmul.f32 1.0, %v2998
        %v3000 = vld [vmem:[#allocation5] sm:$0x3]
        %v3003 = vunpack.c.l.s4 1966171168
        %v3004 = vunpack.c.0.s8 %v3003
        %v3005 = vlaneseq
        %v3006 = vshrl.u32 %v3005, 7
        %v3007 = vsub.s32 %v3004, %v3006
        %v3008 = vrot.slane %v3000, %v3007
        %v3009 = vcombine.high %v3008, %v3008
        %v3011 = vunpack.c.l.s4 1966171168
        %v3012 = vunpack.c.0.s8 %v3011
        %v3013 = vlaneseq
        %v3014 = vshrl.u32 %v3013, 7
        %v3015 = vsub.s32 %v3012, %v3014
        %v3016 = vrot.slane %v3008, %v3015
        %v3018 = vunpack.c.l.s4 1966171168
        %v3019 = vunpack.c.0.s8 %v3018
        %v3020 = vlaneseq
        %v3021 = vshrl.u32 %v3020, 7
        %v3022 = vsub.s32 %v3019, %v3021
        %v3023 = vrot.slane %v3009, %v3022
        %v3026 = vmul.f32 %v2975, %v3016
        %v3027 = vmul.f32 %v2977, %v3023
        %v3028 = vmul.f32 %v2957, %v2982
        %v3029 = vmul.f32 %v2959, %v2983
        %v3030 = vadd.f32 %v3026, %v3028
        %v3031 = vadd.f32 %v3027, %v3029
        %v3032 = vtanh.pop %v3030
        %v3033 = vtanh.pop %v3031
        %v3034 = vmul.f32 %v2997, %v3032
        %v3035 = vmul.f32 %v2999, %v3033
        %v3038 = vcombine.low %v3030, %v3031
        %v3040 = vunpack.c.l.s4 1966171168
        %v3041 = vunpack.c.0.s8 %v3040
        %v3042 = vlaneseq
        %v3043 = vshrl.u32 %v3042, 7
        %v3044 = vsub.s32 %v3041, %v3043
        %v3045 = vrot.slane %v3038, %v3044
        %v3047 = vunpack.c.l.s4 1966171168
        %v3048 = vunpack.c.0.s8 %v3047
        %v3049 = vlaneseq
        %v3050 = vshrl.u32 %v3049, 7
        %v3051 = vsub.s32 %v3048, %v3050
        %v3052 = vrot.slane %v3045, %v3051
        %3054 = vst [vmem:[#allocation5] sm:$0x3] %v3052
        %v3057 = vcombine.low %v3034, %v3035
        %v3059 = vunpack.c.l.s4 1966171168
        %v3060 = vunpack.c.0.s8 %v3059
        %v3061 = vlaneseq
        %v3062 = vshrl.u32 %v3061, 7
        %v3063 = vsub.s32 %v3060, %v3062
        %v3064 = vrot.slane %v3057, %v3063
        %v3066 = vunpack.c.l.s4 1966171168
        %v3067 = vunpack.c.0.s8 %v3066
        %v3068 = vlaneseq
        %v3069 = vshrl.u32 %v3068, 7
        %v3070 = vsub.s32 %v3067, %v3069
        %v3071 = vrot.slane %v3064, %v3070
        %3073 = vst [vmem:[#allocation4] sm:$0x3] %v3071
        %3074 = vst [vmem:[#allocation3 + $0x7] sm:$0x1] %v3034
        %3075 = vst [vmem:[#allocation3 + $0xf] sm:$0x1] %v3035
        %v3076 = vld [vmem:[#allocation3] sm:$0xff]
        %v3077 = vld [vmem:[#allocation3 + $0x8] sm:$0xff]
        %3078 = vst [vmem:[%s275] sm:$0xff] %v3076
        %3079 = vst [vmem:[%s275 + $0x8] sm:$0xff] %v3077
        %s3080 = sand.u32 %s136, 1
        %s3081 = scalar_lea.sflag [#allocation8], %s3080
        %s3082 = sand.u32 %s136, 1
        %s3083 = smul.addr %s3082, 16
        %s3084 = scalar_lea.vmem [#allocation14], %s3083
        // Predicated region
        $region57: #{tpu_custom_call.1} parent=35 // pred_check
          %p3085 = pneg %p146
        $region58: #{tpu_custom_call.1} parent=35 // pred_check_branch
          %3087 = sbr.rel (%p3085) target = $region60
        $region59: #{tpu_custom_call.1} parent=35 // pred_region
          %s3088 = smul.u32 2, %s27
          %s3090 = ssub.s32 256, 256
          %3091 = vsyncadd %s3081, %s3090
          %s3092 = smul.addr %s3088, 2
          %s3093 = sadd.s32 %s28, %s3092
          %s3094 = smul.addr %s3093, 128
          %s3095 = scalar_lea.hbm %s4, %s3094
          %s3096 = sshll.u32 %s3084, 4
          %s3097 = int_to_ptr.vmem [resolvable:$true] %s3096
          %3102 = dma.vmem_to_hbm [thread:$0]  %s3097, 256, %s3095, %s3081, 128, 256, 8
        $region60: #{tpu_custom_call.1} parent=35 // pred_fallthru
          _
      $region36: #{tpu_custom_call.1} parent=5 // pred_fallthru
        _
      %p3103 = scmp.le.s32.totalorder 2, %s18
      // Predicated region
      $region61: #{tpu_custom_call.1} parent=5 // pred_check
        %p3104 = pneg %p3103
      $region62: #{tpu_custom_call.1} parent=5 // pred_check_branch
        %3106 = sbr.rel (%p3104) target = $region64
      $region63: #{tpu_custom_call.1} parent=5 // pred_region
        %s3107 = ssub.s32 %s18, 2
        // Predicated region
        $region65: #{tpu_custom_call.1} parent=63 // pred_check
          %p3108 = pneg %p152
        $region66: #{tpu_custom_call.1} parent=63 // pred_check_branch
          %3110 = sbr.rel (%p3108) target = $region68
        $region67: #{tpu_custom_call.1} parent=63 // pred_region
          %s3111 = sand.u32 %s137, 1
          %s3112 = scalar_lea.sflag [#allocation8], %s3111
          %s3113 = sand.u32 %s137, 1
          %s3114 = smul.addr %s3113, 16
          %s3115 = scalar_lea.vmem [#allocation14], %s3114
          %3116 = dma.done %s3112, 256
        $region68: #{tpu_custom_call.1} parent=63 // pred_fallthru
          _
      $region64: #{tpu_custom_call.1} parent=5 // pred_fallthru
        _
    $region6: #{tpu_custom_call.1} parent=1 // loop_footer
      %s22 = sadd.s32 1, %s18
    $region7: #{tpu_custom_call.1} parent=1 // loop_footer_branch
      %17 = sbr.rel target = $region3
    $region8: #{tpu_custom_call.1} parent=1 // loop_exit
      _
    %3117 = vsyncpa [#allocation7], 1
    %s3118 = scalar_lea.sflag [#allocation7], 1
    %3119 = vsyncpa %s3118, 1
    %3120 = vsyncpa [#allocation10], 1
    %3121 = vsyncpa [#allocation13], 1
    %3122 = vsyncpa [#allocation8], 1
    %s3123 = scalar_lea.sflag [#allocation8], 1
    %3124 = vsyncpa %s3123, 1

</llo_original>
